<compile_context>
chip_gen: v5e
topology: v5e:2x2
jax: 0.10.0
libtpu: 0.0.40
codegen_flags: <defaults>
</compile_context>

<pallas_src>
import functools
import math

import jax
import jax.numpy as jnp
from jax.experimental import pallas as pl
from jax.experimental.pallas import tpu as pltpu

LATENT_DIM = 100
LATENT_PAD = 128                  # padded latent (sublane/lane dense)
IMG_SHAPE = (1, 28, 28)           # (C, H, W)
IMG_FLAT = 1 * 28 * 28            # 784
IMG_FLAT_PAD = 896                # 7 * 128, lane-dense output
HIDDEN = (128, 256, 512, 1024)
LEAKY_SLOPE = 0.2
BN_EPS = 0.8

# Padded matmul sizes (for the cost estimate).
_MATMUL_DIMS = ((LATENT_PAD, 128), (128, 256), (256, 512), (512, 1024),
                (1024, IMG_FLAT_PAD))
_WEIGHT_ELEMS = sum(a * b for a, b in _MATMUL_DIMS)
_BN_FEATURES = sum(HIDDEN[1:])    # 256 + 512 + 1024 rsqrt's per call


def _leaky_relu(x):
    return jnp.where(x > 0, x, LEAKY_SLOPE * x)


def generator_kernel(z_ref,
                     w1_ref, b1_ref,
                     w2_ref, b2_ref, g2_ref, t2_ref,
                     w3_hbm, b3_ref, g3_ref, t3_ref,
                     w4_hbm, b4_ref, g4_ref, t4_ref,
                     w5_hbm, b5_ref,
                     out_ref,
                     w3_buf, w4_buf, w5_buf, dma_sems,
                     *, n_valid, n_rows):
    """Fused MLP: 5 bf16 MXU matmuls (f32 acc) + masked-batch BN + VPU/EUP,
    with the large w3/w4/w5 HBM->VMEM copies overlapped under layers 1-2."""
    # Kick off the bulk weight transfers immediately; they run concurrently
    # with the layer-1/2 compute below and are waited on just-in-time.
    cp3 = pltpu.make_async_copy(w3_hbm, w3_buf, dma_sems.at[0])
    cp4 = pltpu.make_async_copy(w4_hbm, w4_buf, dma_sems.at[1])
    cp5 = pltpu.make_async_copy(w5_hbm, w5_buf, dma_sems.at[2])
    cp3.start()
    cp4.start()
    cp5.start()

    inv_n = 1.0 / float(n_valid)
    if n_valid == n_rows:
        row_valid = None
    else:
        row_ids = jax.lax.broadcasted_iota(jnp.int32, (n_rows, 1), 0)
        row_valid = row_ids < n_valid

    def linear(h, w, b):
        # bf16 operands into the MXU, f32 accumulation, f32 bias add.
        return jnp.dot(h.astype(jnp.bfloat16), w,
                       preferred_element_type=jnp.float32) + b

    def batchnorm(x, g, t):
        # Fused sum / sum-of-squares over the *real* batch rows only
        # (padded rows masked to zero), biased variance, eps=0.8.
        xm = x if row_valid is None else jnp.where(row_valid, x, 0.0)
        s = jnp.sum(xm, axis=0, keepdims=True)
        ss = jnp.sum(xm * xm, axis=0, keepdims=True)
        mean = s * inv_n
        var = ss * inv_n - mean * mean
        inv = jax.lax.rsqrt(var + BN_EPS)
        return (x - mean) * inv * g + t

    x = z_ref[...]
    # block(100 -> 128, normalize=False)     (runs under the w3/w4/w5 DMAs)
    h = _leaky_relu(linear(x, w1_ref[...], b1_ref[...]))
    # block(128 -> 256)
    h = _leaky_relu(batchnorm(linear(h, w2_ref[...], b2_ref[...]),
                              g2_ref[...], t2_ref[...]))
    # block(256 -> 512)
    cp3.wait()
    h = _leaky_relu(batchnorm(linear(h, w3_buf[...], b3_ref[...]),
                              g3_ref[...], t3_ref[...]))
    # block(512 -> 1024)
    cp4.wait()
    h = _leaky_relu(batchnorm(linear(h, w4_buf[...], b4_ref[...]),
                              g4_ref[...], t4_ref[...]))
    # Linear(1024 -> 784, lane-padded to 896) + Tanh (f32), stored bf16.
    cp5.wait()
    out_ref[...] = jnp.tanh(linear(h, w5_buf[...], b5_ref[...])
                            ).astype(out_ref.dtype)


def init_params(key):
    """PyTorch-default init (Linear: U(+/-1/sqrt(fan_in)); BN: gamma=1, beta=0).
    Weights are zero-padded to lane/sublane-dense shapes and stored in bf16."""
    dims = (LATENT_DIM,) + HIDDEN + (IMG_FLAT,)
    params = {}
    for i in range(5):
        fan_in, fan_out = dims[i], dims[i + 1]
        key, kw, kb = jax.random.split(key, 3)
        bound = 1.0 / math.sqrt(fan_in)
        w = jax.random.uniform(kw, (fan_in, fan_out), jnp.float32, -bound, bound)
        b = jax.random.uniform(kb, (1, fan_out), jnp.float32, -bound, bound)
        if fan_in == LATENT_DIM:                       # pad K: 100 -> 128 (zeros)
            w = jnp.pad(w, ((0, LATENT_PAD - LATENT_DIM), (0, 0)))
        if fan_out == IMG_FLAT:                        # pad N: 784 -> 896 (zeros)
            w = jnp.pad(w, ((0, 0), (0, IMG_FLAT_PAD - IMG_FLAT)))
            b = jnp.pad(b, ((0, 0), (0, IMG_FLAT_PAD - IMG_FLAT)))
        params[f"w{i+1}"] = w.astype(jnp.bfloat16)     # bf16 weights in HBM
        params[f"b{i+1}"] = b                          # f32 bias
    for i, d in zip((2, 3, 4), HIDDEN[1:]):
        params[f"g{i}"] = jnp.ones((1, d), jnp.float32)    # BN gamma
        params[f"t{i}"] = jnp.zeros((1, d), jnp.float32)   # BN beta
    return params


@jax.jit
def generator_forward(z, params):
    B = z.shape[0]
    Bp = max(8, -(-B // 8) * 8)       # pad batch to >=8, multiple of 8 sublanes

    # Zero-pad z to (Bp, 128): exact (padded lanes hit zero rows of w1;
    # padded rows are masked out of the BN statistics inside the kernel).
    zp = jnp.zeros((Bp, LATENT_PAD), jnp.float32).at[:B, :LATENT_DIM].set(z)

    args = (
        zp,
        params["w1"], params["b1"],
        params["w2"], params["b2"], params["g2"], params["t2"],
        params["w3"], params["b3"], params["g3"], params["t3"],
        params["w4"], params["b4"], params["g4"], params["t4"],
        params["w5"], params["b5"],
    )

    vmem = pl.BlockSpec(memory_space=pltpu.MemorySpace.VMEM)
    hbm = pl.BlockSpec(memory_space=pl.ANY)     # raw HBM ref; DMA'd in-kernel
    in_specs = [
        vmem,                         # z
        vmem, vmem,                   # w1 (32 KB), b1
        vmem, vmem, vmem, vmem,       # w2 (64 KB), b2, g2, t2
        hbm,  vmem, vmem, vmem,       # w3 (256 KB) -> async copy
        hbm,  vmem, vmem, vmem,       # w4 (1 MB)   -> async copy
        hbm,  vmem,                   # w5 (1.75 MB)-> async copy, b5
    ]
    scratch_shapes = [
        pltpu.VMEM((HIDDEN[1], HIDDEN[2]), jnp.bfloat16),      # w3 buffer
        pltpu.VMEM((HIDDEN[2], HIDDEN[3]), jnp.bfloat16),      # w4 buffer
        pltpu.VMEM((HIDDEN[3], IMG_FLAT_PAD), jnp.bfloat16),   # w5 buffer
        pltpu.SemaphoreType.DMA((3,)),
    ]

    weight_bytes = _WEIGHT_ELEMS * 2                              # bf16
    small_bytes = 4 * (sum(HIDDEN) + IMG_FLAT_PAD                 # biases
                       + 2 * sum(HIDDEN[1:]))                     # gamma/beta
    io_bytes = 4 * Bp * LATENT_PAD + 2 * Bp * IMG_FLAT_PAD        # f32 in, bf16 out
    cost = pl.CostEstimate(
        flops=2 * Bp * _WEIGHT_ELEMS,
        transcendentals=Bp * IMG_FLAT_PAD + _BN_FEATURES,         # tanh + BN rsqrt
        bytes_accessed=weight_bytes + small_bytes + io_bytes,
    )

    # Footprint: ~3 MB weight scratch + small VMEM inputs + activations.
    vmem_limit = int(min(64 << 20, (8 << 20) + 24 * 1024 * Bp))

    kernel = functools.partial(generator_kernel, n_valid=B, n_rows=Bp)
    flat = pl.pallas_call(
        kernel,
        out_shape=jax.ShapeDtypeStruct((Bp, IMG_FLAT_PAD), jnp.bfloat16),
        in_specs=in_specs,
        out_specs=pl.BlockSpec(memory_space=pltpu.MemorySpace.VMEM),
        scratch_shapes=scratch_shapes,
        compiler_params=pltpu.CompilerParams(vmem_limit_bytes=vmem_limit),
        cost_estimate=cost,
    )(*args)

    # Slice off batch/lane padding, then img.view(B, *img_shape) -> NCHW.
    return flat[:B, :IMG_FLAT].reshape(B, *IMG_SHAPE)


def generator_reference(z, params):
    """Pure-JAX reference using the same bf16 weights / f32 accumulation."""
    def linear(h, w, b):
        return jnp.dot(h.astype(jnp.bfloat16), w,
                       preferred_element_type=jnp.float32) + b

    def batchnorm(x, g, t):
        mean = jnp.mean(x, axis=0, keepdims=True)
        var = jnp.mean(x * x, axis=0, keepdims=True) - mean * mean
        return (x - mean) * jax.lax.rsqrt(var + BN_EPS) * g + t

    B = z.shape[0]
    zp = jnp.pad(z, ((0, 0), (0, LATENT_PAD - LATENT_DIM)))
    h = _leaky_relu(linear(zp, params["w1"], params["b1"]))
    h = _leaky_relu(batchnorm(linear(h, params["w2"], params["b2"]),
                              params["g2"], params["t2"]))
    h = _leaky_relu(batchnorm(linear(h, params["w3"], params["b3"]),
                              params["g3"], params["t3"]))
    h = _leaky_relu(batchnorm(linear(h, params["w4"], params["b4"]),
                              params["g4"], params["t4"]))
    h = jnp.tanh(linear(h, params["w5"], params["b5"])).astype(jnp.bfloat16)
    return h[:, :IMG_FLAT].reshape(B, *IMG_SHAPE)


if __name__ == "__main__":
    key = jax.random.PRNGKey(0)
    key, kz, kp = jax.random.split(key, 3)

    B = 4
    z = jax.random.normal(kz, (B, LATENT_DIM), jnp.float32)
    params = init_params(kp)

    img = generator_forward(z, params)
    img = jax.block_until_ready(img)

    assert img.shape == (B, *IMG_SHAPE), img.shape
    ref = generator_reference(z, params)
    max_err = float(jnp.max(jnp.abs(img.astype(jnp.float32)
                                    - ref.astype(jnp.float32))))
    assert jnp.allclose(img.astype(jnp.float32), ref.astype(jnp.float32),
                        atol=5e-3, rtol=5e-3), max_err

    print("KERNEL_OK")
</pallas_src>

<mosaic_0001>
module attributes {stable_mosaic.version = 11 : i64} {
  func.func @generator_kernel(%arg0: memref<8x128xf32, #tpu.memory_space<vmem>>, %arg1: memref<128x128xbf16, #tpu.memory_space<vmem>>, %arg2: memref<1x128xf32, #tpu.memory_space<vmem>>, %arg3: memref<128x256xbf16, #tpu.memory_space<vmem>>, %arg4: memref<1x256xf32, #tpu.memory_space<vmem>>, %arg5: memref<1x256xf32, #tpu.memory_space<vmem>>, %arg6: memref<1x256xf32, #tpu.memory_space<vmem>>, %arg7: memref<256x512xbf16, #tpu.memory_space<any>>, %arg8: memref<1x512xf32, #tpu.memory_space<vmem>>, %arg9: memref<1x512xf32, #tpu.memory_space<vmem>>, %arg10: memref<1x512xf32, #tpu.memory_space<vmem>>, %arg11: memref<512x1024xbf16, #tpu.memory_space<any>>, %arg12: memref<1x1024xf32, #tpu.memory_space<vmem>>, %arg13: memref<1x1024xf32, #tpu.memory_space<vmem>>, %arg14: memref<1x1024xf32, #tpu.memory_space<vmem>>, %arg15: memref<1024x896xbf16, #tpu.memory_space<any>>, %arg16: memref<1x896xf32, #tpu.memory_space<vmem>>, %arg17: memref<8x896xbf16, #tpu.memory_space<vmem>>, %arg18: memref<256x512xbf16, #tpu.memory_space<vmem>>, %arg19: memref<512x1024xbf16, #tpu.memory_space<vmem>>, %arg20: memref<1024x896xbf16, #tpu.memory_space<vmem>>, %arg21: memref<3x!tpu.dma_semaphore, #tpu.memory_space<semaphore_mem>>) attributes {dimension_semantics = [], scalar_prefetch = 0 : i64, scratch_operands = 4 : i64, tpu.core_type = #tpu.core_type<tc>} {
    %c0_i32 = arith.constant 0 : i32
    %0 = tpu.memref_slice %arg21[%c0_i32] : memref<3x!tpu.dma_semaphore, #tpu.memory_space<semaphore_mem>> -> memref<1x!tpu.dma_semaphore, #tpu.memory_space<semaphore_mem>>
    %1 = tpu.memref_squeeze %0 : memref<1x!tpu.dma_semaphore, #tpu.memory_space<semaphore_mem>> -> memref<!tpu.dma_semaphore, #tpu.memory_space<semaphore_mem>>
    tpu.enqueue_dma source(%arg7 : memref<256x512xbf16, #tpu.memory_space<any>>) target(%arg18 : memref<256x512xbf16, #tpu.memory_space<vmem>>) target_semaphore(%1 : memref<!tpu.dma_semaphore, #tpu.memory_space<semaphore_mem>>)
    %c1_i32 = arith.constant 1 : i32
    %2 = tpu.memref_slice %arg21[%c1_i32] : memref<3x!tpu.dma_semaphore, #tpu.memory_space<semaphore_mem>> -> memref<1x!tpu.dma_semaphore, #tpu.memory_space<semaphore_mem>>
    %3 = tpu.memref_squeeze %2 : memref<1x!tpu.dma_semaphore, #tpu.memory_space<semaphore_mem>> -> memref<!tpu.dma_semaphore, #tpu.memory_space<semaphore_mem>>
    tpu.enqueue_dma source(%arg11 : memref<512x1024xbf16, #tpu.memory_space<any>>) target(%arg19 : memref<512x1024xbf16, #tpu.memory_space<vmem>>) target_semaphore(%3 : memref<!tpu.dma_semaphore, #tpu.memory_space<semaphore_mem>>)
    %c2_i32 = arith.constant 2 : i32
    %4 = tpu.memref_slice %arg21[%c2_i32] : memref<3x!tpu.dma_semaphore, #tpu.memory_space<semaphore_mem>> -> memref<1x!tpu.dma_semaphore, #tpu.memory_space<semaphore_mem>>
    %5 = tpu.memref_squeeze %4 : memref<1x!tpu.dma_semaphore, #tpu.memory_space<semaphore_mem>> -> memref<!tpu.dma_semaphore, #tpu.memory_space<semaphore_mem>>
    tpu.enqueue_dma source(%arg15 : memref<1024x896xbf16, #tpu.memory_space<any>>) target(%arg20 : memref<1024x896xbf16, #tpu.memory_space<vmem>>) target_semaphore(%5 : memref<!tpu.dma_semaphore, #tpu.memory_space<semaphore_mem>>)
    %6 = tpu.iota {dimensions = array<i32: 0>} : vector<8x1xi32>
    %c4_i32 = arith.constant 4 : i32
    %7 = vector.broadcast %c4_i32 : i32 to vector<8x1xi32>
    %8 = arith.cmpi slt, %6, %7 : vector<8x1xi32>
    %c0 = arith.constant 0 : index
    %c0_0 = arith.constant 0 : index
    %9 = vector.load %arg0[%c0, %c0_0] : memref<8x128xf32, #tpu.memory_space<vmem>>, vector<8x128xf32>
    %c0_1 = arith.constant 0 : index
    %c0_2 = arith.constant 0 : index
    %10 = vector.load %arg1[%c0_1, %c0_2] : memref<128x128xbf16, #tpu.memory_space<vmem>>, vector<128x128xbf16>
    %c0_3 = arith.constant 0 : index
    %c0_4 = arith.constant 0 : index
    %11 = vector.load %arg2[%c0_3, %c0_4] : memref<1x128xf32, #tpu.memory_space<vmem>>, vector<1x128xf32>
    %12 = arith.truncf %9 : vector<8x128xf32> to vector<8x128xbf16>
    %cst = arith.constant dense<0.000000e+00> : vector<8x128xf32>
    %13 = tpu.matmul %12, %10, %cst {dimension_numbers = #tpu.dot_dimension_numbers<[1], [0], [0], [1], [0, 0, 1, 1], [], []>} : vector<8x128xbf16>, vector<128x128xbf16>, vector<8x128xf32> -> vector<8x128xf32>
    %14 = vector.broadcast %11 : vector<1x128xf32> to vector<8x128xf32>
    %15 = arith.addf %13, %14 : vector<8x128xf32>
    %cst_5 = arith.constant 0.000000e+00 : f32
    %16 = vector.broadcast %cst_5 : f32 to vector<8x128xf32>
    %17 = arith.cmpf ogt, %15, %16 : vector<8x128xf32>
    %cst_6 = arith.constant 2.000000e-01 : f32
    %18 = vector.broadcast %cst_6 : f32 to vector<8x128xf32>
    %19 = arith.mulf %18, %15 : vector<8x128xf32>
    %20 = arith.select %17, %15, %19 : vector<8x128xi1>, vector<8x128xf32>
    %c0_7 = arith.constant 0 : index
    %c0_8 = arith.constant 0 : index
    %21 = vector.load %arg3[%c0_7, %c0_8] : memref<128x256xbf16, #tpu.memory_space<vmem>>, vector<128x256xbf16>
    %c0_9 = arith.constant 0 : index
    %c0_10 = arith.constant 0 : index
    %22 = vector.load %arg4[%c0_9, %c0_10] : memref<1x256xf32, #tpu.memory_space<vmem>>, vector<1x256xf32>
    %23 = arith.truncf %20 : vector<8x128xf32> to vector<8x128xbf16>
    %cst_11 = arith.constant dense<0.000000e+00> : vector<8x256xf32>
    %24 = tpu.matmul %23, %21, %cst_11 {dimension_numbers = #tpu.dot_dimension_numbers<[1], [0], [0], [1], [0, 0, 1, 1], [], []>} : vector<8x128xbf16>, vector<128x256xbf16>, vector<8x256xf32> -> vector<8x256xf32>
    %25 = vector.broadcast %22 : vector<1x256xf32> to vector<8x256xf32>
    %26 = arith.addf %24, %25 : vector<8x256xf32>
    %c0_12 = arith.constant 0 : index
    %c0_13 = arith.constant 0 : index
    %27 = vector.load %arg5[%c0_12, %c0_13] : memref<1x256xf32, #tpu.memory_space<vmem>>, vector<1x256xf32>
    %c0_14 = arith.constant 0 : index
    %c0_15 = arith.constant 0 : index
    %28 = vector.load %arg6[%c0_14, %c0_15] : memref<1x256xf32, #tpu.memory_space<vmem>>, vector<1x256xf32>
    %cst_16 = arith.constant 0.000000e+00 : f32
    %29 = vector.shape_cast %8 : vector<8x1xi1> to vector<8x1xi1>
    %30 = vector.broadcast %29 : vector<8x1xi1> to vector<8x256xi1>
    %31 = vector.broadcast %cst_16 : f32 to vector<8x256xf32>
    %32 = arith.select %30, %26, %31 : vector<8x256xi1>, vector<8x256xf32>
    %cst_17 = arith.constant dense<0.000000e+00> : vector<256xf32>
    %33 = vector.multi_reduction <add>, %32, %cst_17 [0] : vector<8x256xf32> to vector<256xf32>
    %34 = vector.shape_cast %33 : vector<256xf32> to vector<1x256xf32>
    %35 = arith.mulf %32, %32 : vector<8x256xf32>
    %cst_18 = arith.constant dense<0.000000e+00> : vector<256xf32>
    %36 = vector.multi_reduction <add>, %35, %cst_18 [0] : vector<8x256xf32> to vector<256xf32>
    %37 = vector.shape_cast %36 : vector<256xf32> to vector<1x256xf32>
    %cst_19 = arith.constant 2.500000e-01 : f32
    %38 = vector.broadcast %cst_19 : f32 to vector<1x256xf32>
    %39 = arith.mulf %34, %38 : vector<1x256xf32>
    %cst_20 = arith.constant 2.500000e-01 : f32
    %40 = vector.broadcast %cst_20 : f32 to vector<1x256xf32>
    %41 = arith.mulf %37, %40 : vector<1x256xf32>
    %42 = arith.mulf %39, %39 : vector<1x256xf32>
    %43 = arith.subf %41, %42 : vector<1x256xf32>
    %cst_21 = arith.constant 8.000000e-01 : f32
    %44 = vector.broadcast %cst_21 : f32 to vector<1x256xf32>
    %45 = arith.addf %43, %44 : vector<1x256xf32>
    %46 = math.rsqrt %45 : vector<1x256xf32>
    %47 = vector.broadcast %39 : vector<1x256xf32> to vector<8x256xf32>
    %48 = arith.subf %26, %47 : vector<8x256xf32>
    %49 = vector.broadcast %46 : vector<1x256xf32> to vector<8x256xf32>
    %50 = arith.mulf %48, %49 : vector<8x256xf32>
    %51 = vector.broadcast %27 : vector<1x256xf32> to vector<8x256xf32>
    %52 = arith.mulf %50, %51 : vector<8x256xf32>
    %53 = vector.broadcast %28 : vector<1x256xf32> to vector<8x256xf32>
    %54 = arith.addf %52, %53 : vector<8x256xf32>
    %cst_22 = arith.constant 0.000000e+00 : f32
    %55 = vector.broadcast %cst_22 : f32 to vector<8x256xf32>
    %56 = arith.cmpf ogt, %54, %55 : vector<8x256xf32>
    %cst_23 = arith.constant 2.000000e-01 : f32
    %57 = vector.broadcast %cst_23 : f32 to vector<8x256xf32>
    %58 = arith.mulf %57, %54 : vector<8x256xf32>
    %59 = arith.select %56, %54, %58 : vector<8x256xi1>, vector<8x256xf32>
    %c0_i32_24 = arith.constant 0 : i32
    %60 = tpu.memref_slice %arg21[%c0_i32_24] : memref<3x!tpu.dma_semaphore, #tpu.memory_space<semaphore_mem>> -> memref<1x!tpu.dma_semaphore, #tpu.memory_space<semaphore_mem>>
    %61 = tpu.memref_squeeze %60 : memref<1x!tpu.dma_semaphore, #tpu.memory_space<semaphore_mem>> -> memref<!tpu.dma_semaphore, #tpu.memory_space<semaphore_mem>>
    tpu.wait_dma2 semaphore(%61 : memref<!tpu.dma_semaphore, #tpu.memory_space<semaphore_mem>>) src(%arg7 : memref<256x512xbf16, #tpu.memory_space<any>>) dst(%arg18 : memref<256x512xbf16, #tpu.memory_space<vmem>>)
    %c0_25 = arith.constant 0 : index
    %c0_26 = arith.constant 0 : index
    %62 = vector.load %arg18[%c0_25, %c0_26] : memref<256x512xbf16, #tpu.memory_space<vmem>>, vector<256x512xbf16>
    %c0_27 = arith.constant 0 : index
    %c0_28 = arith.constant 0 : index
    %63 = vector.load %arg8[%c0_27, %c0_28] : memref<1x512xf32, #tpu.memory_space<vmem>>, vector<1x512xf32>
    %64 = arith.truncf %59 : vector<8x256xf32> to vector<8x256xbf16>
    %cst_29 = arith.constant dense<0.000000e+00> : vector<8x512xf32>
    %65 = tpu.matmul %64, %62, %cst_29 {dimension_numbers = #tpu.dot_dimension_numbers<[1], [0], [0], [1], [0, 0, 1, 1], [], []>} : vector<8x256xbf16>, vector<256x512xbf16>, vector<8x512xf32> -> vector<8x512xf32>
    %66 = vector.broadcast %63 : vector<1x512xf32> to vector<8x512xf32>
    %67 = arith.addf %65, %66 : vector<8x512xf32>
    %c0_30 = arith.constant 0 : index
    %c0_31 = arith.constant 0 : index
    %68 = vector.load %arg9[%c0_30, %c0_31] : memref<1x512xf32, #tpu.memory_space<vmem>>, vector<1x512xf32>
    %c0_32 = arith.constant 0 : index
    %c0_33 = arith.constant 0 : index
    %69 = vector.load %arg10[%c0_32, %c0_33] : memref<1x512xf32, #tpu.memory_space<vmem>>, vector<1x512xf32>
    %cst_34 = arith.constant 0.000000e+00 : f32
    %70 = vector.shape_cast %8 : vector<8x1xi1> to vector<8x1xi1>
    %71 = vector.broadcast %70 : vector<8x1xi1> to vector<8x512xi1>
    %72 = vector.broadcast %cst_34 : f32 to vector<8x512xf32>
    %73 = arith.select %71, %67, %72 : vector<8x512xi1>, vector<8x512xf32>
    %cst_35 = arith.constant dense<0.000000e+00> : vector<512xf32>
    %74 = vector.multi_reduction <add>, %73, %cst_35 [0] : vector<8x512xf32> to vector<512xf32>
    %75 = vector.shape_cast %74 : vector<512xf32> to vector<1x512xf32>
    %76 = arith.mulf %73, %73 : vector<8x512xf32>
    %cst_36 = arith.constant dense<0.000000e+00> : vector<512xf32>
    %77 = vector.multi_reduction <add>, %76, %cst_36 [0] : vector<8x512xf32> to vector<512xf32>
    %78 = vector.shape_cast %77 : vector<512xf32> to vector<1x512xf32>
    %cst_37 = arith.constant 2.500000e-01 : f32
    %79 = vector.broadcast %cst_37 : f32 to vector<1x512xf32>
    %80 = arith.mulf %75, %79 : vector<1x512xf32>
    %cst_38 = arith.constant 2.500000e-01 : f32
    %81 = vector.broadcast %cst_38 : f32 to vector<1x512xf32>
    %82 = arith.mulf %78, %81 : vector<1x512xf32>
    %83 = arith.mulf %80, %80 : vector<1x512xf32>
    %84 = arith.subf %82, %83 : vector<1x512xf32>
    %cst_39 = arith.constant 8.000000e-01 : f32
    %85 = vector.broadcast %cst_39 : f32 to vector<1x512xf32>
    %86 = arith.addf %84, %85 : vector<1x512xf32>
    %87 = math.rsqrt %86 : vector<1x512xf32>
    %88 = vector.broadcast %80 : vector<1x512xf32> to vector<8x512xf32>
    %89 = arith.subf %67, %88 : vector<8x512xf32>
    %90 = vector.broadcast %87 : vector<1x512xf32> to vector<8x512xf32>
    %91 = arith.mulf %89, %90 : vector<8x512xf32>
    %92 = vector.broadcast %68 : vector<1x512xf32> to vector<8x512xf32>
    %93 = arith.mulf %91, %92 : vector<8x512xf32>
    %94 = vector.broadcast %69 : vector<1x512xf32> to vector<8x512xf32>
    %95 = arith.addf %93, %94 : vector<8x512xf32>
    %cst_40 = arith.constant 0.000000e+00 : f32
    %96 = vector.broadcast %cst_40 : f32 to vector<8x512xf32>
    %97 = arith.cmpf ogt, %95, %96 : vector<8x512xf32>
    %cst_41 = arith.constant 2.000000e-01 : f32
    %98 = vector.broadcast %cst_41 : f32 to vector<8x512xf32>
    %99 = arith.mulf %98, %95 : vector<8x512xf32>
    %100 = arith.select %97, %95, %99 : vector<8x512xi1>, vector<8x512xf32>
    %c1_i32_42 = arith.constant 1 : i32
    %101 = tpu.memref_slice %arg21[%c1_i32_42] : memref<3x!tpu.dma_semaphore, #tpu.memory_space<semaphore_mem>> -> memref<1x!tpu.dma_semaphore, #tpu.memory_space<semaphore_mem>>
    %102 = tpu.memref_squeeze %101 : memref<1x!tpu.dma_semaphore, #tpu.memory_space<semaphore_mem>> -> memref<!tpu.dma_semaphore, #tpu.memory_space<semaphore_mem>>
    tpu.wait_dma2 semaphore(%102 : memref<!tpu.dma_semaphore, #tpu.memory_space<semaphore_mem>>) src(%arg11 : memref<512x1024xbf16, #tpu.memory_space<any>>) dst(%arg19 : memref<512x1024xbf16, #tpu.memory_space<vmem>>)
    %c0_43 = arith.constant 0 : index
    %c0_44 = arith.constant 0 : index
    %103 = vector.load %arg19[%c0_43, %c0_44] : memref<512x1024xbf16, #tpu.memory_space<vmem>>, vector<512x1024xbf16>
    %c0_45 = arith.constant 0 : index
    %c0_46 = arith.constant 0 : index
    %104 = vector.load %arg12[%c0_45, %c0_46] : memref<1x1024xf32, #tpu.memory_space<vmem>>, vector<1x1024xf32>
    %105 = arith.truncf %100 : vector<8x512xf32> to vector<8x512xbf16>
    %cst_47 = arith.constant dense<0.000000e+00> : vector<8x1024xf32>
    %106 = tpu.matmul %105, %103, %cst_47 {dimension_numbers = #tpu.dot_dimension_numbers<[1], [0], [0], [1], [0, 0, 1, 1], [], []>} : vector<8x512xbf16>, vector<512x1024xbf16>, vector<8x1024xf32> -> vector<8x1024xf32>
    %107 = vector.broadcast %104 : vector<1x1024xf32> to vector<8x1024xf32>
    %108 = arith.addf %106, %107 : vector<8x1024xf32>
    %c0_48 = arith.constant 0 : index
    %c0_49 = arith.constant 0 : index
    %109 = vector.load %arg13[%c0_48, %c0_49] : memref<1x1024xf32, #tpu.memory_space<vmem>>, vector<1x1024xf32>
    %c0_50 = arith.constant 0 : index
    %c0_51 = arith.constant 0 : index
    %110 = vector.load %arg14[%c0_50, %c0_51] : memref<1x1024xf32, #tpu.memory_space<vmem>>, vector<1x1024xf32>
    %cst_52 = arith.constant 0.000000e+00 : f32
    %111 = vector.shape_cast %8 : vector<8x1xi1> to vector<8x1xi1>
    %112 = vector.broadcast %111 : vector<8x1xi1> to vector<8x1024xi1>
    %113 = vector.broadcast %cst_52 : f32 to vector<8x1024xf32>
    %114 = arith.select %112, %108, %113 : vector<8x1024xi1>, vector<8x1024xf32>
    %cst_53 = arith.constant dense<0.000000e+00> : vector<1024xf32>
    %115 = vector.multi_reduction <add>, %114, %cst_53 [0] : vector<8x1024xf32> to vector<1024xf32>
    %116 = vector.shape_cast %115 : vector<1024xf32> to vector<1x1024xf32>
    %117 = arith.mulf %114, %114 : vector<8x1024xf32>
    %cst_54 = arith.constant dense<0.000000e+00> : vector<1024xf32>
    %118 = vector.multi_reduction <add>, %117, %cst_54 [0] : vector<8x1024xf32> to vector<1024xf32>
    %119 = vector.shape_cast %118 : vector<1024xf32> to vector<1x1024xf32>
    %cst_55 = arith.constant 2.500000e-01 : f32
    %120 = vector.broadcast %cst_55 : f32 to vector<1x1024xf32>
    %121 = arith.mulf %116, %120 : vector<1x1024xf32>
    %cst_56 = arith.constant 2.500000e-01 : f32
    %122 = vector.broadcast %cst_56 : f32 to vector<1x1024xf32>
    %123 = arith.mulf %119, %122 : vector<1x1024xf32>
    %124 = arith.mulf %121, %121 : vector<1x1024xf32>
    %125 = arith.subf %123, %124 : vector<1x1024xf32>
    %cst_57 = arith.constant 8.000000e-01 : f32
    %126 = vector.broadcast %cst_57 : f32 to vector<1x1024xf32>
    %127 = arith.addf %125, %126 : vector<1x1024xf32>
    %128 = math.rsqrt %127 : vector<1x1024xf32>
    %129 = vector.broadcast %121 : vector<1x1024xf32> to vector<8x1024xf32>
    %130 = arith.subf %108, %129 : vector<8x1024xf32>
    %131 = vector.broadcast %128 : vector<1x1024xf32> to vector<8x1024xf32>
    %132 = arith.mulf %130, %131 : vector<8x1024xf32>
    %133 = vector.broadcast %109 : vector<1x1024xf32> to vector<8x1024xf32>
    %134 = arith.mulf %132, %133 : vector<8x1024xf32>
    %135 = vector.broadcast %110 : vector<1x1024xf32> to vector<8x1024xf32>
    %136 = arith.addf %134, %135 : vector<8x1024xf32>
    %cst_58 = arith.constant 0.000000e+00 : f32
    %137 = vector.broadcast %cst_58 : f32 to vector<8x1024xf32>
    %138 = arith.cmpf ogt, %136, %137 : vector<8x1024xf32>
    %cst_59 = arith.constant 2.000000e-01 : f32
    %139 = vector.broadcast %cst_59 : f32 to vector<8x1024xf32>
    %140 = arith.mulf %139, %136 : vector<8x1024xf32>
    %141 = arith.select %138, %136, %140 : vector<8x1024xi1>, vector<8x1024xf32>
    %c2_i32_60 = arith.constant 2 : i32
    %142 = tpu.memref_slice %arg21[%c2_i32_60] : memref<3x!tpu.dma_semaphore, #tpu.memory_space<semaphore_mem>> -> memref<1x!tpu.dma_semaphore, #tpu.memory_space<semaphore_mem>>
    %143 = tpu.memref_squeeze %142 : memref<1x!tpu.dma_semaphore, #tpu.memory_space<semaphore_mem>> -> memref<!tpu.dma_semaphore, #tpu.memory_space<semaphore_mem>>
    tpu.wait_dma2 semaphore(%143 : memref<!tpu.dma_semaphore, #tpu.memory_space<semaphore_mem>>) src(%arg15 : memref<1024x896xbf16, #tpu.memory_space<any>>) dst(%arg20 : memref<1024x896xbf16, #tpu.memory_space<vmem>>)
    %c0_61 = arith.constant 0 : index
    %c0_62 = arith.constant 0 : index
    %144 = vector.load %arg20[%c0_61, %c0_62] : memref<1024x896xbf16, #tpu.memory_space<vmem>>, vector<1024x896xbf16>
    %c0_63 = arith.constant 0 : index
    %c0_64 = arith.constant 0 : index
    %145 = vector.load %arg16[%c0_63, %c0_64] : memref<1x896xf32, #tpu.memory_space<vmem>>, vector<1x896xf32>
    %146 = arith.truncf %141 : vector<8x1024xf32> to vector<8x1024xbf16>
    %cst_65 = arith.constant dense<0.000000e+00> : vector<8x896xf32>
    %147 = tpu.matmul %146, %144, %cst_65 {dimension_numbers = #tpu.dot_dimension_numbers<[1], [0], [0], [1], [0, 0, 1, 1], [], []>} : vector<8x1024xbf16>, vector<1024x896xbf16>, vector<8x896xf32> -> vector<8x896xf32>
    %148 = vector.broadcast %145 : vector<1x896xf32> to vector<8x896xf32>
    %149 = arith.addf %147, %148 : vector<8x896xf32>
    %150 = math.tanh %149 : vector<8x896xf32>
    %151 = arith.truncf %150 : vector<8x896xf32> to vector<8x896xbf16>
    %c0_66 = arith.constant 0 : index
    %c0_67 = arith.constant 0 : index
    %152 = vector.load %arg17[%c0_66, %c0_67] : memref<8x896xbf16, #tpu.memory_space<vmem>>, vector<8x896xbf16>
    tpu.vector_store %arg17[%c0_66, %c0_67], %151 {strides = array<i32>} : memref<8x896xbf16, #tpu.memory_space<vmem>>, vector<8x896xbf16>,
    return
  }
}

</mosaic_0001>

<llo_original>
// kernel: generator_forward.1
$region0: #{generator_forward.1}
  #allocation0 [shape = 'u32[]', space=smem, size = 0x4, offset = 0x4, fixed_abs, tag = 'smem constant byte address 0x4 - core index']
  #allocation1 [shape = 'u32[72,128]{1,0:T(1,128)}', space=vmem, size = 0x9000, scoped, tag = 'internal scratch']
  #allocation2 [shape = 'bf16[256,512]{1,0:T(8,128)(2,1)}', space=vmem, size = 0x40000, scoped, tag = 'scratch operand']
  #allocation3 [shape = 'bf16[512,1024]{1,0:T(8,128)(2,1)}', space=vmem, size = 0x100000, scoped, tag = 'scratch operand']
  #allocation4 [shape = 'bf16[1024,896]{1,0:T(8,128)(2,1)}', space=vmem, size = 0x1c0000, scoped, tag = 'scratch operand']
  #allocation5 [shape = 's32[3]{0}', space=sflag, size = 0xc, scoped, tag = 'scratch operand']
  #allocation26 [shape = 's32[]', space=sflag, size = 0x4, offset = 0, fixed_abs, tag = 'sflag constant byte address 0x0 - dummy sync flag']
  #allocation27 [shape = 's32[]', space=sflag, size = 0x4, offset = 0, fixed_abs, tag = 'sflag constant byte address 0x0 - dummy sync flag']
  #allocation28 [shape = 'u32[]', space=smem, size = 0x4, offset = 0x44, fixed_abs, tag = 'smem constant byte address 0x44 - assertion arg 0']
  #allocation29 [shape = 'u32[]', space=smem, size = 0x4, offset = 0x48, fixed_abs, tag = 'smem constant byte address 0x48 - assertion arg 1']
  #allocation30 [shape = 's32[]', space=sflag, size = 0x4, offset = 0, fixed_abs, tag = 'sflag constant byte address 0x0 - dummy sync flag']
  #allocation31 [shape = 's32[]', space=sflag, size = 0x4, offset = 0, fixed_abs, tag = 'sflag constant byte address 0x0 - dummy sync flag']
  #allocation32 [shape = 's32[]', space=sflag, size = 0x4, offset = 0, fixed_abs, tag = 'sflag constant byte address 0x0 - dummy sync flag']
  #allocation33 [shape = 's32[]', space=sflag, size = 0x4, offset = 0, fixed_abs, tag = 'sflag constant byte address 0x0 - dummy sync flag']
  %s0 = inlined_call_operand.vmem [shape: f32[8,128], index: 0, kind: input, shape index: {}]
  %s1 = inlined_call_operand.hbm [shape: bf16[128,128], index: 1, kind: input, shape index: {}]
  %s2 = inlined_call_operand.hbm [shape: f32[1,128], index: 2, kind: input, shape index: {}]
  %s3 = inlined_call_operand.hbm [shape: bf16[128,256], index: 3, kind: input, shape index: {}]
  %s4 = inlined_call_operand.hbm [shape: f32[1,256], index: 4, kind: input, shape index: {}]
  %s5 = inlined_call_operand.hbm [shape: f32[1,256], index: 5, kind: input, shape index: {}]
  %s6 = inlined_call_operand.hbm [shape: f32[1,256], index: 6, kind: input, shape index: {}]
  %s7 = inlined_call_operand.hbm [shape: bf16[256,512], index: 7, kind: input, shape index: {}]
  %s8 = inlined_call_operand.hbm [shape: f32[1,512], index: 8, kind: input, shape index: {}]
  %s9 = inlined_call_operand.hbm [shape: f32[1,512], index: 9, kind: input, shape index: {}]
  %s10 = inlined_call_operand.hbm [shape: f32[1,512], index: 10, kind: input, shape index: {}]
  %s11 = inlined_call_operand.hbm [shape: bf16[512,1024], index: 11, kind: input, shape index: {}]
  %s12 = inlined_call_operand.hbm [shape: f32[1,1024], index: 12, kind: input, shape index: {}]
  %s13 = inlined_call_operand.hbm [shape: f32[1,1024], index: 13, kind: input, shape index: {}]
  %s14 = inlined_call_operand.hbm [shape: f32[1,1024], index: 14, kind: input, shape index: {}]
  %s15 = inlined_call_operand.hbm [shape: bf16[1024,896], index: 15, kind: input, shape index: {}]
  %s16 = inlined_call_operand.hbm [shape: f32[1,896], index: 16, kind: input, shape index: {}]
  %s17 = inlined_call_operand.vmem [shape: bf16[8,896], index: 17, kind: output, shape index: {}]
  %s18 = sld [smem:[#allocation0]]
  $region130: #{generator_forward.1} parent=0
    _
  %s20 = ssub.s32 1, %s18
  %s21 = scalar_select 0, %s20, %s18
  $region1: #{generator_forward.1} parent=0
    #allocation6 [shape = 'u8[32768]{0}', space=vmem, size = 0x8000, scoped, tag = 'input window, operand 1, single buffered']
    #allocation7 [shape = 's32[1]{0}', space=sflag, size = 0x4, scoped, tag = 'scoped memory for generator_forward.1']
    #allocation8 [shape = 'u8[512]{0}', space=vmem, size = 0x400, scoped, tag = 'input window, operand 2, single buffered']
    #allocation9 [shape = 's32[1]{0}', space=sflag, size = 0x4, scoped, tag = 'scoped memory for generator_forward.1']
    #allocation10 [shape = 'u8[65536]{0}', space=vmem, size = 0x10000, scoped, tag = 'input window, operand 3, single buffered']
    #allocation11 [shape = 'u8[1024]{0}', space=vmem, size = 0x400, scoped, tag = 'input window, operand 4, single buffered']
    #allocation12 [shape = 's32[1]{0}', space=sflag, size = 0x4, scoped, tag = 'scoped memory for generator_forward.1']
    #allocation13 [shape = 'u8[1024]{0}', space=vmem, size = 0x400, scoped, tag = 'input window, operand 5, single buffered']
    #allocation14 [shape = 'u8[1024]{0}', space=vmem, size = 0x400, scoped, tag = 'input window, operand 6, single buffered']
    #allocation15 [shape = 's32[1]{0}', space=sflag, size = 0x4, scoped, tag = 'scoped memory for generator_forward.1']
    #allocation16 [shape = 'u8[2048]{0}', space=vmem, size = 0x800, scoped, tag = 'input window, operand 8, single buffered']
    #allocation17 [shape = 'u8[2048]{0}', space=vmem, size = 0x800, scoped, tag = 'input window, operand 9, single buffered']
    #allocation18 [shape = 's32[1]{0}', space=sflag, size = 0x4, scoped, tag = 'scoped memory for generator_forward.1']
    #allocation19 [shape = 'u8[2048]{0}', space=vmem, size = 0x800, scoped, tag = 'input window, operand 10, single buffered']
    #allocation20 [shape = 'u8[4096]{0}', space=vmem, size = 0x1000, scoped, tag = 'input window, operand 12, single buffered']
    #allocation21 [shape = 's32[1]{0}', space=sflag, size = 0x4, scoped, tag = 'scoped memory for generator_forward.1']
    #allocation22 [shape = 'u8[4096]{0}', space=vmem, size = 0x1000, scoped, tag = 'input window, operand 13, single buffered']
    #allocation23 [shape = 'u8[4096]{0}', space=vmem, size = 0x1000, scoped, tag = 'input window, operand 14, single buffered']
    #allocation24 [shape = 's32[1]{0}', space=sflag, size = 0x4, scoped, tag = 'scoped memory for generator_forward.1']
    #allocation25 [shape = 'u8[3584]{0}', space=vmem, size = 0x1000, scoped, tag = 'input window, operand 16, single buffered']
    %22 = vsyncpa [#allocation7], 0
    %23 = vsyncpa [#allocation9], 0
    %24 = vsyncpa [#allocation12], 0
    %25 = vsyncpa [#allocation15], 0
    %26 = vsyncpa [#allocation18], 0
    %27 = vsyncpa [#allocation21], 0
    %28 = vsyncpa [#allocation24], 0
    // Predicated region
    $region2: #{generator_forward.1} parent=1 // pred_check
      _
    $region3: #{generator_forward.1} parent=1 // pred_check_branch
      %30 = sbr.rel (0) target = $region5
    $region4: #{generator_forward.1} parent=1 // pred_region
      _
    $region5: #{generator_forward.1} parent=1 // pred_fallthru
      _
    // Predicated region
    $region6: #{generator_forward.1} parent=1 // pred_check
      _
    $region7: #{generator_forward.1} parent=1 // pred_check_branch
      %32 = sbr.rel (0) target = $region9
    $region8: #{generator_forward.1} parent=1 // pred_region
      %34 = vsyncadd [#allocation7], 0
      %s35 = sshll.u32 %s1, 4
      %s36 = int_to_ptr.hbm [resolvable:$true] %s35
      %s37 = sshll.u32 [#allocation6], 4
      %s38 = int_to_ptr.vmem [resolvable:$true] %s37
      %43 = dma.hbm_to_vmem [thread:$0]  %s36, 1024, %s38, [#allocation7], 64, 64, 4
    $region9: #{generator_forward.1} parent=1 // pred_fallthru
      _
    // Predicated region
    $region10: #{generator_forward.1} parent=1 // pred_check
      _
    $region11: #{generator_forward.1} parent=1 // pred_check_branch
      %45 = sbr.rel (0) target = $region13
    $region12: #{generator_forward.1} parent=1 // pred_region
      %47 = vsyncadd [#allocation9], 0
      %s49 = sshll.u32 %s2, 4
      %s50 = int_to_ptr.hbm [resolvable:$true] %s49
      %s51 = sshll.u32 [#allocation8], 4
      %s52 = int_to_ptr.vmem [resolvable:$true] %s51
      %54 = dma.hbm_to_vmem [thread:$0]  %s50, 16, %s52, [#allocation9]
    $region13: #{generator_forward.1} parent=1 // pred_fallthru
      _
    // Predicated region
    $region14: #{generator_forward.1} parent=1 // pred_check
      _
    $region15: #{generator_forward.1} parent=1 // pred_check_branch
      %56 = sbr.rel (0) target = $region17
    $region16: #{generator_forward.1} parent=1 // pred_region
      %58 = vsyncadd [#allocation9], 0
      %s59 = sshll.u32 %s3, 4
      %s60 = int_to_ptr.hbm [resolvable:$true] %s59
      %s61 = sshll.u32 [#allocation10], 4
      %s62 = int_to_ptr.vmem [resolvable:$true] %s61
      %67 = dma.hbm_to_vmem [thread:$0]  %s60, 2048, %s62, [#allocation9], 128, 128, 8
    $region17: #{generator_forward.1} parent=1 // pred_fallthru
      _
    // Predicated region
    $region18: #{generator_forward.1} parent=1 // pred_check
      _
    $region19: #{generator_forward.1} parent=1 // pred_check_branch
      %69 = sbr.rel (0) target = $region21
    $region20: #{generator_forward.1} parent=1 // pred_region
      %71 = vsyncadd [#allocation12], 0
      %s73 = sshll.u32 %s4, 4
      %s74 = int_to_ptr.hbm [resolvable:$true] %s73
      %s75 = sshll.u32 [#allocation11], 4
      %s76 = int_to_ptr.vmem [resolvable:$true] %s75
      %78 = dma.hbm_to_vmem [thread:$0]  %s74, 32, %s76, [#allocation12]
    $region21: #{generator_forward.1} parent=1 // pred_fallthru
      _
    // Predicated region
    $region22: #{generator_forward.1} parent=1 // pred_check
      _
    $region23: #{generator_forward.1} parent=1 // pred_check_branch
      %80 = sbr.rel (0) target = $region25
    $region24: #{generator_forward.1} parent=1 // pred_region
      %82 = vsyncadd [#allocation12], 0
      %s84 = sshll.u32 %s5, 4
      %s85 = int_to_ptr.hbm [resolvable:$true] %s84
      %s86 = sshll.u32 [#allocation13], 4
      %s87 = int_to_ptr.vmem [resolvable:$true] %s86
      %89 = dma.hbm_to_vmem [thread:$0]  %s85, 32, %s87, [#allocation12]
    $region25: #{generator_forward.1} parent=1 // pred_fallthru
      _
    // Predicated region
    $region26: #{generator_forward.1} parent=1 // pred_check
      _
    $region27: #{generator_forward.1} parent=1 // pred_check_branch
      %91 = sbr.rel (0) target = $region29
    $region28: #{generator_forward.1} parent=1 // pred_region
      %93 = vsyncadd [#allocation15], 0
      %s95 = sshll.u32 %s6, 4
      %s96 = int_to_ptr.hbm [resolvable:$true] %s95
      %s97 = sshll.u32 [#allocation14], 4
      %s98 = int_to_ptr.vmem [resolvable:$true] %s97
      %100 = dma.hbm_to_vmem [thread:$0]  %s96, 32, %s98, [#allocation15]
    $region29: #{generator_forward.1} parent=1 // pred_fallthru
      _
    // Predicated region
    $region30: #{generator_forward.1} parent=1 // pred_check
      _
    $region31: #{generator_forward.1} parent=1 // pred_check_branch
      %102 = sbr.rel (0) target = $region33
    $region32: #{generator_forward.1} parent=1 // pred_region
      %104 = vsyncadd [#allocation15], 0
      %s106 = sshll.u32 %s8, 4
      %s107 = int_to_ptr.hbm [resolvable:$true] %s106
      %s108 = sshll.u32 [#allocation16], 4
      %s109 = int_to_ptr.vmem [resolvable:$true] %s108
      %111 = dma.hbm_to_vmem [thread:$0]  %s107, 64, %s109, [#allocation15]
    $region33: #{generator_forward.1} parent=1 // pred_fallthru
      _
    // Predicated region
    $region34: #{generator_forward.1} parent=1 // pred_check
      _
    $region35: #{generator_forward.1} parent=1 // pred_check_branch
      %113 = sbr.rel (0) target = $region37
    $region36: #{generator_forward.1} parent=1 // pred_region
      %115 = vsyncadd [#allocation18], 0
      %s117 = sshll.u32 %s9, 4
      %s118 = int_to_ptr.hbm [resolvable:$true] %s117
      %s119 = sshll.u32 [#allocation17], 4
      %s120 = int_to_ptr.vmem [resolvable:$true] %s119
      %122 = dma.hbm_to_vmem [thread:$0]  %s118, 64, %s120, [#allocation18]
    $region37: #{generator_forward.1} parent=1 // pred_fallthru
      _
    // Predicated region
    $region38: #{generator_forward.1} parent=1 // pred_check
      _
    $region39: #{generator_forward.1} parent=1 // pred_check_branch
      %124 = sbr.rel (0) target = $region41
    $region40: #{generator_forward.1} parent=1 // pred_region
      %126 = vsyncadd [#allocation18], 0
      %s128 = sshll.u32 %s10, 4
      %s129 = int_to_ptr.hbm [resolvable:$true] %s128
      %s130 = sshll.u32 [#allocation19], 4
      %s131 = int_to_ptr.vmem [resolvable:$true] %s130
      %133 = dma.hbm_to_vmem [thread:$0]  %s129, 64, %s131, [#allocation18]
    $region41: #{generator_forward.1} parent=1 // pred_fallthru
      _
    // Predicated region
    $region42: #{generator_forward.1} parent=1 // pred_check
      _
    $region43: #{generator_forward.1} parent=1 // pred_check_branch
      %135 = sbr.rel (0) target = $region45
    $region44: #{generator_forward.1} parent=1 // pred_region
      %137 = vsyncadd [#allocation21], 0
      %s139 = sshll.u32 %s12, 4
      %s140 = int_to_ptr.hbm [resolvable:$true] %s139
      %s141 = sshll.u32 [#allocation20], 4
      %s142 = int_to_ptr.vmem [resolvable:$true] %s141
      %144 = dma.hbm_to_vmem [thread:$0]  %s140, 128, %s142, [#allocation21]
    $region45: #{generator_forward.1} parent=1 // pred_fallthru
      _
    // Predicated region
    $region46: #{generator_forward.1} parent=1 // pred_check
      _
    $region47: #{generator_forward.1} parent=1 // pred_check_branch
      %146 = sbr.rel (0) target = $region49
    $region48: #{generator_forward.1} parent=1 // pred_region
      %148 = vsyncadd [#allocation21], 0
      %s150 = sshll.u32 %s13, 4
      %s151 = int_to_ptr.hbm [resolvable:$true] %s150
      %s152 = sshll.u32 [#allocation22], 4
      %s153 = int_to_ptr.vmem [resolvable:$true] %s152
      %155 = dma.hbm_to_vmem [thread:$0]  %s151, 128, %s153, [#allocation21]
    $region49: #{generator_forward.1} parent=1 // pred_fallthru
      _
    // Predicated region
    $region50: #{generator_forward.1} parent=1 // pred_check
      _
    $region51: #{generator_forward.1} parent=1 // pred_check_branch
      %157 = sbr.rel (0) target = $region53
    $region52: #{generator_forward.1} parent=1 // pred_region
      %159 = vsyncadd [#allocation24], 0
      %s161 = sshll.u32 %s14, 4
      %s162 = int_to_ptr.hbm [resolvable:$true] %s161
      %s163 = sshll.u32 [#allocation23], 4
      %s164 = int_to_ptr.vmem [resolvable:$true] %s163
      %166 = dma.hbm_to_vmem [thread:$0]  %s162, 128, %s164, [#allocation24]
    $region53: #{generator_forward.1} parent=1 // pred_fallthru
      _
    // Predicated region
    $region54: #{generator_forward.1} parent=1 // pred_check
      _
    $region55: #{generator_forward.1} parent=1 // pred_check_branch
      %168 = sbr.rel (0) target = $region57
    $region56: #{generator_forward.1} parent=1 // pred_region
      %170 = vsyncadd [#allocation24], 0
      %s172 = sshll.u32 %s16, 4
      %s173 = int_to_ptr.hbm [resolvable:$true] %s172
      %s174 = sshll.u32 [#allocation25], 4
      %s175 = int_to_ptr.vmem [resolvable:$true] %s174
      %177 = dma.hbm_to_vmem [thread:$0]  %s173, 112, %s175, [#allocation24]
    $region57: #{generator_forward.1} parent=1 // pred_fallthru
      _
    // Predicated region
    $region58: #{generator_forward.1} parent=1 // pred_check
      _
    $region59: #{generator_forward.1} parent=1 // pred_check_branch
      %179 = sbr.rel (0) target = $region61
    $region60: #{generator_forward.1} parent=1 // pred_region
      %181 = dma.done [#allocation7], 1024
    $region61: #{generator_forward.1} parent=1 // pred_fallthru
      _
    // Predicated region
    $region62: #{generator_forward.1} parent=1 // pred_check
      _
    $region63: #{generator_forward.1} parent=1 // pred_check_branch
      %183 = sbr.rel (0) target = $region65
    $region64: #{generator_forward.1} parent=1 // pred_region
      %185 = dma.done [#allocation9], 16
    $region65: #{generator_forward.1} parent=1 // pred_fallthru
      _
    // Predicated region
    $region66: #{generator_forward.1} parent=1 // pred_check
      _
    $region67: #{generator_forward.1} parent=1 // pred_check_branch
      %187 = sbr.rel (0) target = $region69
    $region68: #{generator_forward.1} parent=1 // pred_region
      %189 = dma.done [#allocation9], 2048
    $region69: #{generator_forward.1} parent=1 // pred_fallthru
      _
    // Predicated region
    $region70: #{generator_forward.1} parent=1 // pred_check
      _
    $region71: #{generator_forward.1} parent=1 // pred_check_branch
      %191 = sbr.rel (0) target = $region73
    $region72: #{generator_forward.1} parent=1 // pred_region
      %193 = dma.done [#allocation12], 32
    $region73: #{generator_forward.1} parent=1 // pred_fallthru
      _
    // Predicated region
    $region74: #{generator_forward.1} parent=1 // pred_check
      _
    $region75: #{generator_forward.1} parent=1 // pred_check_branch
      %195 = sbr.rel (0) target = $region77
    $region76: #{generator_forward.1} parent=1 // pred_region
      %197 = dma.done [#allocation12], 32
    $region77: #{generator_forward.1} parent=1 // pred_fallthru
      _
    // Predicated region
    $region78: #{generator_forward.1} parent=1 // pred_check
      _
    $region79: #{generator_forward.1} parent=1 // pred_check_branch
      %199 = sbr.rel (0) target = $region81
    $region80: #{generator_forward.1} parent=1 // pred_region
      %201 = dma.done [#allocation15], 32
    $region81: #{generator_forward.1} parent=1 // pred_fallthru
      _
    // Predicated region
    $region82: #{generator_forward.1} parent=1 // pred_check
      _
    $region83: #{generator_forward.1} parent=1 // pred_check_branch
      %203 = sbr.rel (0) target = $region85
    $region84: #{generator_forward.1} parent=1 // pred_region
      %205 = dma.done [#allocation15], 64
    $region85: #{generator_forward.1} parent=1 // pred_fallthru
      _
    // Predicated region
    $region86: #{generator_forward.1} parent=1 // pred_check
      _
    $region87: #{generator_forward.1} parent=1 // pred_check_branch
      %207 = sbr.rel (0) target = $region89
    $region88: #{generator_forward.1} parent=1 // pred_region
      %209 = dma.done [#allocation18], 64
    $region89: #{generator_forward.1} parent=1 // pred_fallthru
      _
    // Predicated region
    $region90: #{generator_forward.1} parent=1 // pred_check
      _
    $region91: #{generator_forward.1} parent=1 // pred_check_branch
      %211 = sbr.rel (0) target = $region93
    $region92: #{generator_forward.1} parent=1 // pred_region
      %213 = dma.done [#allocation18], 64
    $region93: #{generator_forward.1} parent=1 // pred_fallthru
      _
    // Predicated region
    $region94: #{generator_forward.1} parent=1 // pred_check
      _
    $region95: #{generator_forward.1} parent=1 // pred_check_branch
      %215 = sbr.rel (0) target = $region97
    $region96: #{generator_forward.1} parent=1 // pred_region
      %217 = dma.done [#allocation21], 128
    $region97: #{generator_forward.1} parent=1 // pred_fallthru
      _
    // Predicated region
    $region98: #{generator_forward.1} parent=1 // pred_check
      _
    $region99: #{generator_forward.1} parent=1 // pred_check_branch
      %219 = sbr.rel (0) target = $region101
    $region100: #{generator_forward.1} parent=1 // pred_region
      %221 = dma.done [#allocation21], 128
    $region101: #{generator_forward.1} parent=1 // pred_fallthru
      _
    // Predicated region
    $region102: #{generator_forward.1} parent=1 // pred_check
      _
    $region103: #{generator_forward.1} parent=1 // pred_check_branch
      %223 = sbr.rel (0) target = $region105
    $region104: #{generator_forward.1} parent=1 // pred_region
      %225 = dma.done [#allocation24], 128
    $region105: #{generator_forward.1} parent=1 // pred_fallthru
      _
    // Predicated region
    $region106: #{generator_forward.1} parent=1 // pred_check
      _
    $region107: #{generator_forward.1} parent=1 // pred_check_branch
      %227 = sbr.rel (0) target = $region109
    $region108: #{generator_forward.1} parent=1 // pred_region
      %229 = dma.done [#allocation24], 112
    $region109: #{generator_forward.1} parent=1 // pred_fallthru
      _
    // Predicated region
    $region110: #{generator_forward.1} parent=1 // pred_check
      _
    $region111: #{generator_forward.1} parent=1 // pred_check_branch
      %231 = sbr.rel target = $region113
    $region112: #{generator_forward.1} parent=1 // pred_region
      %232 = sst [smem:[#allocation28]] [#allocation27]
      %233 = sst [smem:[#allocation29]] [#allocation26]
    $region113: #{generator_forward.1} parent=1 // pred_fallthru
      _
    %235 = shalt.err (0)
    %s237 = sshll.u32 %s7, 4
    %s238 = int_to_ptr.hbm [resolvable:$true] %s237
    %s239 = sshll.u32 [#allocation2], 4
    %s240 = int_to_ptr.vmem [resolvable:$true] %s239
    %242 = dma.hbm_to_vmem [thread:$0]  %s238, 8192, %s240, [#allocation5]
    %s243 = scalar_lea.sflag [#allocation5], 1
    // Predicated region
    $region114: #{generator_forward.1} parent=1 // pred_check
      _
    $region115: #{generator_forward.1} parent=1 // pred_check_branch
      %245 = sbr.rel target = $region117
    $region116: #{generator_forward.1} parent=1 // pred_region
      %246 = sst [smem:[#allocation28]] [#allocation31]
      %247 = sst [smem:[#allocation29]] [#allocation30]
    $region117: #{generator_forward.1} parent=1 // pred_fallthru
      _
    %249 = shalt.err (0)
    %s251 = sshll.u32 %s11, 4
    %s252 = int_to_ptr.hbm [resolvable:$true] %s251
    %s253 = sshll.u32 [#allocation3], 4
    %s254 = int_to_ptr.vmem [resolvable:$true] %s253
    %256 = dma.hbm_to_vmem [thread:$0]  %s252, 32768, %s254, %s243
    %s257 = scalar_lea.sflag [#allocation5], 2
    // Predicated region
    $region118: #{generator_forward.1} parent=1 // pred_check
      _
    $region119: #{generator_forward.1} parent=1 // pred_check_branch
      %259 = sbr.rel target = $region121
    $region120: #{generator_forward.1} parent=1 // pred_region
      %260 = sst [smem:[#allocation28]] [#allocation33]
      %261 = sst [smem:[#allocation29]] [#allocation32]
    $region121: #{generator_forward.1} parent=1 // pred_fallthru
      _
    %263 = shalt.err (0)
    %s265 = sshll.u32 %s15, 4
    %s266 = int_to_ptr.hbm [resolvable:$true] %s265
    %s267 = sshll.u32 [#allocation4], 4
    %s268 = int_to_ptr.vmem [resolvable:$true] %s267
    %270 = dma.hbm_to_vmem [thread:$0]  %s266, 57344, %s268, %s257
    %v271 = vlaneseq
    %v272 = vshrl.u32 %v271, 7
    %vm273 = vcmp.lt.s32.totalorder %v272, 4
    %v274 = vld [vmem:[%s0] sm:$0xff]
    %v275 = vld [vmem:[#allocation6] sm:$0xf]
    %v276 = vld [vmem:[#allocation6 + $0x4] sm:$0xf]
    %v277 = vld [vmem:[#allocation6 + $0x8] sm:$0xf]
    %v278 = vld [vmem:[#allocation6 + $0xc] sm:$0xf]
    %v279 = vld [vmem:[#allocation6 + $0x10] sm:$0xf]
    %v280 = vld [vmem:[#allocation6 + $0x14] sm:$0xf]
    %v281 = vld [vmem:[#allocation6 + $0x18] sm:$0xf]
    %v282 = vld [vmem:[#allocation6 + $0x1c] sm:$0xf]
    %v283 = vld [vmem:[#allocation6 + $0x20] sm:$0xf]
    %v284 = vld [vmem:[#allocation6 + $0x24] sm:$0xf]
    %v285 = vld [vmem:[#allocation6 + $0x28] sm:$0xf]
    %v286 = vld [vmem:[#allocation6 + $0x2c] sm:$0xf]
    %v287 = vld [vmem:[#allocation6 + $0x30] sm:$0xf]
    %v288 = vld [vmem:[#allocation6 + $0x34] sm:$0xf]
    %v289 = vld [vmem:[#allocation6 + $0x38] sm:$0xf]
    %v290 = vld [vmem:[#allocation6 + $0x3c] sm:$0xf]
    %v291 = vld [vmem:[#allocation8] sm:$0x1]
    %v292 = vpack.c.bf16 %v274, %v274
    %v294 = vperm.slane %v291, 0
    %v312 = vunpack.c.l.b16 %v275
    %v313 = vunpack.c.l.b16 %v276
    %v314 = vunpack.c.l.b16 %v277
    %v315 = vunpack.c.l.b16 %v278
    %v316 = vunpack.c.l.b16 %v279
    %v317 = vunpack.c.l.b16 %v280
    %v318 = vunpack.c.l.b16 %v281
    %v319 = vunpack.c.l.b16 %v282
    %v320 = vunpack.c.l.b16 %v283
    %v321 = vunpack.c.l.b16 %v284
    %v322 = vunpack.c.l.b16 %v285
    %v323 = vunpack.c.l.b16 %v286
    %v324 = vunpack.c.l.b16 %v287
    %v325 = vunpack.c.l.b16 %v288
    %v326 = vunpack.c.l.b16 %v289
    %v327 = vunpack.c.l.b16 %v290
    %v328 = vpack.c.b16 %v313, %v312
    %v329 = vpack.c.b16 %v315, %v314
    %v330 = vpack.c.b16 %v317, %v316
    %v331 = vpack.c.b16 %v319, %v318
    %v332 = vpack.c.b16 %v321, %v320
    %v333 = vpack.c.b16 %v323, %v322
    %v334 = vpack.c.b16 %v325, %v324
    %v335 = vpack.c.b16 %v327, %v326
    %344 = vmatpush.bf16.msra.mxu0 %v335
    %345 = vmatpush.bf16.msra.mxu0 %v334
    %346 = vmatpush.bf16.msra.mxu0 %v333
    %347 = vmatpush.bf16.msra.mxu0 %v332
    %348 = vmatpush.bf16.msra.mxu0 %v331
    %349 = vmatpush.bf16.msra.mxu0 %v330
    %350 = vmatpush.bf16.msra.mxu0 %v329
    %351 = vmatpush.bf16.msra.mxu0 %v328
    %352 = vmatmul.bf16.gmra.mxu0 %v292
    %v353 = vpop.f32.mrf.mxu0
    %v354 = vadd.f32 %v294, %v353
    %v355 = vpop.f32.mrf.mxu0
    %356 = vdwg.mxu0
    %vm357 = vcmp.gt.f32.partialorder %v354, 0.0
    %v358 = vmul.f32 %v354, 0.2
    %v359 = vsel %vm357, %v354, %v358
    %v360 = vld [vmem:[#allocation10] sm:$0xff]
    %v361 = vld [vmem:[#allocation10 + $0x8] sm:$0xff]
    %v362 = vld [vmem:[#allocation10 + $0x10] sm:$0xff]
    %v363 = vld [vmem:[#allocation10 + $0x18] sm:$0xff]
    %v364 = vld [vmem:[#allocation10 + $0x20] sm:$0xff]
    %v365 = vld [vmem:[#allocation10 + $0x28] sm:$0xff]
    %v366 = vld [vmem:[#allocation10 + $0x30] sm:$0xff]
    %v367 = vld [vmem:[#allocation10 + $0x38] sm:$0xff]
    %v368 = vld [vmem:[#allocation10 + $0x40] sm:$0xff]
    %v369 = vld [vmem:[#allocation10 + $0x48] sm:$0xff]
    %v370 = vld [vmem:[#allocation10 + $0x50] sm:$0xff]
    %v371 = vld [vmem:[#allocation10 + $0x58] sm:$0xff]
    %v372 = vld [vmem:[#allocation10 + $0x60] sm:$0xff]
    %v373 = vld [vmem:[#allocation10 + $0x68] sm:$0xff]
    %v374 = vld [vmem:[#allocation10 + $0x70] sm:$0xff]
    %v375 = vld [vmem:[#allocation10 + $0x78] sm:$0xff]
    %v376 = vld [vmem:[#allocation11] sm:$0x3]
    %v377 = vpack.c.bf16 %v359, %v359
    %v379 = vperm.slane %v376, 0
    %v380 = vperm.slane %v376, 1
    %v399 = vunpack.c.l.b16 %v360
    %v400 = vunpack.c.h.b16 %v360
    %v401 = vunpack.c.l.b16 %v361
    %v402 = vunpack.c.h.b16 %v361
    %v403 = vunpack.c.l.b16 %v362
    %v404 = vunpack.c.h.b16 %v362
    %v405 = vunpack.c.l.b16 %v363
    %v406 = vunpack.c.h.b16 %v363
    %v407 = vunpack.c.l.b16 %v364
    %v408 = vunpack.c.h.b16 %v364
    %v409 = vunpack.c.l.b16 %v365
    %v410 = vunpack.c.h.b16 %v365
    %v411 = vunpack.c.l.b16 %v366
    %v412 = vunpack.c.h.b16 %v366
    %v413 = vunpack.c.l.b16 %v367
    %v414 = vunpack.c.h.b16 %v367
    %v415 = vunpack.c.l.b16 %v368
    %v416 = vunpack.c.h.b16 %v368
    %v417 = vunpack.c.l.b16 %v369
    %v418 = vunpack.c.h.b16 %v369
    %v419 = vunpack.c.l.b16 %v370
    %v420 = vunpack.c.h.b16 %v370
    %v421 = vunpack.c.l.b16 %v371
    %v422 = vunpack.c.h.b16 %v371
    %v423 = vunpack.c.l.b16 %v372
    %v424 = vunpack.c.h.b16 %v372
    %v425 = vunpack.c.l.b16 %v373
    %v426 = vunpack.c.h.b16 %v373
    %v427 = vunpack.c.l.b16 %v374
    %v428 = vunpack.c.h.b16 %v374
    %v429 = vunpack.c.l.b16 %v375
    %v430 = vunpack.c.h.b16 %v375
    %v431 = vpack.c.b16 %v401, %v399
    %v432 = vpack.c.b16 %v402, %v400
    %v433 = vpack.c.b16 %v405, %v403
    %v434 = vpack.c.b16 %v406, %v404
    %v435 = vpack.c.b16 %v409, %v407
    %v436 = vpack.c.b16 %v410, %v408
    %v437 = vpack.c.b16 %v413, %v411
    %v438 = vpack.c.b16 %v414, %v412
    %v439 = vpack.c.b16 %v417, %v415
    %v440 = vpack.c.b16 %v418, %v416
    %v441 = vpack.c.b16 %v421, %v419
    %v442 = vpack.c.b16 %v422, %v420
    %v443 = vpack.c.b16 %v425, %v423
    %v444 = vpack.c.b16 %v426, %v424
    %v445 = vpack.c.b16 %v429, %v427
    %v446 = vpack.c.b16 %v430, %v428
    %463 = vmatpush.bf16.msra.mxu0 %v445
    %464 = vmatpush.bf16.msra.mxu0 %v443
    %465 = vmatpush.bf16.msra.mxu0 %v441
    %466 = vmatpush.bf16.msra.mxu0 %v439
    %467 = vmatpush.bf16.msra.mxu0 %v437
    %468 = vmatpush.bf16.msra.mxu0 %v435
    %469 = vmatpush.bf16.msra.mxu0 %v433
    %470 = vmatpush.bf16.msra.mxu0 %v431
    %471 = vmatmul.bf16.gmra.mxu0 %v377
    %v472 = vpop.f32.mrf.mxu0
    %v473 = vadd.f32 %v379, %v472
    %v474 = vpop.f32.mrf.mxu0
    %475 = vdwg.mxu0
    %476 = vmatpush.bf16.msra.mxu0 %v446
    %477 = vmatpush.bf16.msra.mxu0 %v444
    %478 = vmatpush.bf16.msra.mxu0 %v442
    %479 = vmatpush.bf16.msra.mxu0 %v440
    %480 = vmatpush.bf16.msra.mxu0 %v438
    %481 = vmatpush.bf16.msra.mxu0 %v436
    %482 = vmatpush.bf16.msra.mxu0 %v434
    %483 = vmatpush.bf16.msra.mxu0 %v432
    %484 = vmatmul.bf16.gmra.mxu0 %v377
    %v485 = vpop.f32.mrf.mxu0
    %v486 = vadd.f32 %v380, %v485
    %v487 = vpop.f32.mrf.mxu0
    %488 = vdwg.mxu0
    %v489 = vld [vmem:[#allocation13] sm:$0x3]
    %v490 = vld [vmem:[#allocation14] sm:$0x3]
    %v491 = vsel %vm273, 1, 0
    %vm492 = vcmp.eq.s32.totalorder %v491, 1
    %v493 = vsel %vm492, %v473, 0.0
    %v494 = vsel %vm492, %v486, 0.0
    %v495 = vrot.slane %v493, 4
    %v496 = vadd.f32 %v493, %v495
    %v497 = vrot.slane %v496, 2
    %v498 = vadd.f32 %v496, %v497
    %v499 = vrot.slane %v498, 1
    %v500 = vadd.f32 %v498, %v499
    %v501 = vrot.slane %v494, 4
    %v502 = vadd.f32 %v494, %v501
    %v503 = vrot.slane %v502, 2
    %v504 = vadd.f32 %v502, %v503
    %v505 = vrot.slane %v504, 1
    %v506 = vadd.f32 %v504, %v505
    %v507 = vmul.f32 %v493, %v493
    %v508 = vmul.f32 %v494, %v494
    %v509 = vrot.slane %v507, 4
    %v510 = vadd.f32 %v507, %v509
    %v511 = vrot.slane %v510, 2
    %v512 = vadd.f32 %v510, %v511
    %v513 = vrot.slane %v512, 1
    %v514 = vadd.f32 %v512, %v513
    %v515 = vrot.slane %v508, 4
    %v516 = vadd.f32 %v508, %v515
    %v517 = vrot.slane %v516, 2
    %v518 = vadd.f32 %v516, %v517
    %v519 = vrot.slane %v518, 1
    %v520 = vadd.f32 %v518, %v519
    %v521 = vmul.f32 %v500, 0.25
    %v522 = vmul.f32 %v506, 0.25
    %v523 = vmul.f32 %v514, 0.25
    %v524 = vmul.f32 %v520, 0.25
    %v525 = vmul.f32 %v521, %v521
    %v526 = vmul.f32 %v522, %v522
    %v527 = vsub.f32 %v523, %v525
    %v528 = vsub.f32 %v524, %v526
    %v529 = vadd.f32 %v527, 0.8
    %v530 = vadd.f32 %v528, 0.8
    %v531 = vrsqrt.pop %v529
    %v532 = vmul.f32 %v531, %v529
    %v533 = vmul.f32 %v532, %v531
    %v534 = vmul.f32 0.5, %v533
    %v535 = vsub.f32 1.5, %v534
    %v536 = vmul.f32 %v531, %v535
    %vm537 = vweird.f32 %v529
    %vm538 = vweird.f32 %v531
    %vm539 = vmor %vm537, %vm538
    %v540 = vsel %vm539, %v531, %v536
    %v541 = vrsqrt.pop %v530
    %v542 = vmul.f32 %v541, %v530
    %v543 = vmul.f32 %v542, %v541
    %v544 = vmul.f32 0.5, %v543
    %v545 = vsub.f32 1.5, %v544
    %v546 = vmul.f32 %v541, %v545
    %vm547 = vweird.f32 %v530
    %vm548 = vweird.f32 %v541
    %vm549 = vmor %vm547, %vm548
    %v550 = vsel %vm549, %v541, %v546
    %v551 = vsub.f32 %v473, %v521
    %v552 = vsub.f32 %v486, %v522
    %v553 = vmul.f32 %v551, %v540
    %v554 = vmul.f32 %v552, %v550
    %v556 = vperm.slane %v489, 0
    %v557 = vperm.slane %v489, 1
    %v560 = vmul.f32 %v553, %v556
    %v561 = vmul.f32 %v554, %v557
    %v563 = vperm.slane %v490, 0
    %v564 = vperm.slane %v490, 1
    %v567 = vadd.f32 %v560, %v563
    %v568 = vadd.f32 %v561, %v564
    %vm569 = vcmp.gt.f32.partialorder %v567, 0.0
    %vm570 = vcmp.gt.f32.partialorder %v568, 0.0
    %v571 = vmul.f32 %v567, 0.2
    %v572 = vmul.f32 %v568, 0.2
    %v573 = vsel %vm569, %v567, %v571
    %v574 = vsel %vm570, %v568, %v572
    %s575 = smul.u32 4, 32
    %s576 = smul.u32 %s575, 4
    %s577 = sshll.u32 %s576, 4
    %578 = dma.done [#allocation5], %s577
    %v579 = vld [vmem:[#allocation2] sm:$0xff]
    %v580 = vld [vmem:[#allocation2 + $0x8] sm:$0xff]
    %v581 = vld [vmem:[#allocation2 + $0x10] sm:$0xff]
    %v582 = vld [vmem:[#allocation2 + $0x18] sm:$0xff]
    %v583 = vld [vmem:[#allocation2 + $0x20] sm:$0xff]
    %v584 = vld [vmem:[#allocation2 + $0x28] sm:$0xff]
    %v585 = vld [vmem:[#allocation2 + $0x30] sm:$0xff]
    %v586 = vld [vmem:[#allocation2 + $0x38] sm:$0xff]
    %v587 = vld [vmem:[#allocation2 + $0x40] sm:$0xff]
    %v588 = vld [vmem:[#allocation2 + $0x48] sm:$0xff]
    %v589 = vld [vmem:[#allocation2 + $0x50] sm:$0xff]
    %v590 = vld [vmem:[#allocation2 + $0x58] sm:$0xff]
    %v591 = vld [vmem:[#allocation2 + $0x60] sm:$0xff]
    %v592 = vld [vmem:[#allocation2 + $0x68] sm:$0xff]
    %v593 = vld [vmem:[#allocation2 + $0x70] sm:$0xff]
    %v594 = vld [vmem:[#allocation2 + $0x78] sm:$0xff]
    %v595 = vld [vmem:[#allocation2 + $0x80] sm:$0xff]
    %v596 = vld [vmem:[#allocation2 + $0x88] sm:$0xff]
    %v597 = vld [vmem:[#allocation2 + $0x90] sm:$0xff]
    %v598 = vld [vmem:[#allocation2 + $0x98] sm:$0xff]
    %v599 = vld [vmem:[#allocation2 + $0xa0] sm:$0xff]
    %v600 = vld [vmem:[#allocation2 + $0xa8] sm:$0xff]
    %v601 = vld [vmem:[#allocation2 + $0xb0] sm:$0xff]
    %v602 = vld [vmem:[#allocation2 + $0xb8] sm:$0xff]
    %v603 = vld [vmem:[#allocation2 + $0xc0] sm:$0xff]
    %v604 = vld [vmem:[#allocation2 + $0xc8] sm:$0xff]
    %v605 = vld [vmem:[#allocation2 + $0xd0] sm:$0xff]
    %v606 = vld [vmem:[#allocation2 + $0xd8] sm:$0xff]
    %v607 = vld [vmem:[#allocation2 + $0xe0] sm:$0xff]
    %v608 = vld [vmem:[#allocation2 + $0xe8] sm:$0xff]
    %v609 = vld [vmem:[#allocation2 + $0xf0] sm:$0xff]
    %v610 = vld [vmem:[#allocation2 + $0xf8] sm:$0xff]
    %v611 = vld [vmem:[#allocation2 + $0x100] sm:$0xff]
    %v612 = vld [vmem:[#allocation2 + $0x108] sm:$0xff]
    %v613 = vld [vmem:[#allocation2 + $0x110] sm:$0xff]
    %v614 = vld [vmem:[#allocation2 + $0x118] sm:$0xff]
    %v615 = vld [vmem:[#allocation2 + $0x120] sm:$0xff]
    %v616 = vld [vmem:[#allocation2 + $0x128] sm:$0xff]
    %v617 = vld [vmem:[#allocation2 + $0x130] sm:$0xff]
    %v618 = vld [vmem:[#allocation2 + $0x138] sm:$0xff]
    %v619 = vld [vmem:[#allocation2 + $0x140] sm:$0xff]
    %v620 = vld [vmem:[#allocation2 + $0x148] sm:$0xff]
    %v621 = vld [vmem:[#allocation2 + $0x150] sm:$0xff]
    %v622 = vld [vmem:[#allocation2 + $0x158] sm:$0xff]
    %v623 = vld [vmem:[#allocation2 + $0x160] sm:$0xff]
    %v624 = vld [vmem:[#allocation2 + $0x168] sm:$0xff]
    %v625 = vld [vmem:[#allocation2 + $0x170] sm:$0xff]
    %v626 = vld [vmem:[#allocation2 + $0x178] sm:$0xff]
    %v627 = vld [vmem:[#allocation2 + $0x180] sm:$0xff]
    %v628 = vld [vmem:[#allocation2 + $0x188] sm:$0xff]
    %v629 = vld [vmem:[#allocation2 + $0x190] sm:$0xff]
    %v630 = vld [vmem:[#allocation2 + $0x198] sm:$0xff]
    %v631 = vld [vmem:[#allocation2 + $0x1a0] sm:$0xff]
    %v632 = vld [vmem:[#allocation2 + $0x1a8] sm:$0xff]
    %v633 = vld [vmem:[#allocation2 + $0x1b0] sm:$0xff]
    %v634 = vld [vmem:[#allocation2 + $0x1b8] sm:$0xff]
    %v635 = vld [vmem:[#allocation2 + $0x1c0] sm:$0xff]
    %v636 = vld [vmem:[#allocation2 + $0x1c8] sm:$0xff]
    %v637 = vld [vmem:[#allocation2 + $0x1d0] sm:$0xff]
    %v638 = vld [vmem:[#allocation2 + $0x1d8] sm:$0xff]
    %v639 = vld [vmem:[#allocation2 + $0x1e0] sm:$0xff]
    %v640 = vld [vmem:[#allocation2 + $0x1e8] sm:$0xff]
    %v641 = vld [vmem:[#allocation2 + $0x1f0] sm:$0xff]
    %v642 = vld [vmem:[#allocation2 + $0x1f8] sm:$0xff]
    %v643 = vld [vmem:[#allocation16] sm:$0xf]
    %v644 = vpack.c.bf16 %v573, %v573
    %v645 = vpack.c.bf16 %v574, %v574
    %v647 = vperm.slane %v643, 0
    %v648 = vperm.slane %v643, 1
    %v649 = vperm.slane %v643, 2
    %v650 = vperm.slane %v643, 3
    %v719 = vunpack.c.l.b16 %v579
    %v720 = vunpack.c.h.b16 %v579
    %v721 = vunpack.c.l.b16 %v580
    %v722 = vunpack.c.h.b16 %v580
    %v723 = vunpack.c.l.b16 %v581
    %v724 = vunpack.c.h.b16 %v581
    %v725 = vunpack.c.l.b16 %v582
    %v726 = vunpack.c.h.b16 %v582
    %v727 = vunpack.c.l.b16 %v583
    %v728 = vunpack.c.h.b16 %v583
    %v729 = vunpack.c.l.b16 %v584
    %v730 = vunpack.c.h.b16 %v584
    %v731 = vunpack.c.l.b16 %v585
    %v732 = vunpack.c.h.b16 %v585
    %v733 = vunpack.c.l.b16 %v586
    %v734 = vunpack.c.h.b16 %v586
    %v735 = vunpack.c.l.b16 %v587
    %v736 = vunpack.c.h.b16 %v587
    %v737 = vunpack.c.l.b16 %v588
    %v738 = vunpack.c.h.b16 %v588
    %v739 = vunpack.c.l.b16 %v589
    %v740 = vunpack.c.h.b16 %v589
    %v741 = vunpack.c.l.b16 %v590
    %v742 = vunpack.c.h.b16 %v590
    %v743 = vunpack.c.l.b16 %v591
    %v744 = vunpack.c.h.b16 %v591
    %v745 = vunpack.c.l.b16 %v592
    %v746 = vunpack.c.h.b16 %v592
    %v747 = vunpack.c.l.b16 %v593
    %v748 = vunpack.c.h.b16 %v593
    %v749 = vunpack.c.l.b16 %v594
    %v750 = vunpack.c.h.b16 %v594
    %v751 = vunpack.c.l.b16 %v595
    %v752 = vunpack.c.h.b16 %v595
    %v753 = vunpack.c.l.b16 %v596
    %v754 = vunpack.c.h.b16 %v596
    %v755 = vunpack.c.l.b16 %v597
    %v756 = vunpack.c.h.b16 %v597
    %v757 = vunpack.c.l.b16 %v598
    %v758 = vunpack.c.h.b16 %v598
    %v759 = vunpack.c.l.b16 %v599
    %v760 = vunpack.c.h.b16 %v599
    %v761 = vunpack.c.l.b16 %v600
    %v762 = vunpack.c.h.b16 %v600
    %v763 = vunpack.c.l.b16 %v601
    %v764 = vunpack.c.h.b16 %v601
    %v765 = vunpack.c.l.b16 %v602
    %v766 = vunpack.c.h.b16 %v602
    %v767 = vunpack.c.l.b16 %v603
    %v768 = vunpack.c.h.b16 %v603
    %v769 = vunpack.c.l.b16 %v604
    %v770 = vunpack.c.h.b16 %v604
    %v771 = vunpack.c.l.b16 %v605
    %v772 = vunpack.c.h.b16 %v605
    %v773 = vunpack.c.l.b16 %v606
    %v774 = vunpack.c.h.b16 %v606
    %v775 = vunpack.c.l.b16 %v607
    %v776 = vunpack.c.h.b16 %v607
    %v777 = vunpack.c.l.b16 %v608
    %v778 = vunpack.c.h.b16 %v608
    %v779 = vunpack.c.l.b16 %v609
    %v780 = vunpack.c.h.b16 %v609
    %v781 = vunpack.c.l.b16 %v610
    %v782 = vunpack.c.h.b16 %v610
    %v783 = vunpack.c.l.b16 %v611
    %v784 = vunpack.c.h.b16 %v611
    %v785 = vunpack.c.l.b16 %v612
    %v786 = vunpack.c.h.b16 %v612
    %v787 = vunpack.c.l.b16 %v613
    %v788 = vunpack.c.h.b16 %v613
    %v789 = vunpack.c.l.b16 %v614
    %v790 = vunpack.c.h.b16 %v614
    %v791 = vunpack.c.l.b16 %v615
    %v792 = vunpack.c.h.b16 %v615
    %v793 = vunpack.c.l.b16 %v616
    %v794 = vunpack.c.h.b16 %v616
    %v795 = vunpack.c.l.b16 %v617
    %v796 = vunpack.c.h.b16 %v617
    %v797 = vunpack.c.l.b16 %v618
    %v798 = vunpack.c.h.b16 %v618
    %v799 = vunpack.c.l.b16 %v619
    %v800 = vunpack.c.h.b16 %v619
    %v801 = vunpack.c.l.b16 %v620
    %v802 = vunpack.c.h.b16 %v620
    %v803 = vunpack.c.l.b16 %v621
    %v804 = vunpack.c.h.b16 %v621
    %v805 = vunpack.c.l.b16 %v622
    %v806 = vunpack.c.h.b16 %v622
    %v807 = vunpack.c.l.b16 %v623
    %v808 = vunpack.c.h.b16 %v623
    %v809 = vunpack.c.l.b16 %v624
    %v810 = vunpack.c.h.b16 %v624
    %v811 = vunpack.c.l.b16 %v625
    %v812 = vunpack.c.h.b16 %v625
    %v813 = vunpack.c.l.b16 %v626
    %v814 = vunpack.c.h.b16 %v626
    %v815 = vunpack.c.l.b16 %v627
    %v816 = vunpack.c.h.b16 %v627
    %v817 = vunpack.c.l.b16 %v628
    %v818 = vunpack.c.h.b16 %v628
    %v819 = vunpack.c.l.b16 %v629
    %v820 = vunpack.c.h.b16 %v629
    %v821 = vunpack.c.l.b16 %v630
    %v822 = vunpack.c.h.b16 %v630
    %v823 = vunpack.c.l.b16 %v631
    %v824 = vunpack.c.h.b16 %v631
    %v825 = vunpack.c.l.b16 %v632
    %v826 = vunpack.c.h.b16 %v632
    %v827 = vunpack.c.l.b16 %v633
    %v828 = vunpack.c.h.b16 %v633
    %v829 = vunpack.c.l.b16 %v634
    %v830 = vunpack.c.h.b16 %v634
    %v831 = vunpack.c.l.b16 %v635
    %v832 = vunpack.c.h.b16 %v635
    %v833 = vunpack.c.l.b16 %v636
    %v834 = vunpack.c.h.b16 %v636
    %v835 = vunpack.c.l.b16 %v637
    %v836 = vunpack.c.h.b16 %v637
    %v837 = vunpack.c.l.b16 %v638
    %v838 = vunpack.c.h.b16 %v638
    %v839 = vunpack.c.l.b16 %v639
    %v840 = vunpack.c.h.b16 %v639
    %v841 = vunpack.c.l.b16 %v640
    %v842 = vunpack.c.h.b16 %v640
    %v843 = vunpack.c.l.b16 %v641
    %v844 = vunpack.c.h.b16 %v641
    %v845 = vunpack.c.l.b16 %v642
    %v846 = vunpack.c.h.b16 %v642
    %v847 = vpack.c.b16 %v723, %v719
    %v848 = vpack.c.b16 %v724, %v720
    %v849 = vpack.c.b16 %v725, %v721
    %v850 = vpack.c.b16 %v726, %v722
    %v851 = vpack.c.b16 %v731, %v727
    %v852 = vpack.c.b16 %v732, %v728
    %v853 = vpack.c.b16 %v733, %v729
    %v854 = vpack.c.b16 %v734, %v730
    %v855 = vpack.c.b16 %v739, %v735
    %v856 = vpack.c.b16 %v740, %v736
    %v857 = vpack.c.b16 %v741, %v737
    %v858 = vpack.c.b16 %v742, %v738
    %v859 = vpack.c.b16 %v747, %v743
    %v860 = vpack.c.b16 %v748, %v744
    %v861 = vpack.c.b16 %v749, %v745
    %v862 = vpack.c.b16 %v750, %v746
    %v863 = vpack.c.b16 %v755, %v751
    %v864 = vpack.c.b16 %v756, %v752
    %v865 = vpack.c.b16 %v757, %v753
    %v866 = vpack.c.b16 %v758, %v754
    %v867 = vpack.c.b16 %v763, %v759
    %v868 = vpack.c.b16 %v764, %v760
    %v869 = vpack.c.b16 %v765, %v761
    %v870 = vpack.c.b16 %v766, %v762
    %v871 = vpack.c.b16 %v771, %v767
    %v872 = vpack.c.b16 %v772, %v768
    %v873 = vpack.c.b16 %v773, %v769
    %v874 = vpack.c.b16 %v774, %v770
    %v875 = vpack.c.b16 %v779, %v775
    %v876 = vpack.c.b16 %v780, %v776
    %v877 = vpack.c.b16 %v781, %v777
    %v878 = vpack.c.b16 %v782, %v778
    %v879 = vpack.c.b16 %v787, %v783
    %v880 = vpack.c.b16 %v788, %v784
    %v881 = vpack.c.b16 %v789, %v785
    %v882 = vpack.c.b16 %v790, %v786
    %v883 = vpack.c.b16 %v795, %v791
    %v884 = vpack.c.b16 %v796, %v792
    %v885 = vpack.c.b16 %v797, %v793
    %v886 = vpack.c.b16 %v798, %v794
    %v887 = vpack.c.b16 %v803, %v799
    %v888 = vpack.c.b16 %v804, %v800
    %v889 = vpack.c.b16 %v805, %v801
    %v890 = vpack.c.b16 %v806, %v802
    %v891 = vpack.c.b16 %v811, %v807
    %v892 = vpack.c.b16 %v812, %v808
    %v893 = vpack.c.b16 %v813, %v809
    %v894 = vpack.c.b16 %v814, %v810
    %v895 = vpack.c.b16 %v819, %v815
    %v896 = vpack.c.b16 %v820, %v816
    %v897 = vpack.c.b16 %v821, %v817
    %v898 = vpack.c.b16 %v822, %v818
    %v899 = vpack.c.b16 %v827, %v823
    %v900 = vpack.c.b16 %v828, %v824
    %v901 = vpack.c.b16 %v829, %v825
    %v902 = vpack.c.b16 %v830, %v826
    %v903 = vpack.c.b16 %v835, %v831
    %v904 = vpack.c.b16 %v836, %v832
    %v905 = vpack.c.b16 %v837, %v833
    %v906 = vpack.c.b16 %v838, %v834
    %v907 = vpack.c.b16 %v843, %v839
    %v908 = vpack.c.b16 %v844, %v840
    %v909 = vpack.c.b16 %v845, %v841
    %v910 = vpack.c.b16 %v846, %v842
    %975 = vmatpush.bf16.msra.mxu0 %v875
    %976 = vmatpush.bf16.msra.mxu0 %v871
    %977 = vmatpush.bf16.msra.mxu0 %v867
    %978 = vmatpush.bf16.msra.mxu0 %v863
    %979 = vmatpush.bf16.msra.mxu0 %v859
    %980 = vmatpush.bf16.msra.mxu0 %v855
    %981 = vmatpush.bf16.msra.mxu0 %v851
    %982 = vmatpush.bf16.msra.mxu0 %v847
    %983 = vmatmul.bf16.gmra.mxu0 %v644
    %v984 = vpop.f32.mrf.mxu0
    %v985 = vadd.f32 %v647, %v984
    %v986 = vpop.f32.mrf.mxu0
    %987 = vdwg.mxu0
    %988 = vmatpush.bf16.msra.mxu0 %v907
    %989 = vmatpush.bf16.msra.mxu0 %v903
    %990 = vmatpush.bf16.msra.mxu0 %v899
    %991 = vmatpush.bf16.msra.mxu0 %v895
    %992 = vmatpush.bf16.msra.mxu0 %v891
    %993 = vmatpush.bf16.msra.mxu0 %v887
    %994 = vmatpush.bf16.msra.mxu0 %v883
    %995 = vmatpush.bf16.msra.mxu0 %v879
    %996 = vmatmul.bf16.gmra.mxu0 %v645
    %v997 = vpop.f32.mrf.mxu0
    %v998 = vadd.f32 %v985, %v997
    %v999 = vpop.f32.mrf.mxu0
    %1000 = vdwg.mxu0
    %1001 = vmatpush.bf16.msra.mxu0 %v876
    %1002 = vmatpush.bf16.msra.mxu0 %v872
    %1003 = vmatpush.bf16.msra.mxu0 %v868
    %1004 = vmatpush.bf16.msra.mxu0 %v864
    %1005 = vmatpush.bf16.msra.mxu0 %v860
    %1006 = vmatpush.bf16.msra.mxu0 %v856
    %1007 = vmatpush.bf16.msra.mxu0 %v852
    %1008 = vmatpush.bf16.msra.mxu0 %v848
    %1009 = vmatmul.bf16.gmra.mxu0 %v644
    %v1010 = vpop.f32.mrf.mxu0
    %v1011 = vadd.f32 %v648, %v1010
    %v1012 = vpop.f32.mrf.mxu0
    %1013 = vdwg.mxu0
    %1014 = vmatpush.bf16.msra.mxu0 %v908
    %1015 = vmatpush.bf16.msra.mxu0 %v904
    %1016 = vmatpush.bf16.msra.mxu0 %v900
    %1017 = vmatpush.bf16.msra.mxu0 %v896
    %1018 = vmatpush.bf16.msra.mxu0 %v892
    %1019 = vmatpush.bf16.msra.mxu0 %v888
    %1020 = vmatpush.bf16.msra.mxu0 %v884
    %1021 = vmatpush.bf16.msra.mxu0 %v880
    %1022 = vmatmul.bf16.gmra.mxu0 %v645
    %v1023 = vpop.f32.mrf.mxu0
    %v1024 = vadd.f32 %v1011, %v1023
    %v1025 = vpop.f32.mrf.mxu0
    %1026 = vdwg.mxu0
    %1027 = vmatpush.bf16.msra.mxu0 %v877
    %1028 = vmatpush.bf16.msra.mxu0 %v873
    %1029 = vmatpush.bf16.msra.mxu0 %v869
    %1030 = vmatpush.bf16.msra.mxu0 %v865
    %1031 = vmatpush.bf16.msra.mxu0 %v861
    %1032 = vmatpush.bf16.msra.mxu0 %v857
    %1033 = vmatpush.bf16.msra.mxu0 %v853
    %1034 = vmatpush.bf16.msra.mxu0 %v849
    %1035 = vmatmul.bf16.gmra.mxu0 %v644
    %v1036 = vpop.f32.mrf.mxu0
    %v1037 = vadd.f32 %v649, %v1036
    %v1038 = vpop.f32.mrf.mxu0
    %1039 = vdwg.mxu0
    %1040 = vmatpush.bf16.msra.mxu0 %v909
    %1041 = vmatpush.bf16.msra.mxu0 %v905
    %1042 = vmatpush.bf16.msra.mxu0 %v901
    %1043 = vmatpush.bf16.msra.mxu0 %v897
    %1044 = vmatpush.bf16.msra.mxu0 %v893
    %1045 = vmatpush.bf16.msra.mxu0 %v889
    %1046 = vmatpush.bf16.msra.mxu0 %v885
    %1047 = vmatpush.bf16.msra.mxu0 %v881
    %1048 = vmatmul.bf16.gmra.mxu0 %v645
    %v1049 = vpop.f32.mrf.mxu0
    %v1050 = vadd.f32 %v1037, %v1049
    %v1051 = vpop.f32.mrf.mxu0
    %1052 = vdwg.mxu0
    %1053 = vmatpush.bf16.msra.mxu0 %v878
    %1054 = vmatpush.bf16.msra.mxu0 %v874
    %1055 = vmatpush.bf16.msra.mxu0 %v870
    %1056 = vmatpush.bf16.msra.mxu0 %v866
    %1057 = vmatpush.bf16.msra.mxu0 %v862
    %1058 = vmatpush.bf16.msra.mxu0 %v858
    %1059 = vmatpush.bf16.msra.mxu0 %v854
    %1060 = vmatpush.bf16.msra.mxu0 %v850
    %1061 = vmatmul.bf16.gmra.mxu0 %v644
    %v1062 = vpop.f32.mrf.mxu0
    %v1063 = vadd.f32 %v650, %v1062
    %v1064 = vpop.f32.mrf.mxu0
    %1065 = vdwg.mxu0
    %1066 = vmatpush.bf16.msra.mxu0 %v910
    %1067 = vmatpush.bf16.msra.mxu0 %v906
    %1068 = vmatpush.bf16.msra.mxu0 %v902
    %1069 = vmatpush.bf16.msra.mxu0 %v898
    %1070 = vmatpush.bf16.msra.mxu0 %v894
    %1071 = vmatpush.bf16.msra.mxu0 %v890
    %1072 = vmatpush.bf16.msra.mxu0 %v886
    %1073 = vmatpush.bf16.msra.mxu0 %v882
    %1074 = vmatmul.bf16.gmra.mxu0 %v645
    %v1075 = vpop.f32.mrf.mxu0
    %v1076 = vadd.f32 %v1063, %v1075
    %v1077 = vpop.f32.mrf.mxu0
    %1078 = vdwg.mxu0
    %v1079 = vld [vmem:[#allocation17] sm:$0xf]
    %v1080 = vld [vmem:[#allocation19] sm:$0xf]
    %v1081 = vsel %vm492, %v998, 0.0
    %v1082 = vsel %vm492, %v1024, 0.0
    %v1083 = vsel %vm492, %v1050, 0.0
    %v1084 = vsel %vm492, %v1076, 0.0
    %v1085 = vrot.slane %v1081, 4
    %v1086 = vadd.f32 %v1081, %v1085
    %v1087 = vrot.slane %v1086, 2
    %v1088 = vadd.f32 %v1086, %v1087
    %v1089 = vrot.slane %v1088, 1
    %v1090 = vadd.f32 %v1088, %v1089
    %v1091 = vrot.slane %v1082, 4
    %v1092 = vadd.f32 %v1082, %v1091
    %v1093 = vrot.slane %v1092, 2
    %v1094 = vadd.f32 %v1092, %v1093
    %v1095 = vrot.slane %v1094, 1
    %v1096 = vadd.f32 %v1094, %v1095
    %v1097 = vrot.slane %v1083, 4
    %v1098 = vadd.f32 %v1083, %v1097
    %v1099 = vrot.slane %v1098, 2
    %v1100 = vadd.f32 %v1098, %v1099
    %v1101 = vrot.slane %v1100, 1
    %v1102 = vadd.f32 %v1100, %v1101
    %v1103 = vrot.slane %v1084, 4
    %v1104 = vadd.f32 %v1084, %v1103
    %v1105 = vrot.slane %v1104, 2
    %v1106 = vadd.f32 %v1104, %v1105
    %v1107 = vrot.slane %v1106, 1
    %v1108 = vadd.f32 %v1106, %v1107
    %v1109 = vmul.f32 %v1081, %v1081
    %v1110 = vmul.f32 %v1082, %v1082
    %v1111 = vmul.f32 %v1083, %v1083
    %v1112 = vmul.f32 %v1084, %v1084
    %v1113 = vrot.slane %v1109, 4
    %v1114 = vadd.f32 %v1109, %v1113
    %v1115 = vrot.slane %v1114, 2
    %v1116 = vadd.f32 %v1114, %v1115
    %v1117 = vrot.slane %v1116, 1
    %v1118 = vadd.f32 %v1116, %v1117
    %v1119 = vrot.slane %v1110, 4
    %v1120 = vadd.f32 %v1110, %v1119
    %v1121 = vrot.slane %v1120, 2
    %v1122 = vadd.f32 %v1120, %v1121
    %v1123 = vrot.slane %v1122, 1
    %v1124 = vadd.f32 %v1122, %v1123
    %v1125 = vrot.slane %v1111, 4
    %v1126 = vadd.f32 %v1111, %v1125
    %v1127 = vrot.slane %v1126, 2
    %v1128 = vadd.f32 %v1126, %v1127
    %v1129 = vrot.slane %v1128, 1
    %v1130 = vadd.f32 %v1128, %v1129
    %v1131 = vrot.slane %v1112, 4
    %v1132 = vadd.f32 %v1112, %v1131
    %v1133 = vrot.slane %v1132, 2
    %v1134 = vadd.f32 %v1132, %v1133
    %v1135 = vrot.slane %v1134, 1
    %v1136 = vadd.f32 %v1134, %v1135
    %v1137 = vmul.f32 %v1090, 0.25
    %v1138 = vmul.f32 %v1096, 0.25
    %v1139 = vmul.f32 %v1102, 0.25
    %v1140 = vmul.f32 %v1108, 0.25
    %v1141 = vmul.f32 %v1118, 0.25
    %v1142 = vmul.f32 %v1124, 0.25
    %v1143 = vmul.f32 %v1130, 0.25
    %v1144 = vmul.f32 %v1136, 0.25
    %v1145 = vmul.f32 %v1137, %v1137
    %v1146 = vmul.f32 %v1138, %v1138
    %v1147 = vmul.f32 %v1139, %v1139
    %v1148 = vmul.f32 %v1140, %v1140
    %v1149 = vsub.f32 %v1141, %v1145
    %v1150 = vsub.f32 %v1142, %v1146
    %v1151 = vsub.f32 %v1143, %v1147
    %v1152 = vsub.f32 %v1144, %v1148
    %v1153 = vadd.f32 %v1149, 0.8
    %v1154 = vadd.f32 %v1150, 0.8
    %v1155 = vadd.f32 %v1151, 0.8
    %v1156 = vadd.f32 %v1152, 0.8
    %v1157 = vrsqrt.pop %v1153
    %v1158 = vmul.f32 %v1157, %v1153
    %v1159 = vmul.f32 %v1158, %v1157
    %v1160 = vmul.f32 0.5, %v1159
    %v1161 = vsub.f32 1.5, %v1160
    %v1162 = vmul.f32 %v1157, %v1161
    %vm1163 = vweird.f32 %v1153
    %vm1164 = vweird.f32 %v1157
    %vm1165 = vmor %vm1163, %vm1164
    %v1166 = vsel %vm1165, %v1157, %v1162
    %v1167 = vrsqrt.pop %v1154
    %v1168 = vmul.f32 %v1167, %v1154
    %v1169 = vmul.f32 %v1168, %v1167
    %v1170 = vmul.f32 0.5, %v1169
    %v1171 = vsub.f32 1.5, %v1170
    %v1172 = vmul.f32 %v1167, %v1171
    %vm1173 = vweird.f32 %v1154
    %vm1174 = vweird.f32 %v1167
    %vm1175 = vmor %vm1173, %vm1174
    %v1176 = vsel %vm1175, %v1167, %v1172
    %v1177 = vrsqrt.pop %v1155
    %v1178 = vmul.f32 %v1177, %v1155
    %v1179 = vmul.f32 %v1178, %v1177
    %v1180 = vmul.f32 0.5, %v1179
    %v1181 = vsub.f32 1.5, %v1180
    %v1182 = vmul.f32 %v1177, %v1181
    %vm1183 = vweird.f32 %v1155
    %vm1184 = vweird.f32 %v1177
    %vm1185 = vmor %vm1183, %vm1184
    %v1186 = vsel %vm1185, %v1177, %v1182
    %v1187 = vrsqrt.pop %v1156
    %v1188 = vmul.f32 %v1187, %v1156
    %v1189 = vmul.f32 %v1188, %v1187
    %v1190 = vmul.f32 0.5, %v1189
    %v1191 = vsub.f32 1.5, %v1190
    %v1192 = vmul.f32 %v1187, %v1191
    %vm1193 = vweird.f32 %v1156
    %vm1194 = vweird.f32 %v1187
    %vm1195 = vmor %vm1193, %vm1194
    %v1196 = vsel %vm1195, %v1187, %v1192
    %v1197 = vsub.f32 %v998, %v1137
    %v1198 = vsub.f32 %v1024, %v1138
    %v1199 = vsub.f32 %v1050, %v1139
    %v1200 = vsub.f32 %v1076, %v1140
    %v1201 = vmul.f32 %v1197, %v1166
    %v1202 = vmul.f32 %v1198, %v1176
    %v1203 = vmul.f32 %v1199, %v1186
    %v1204 = vmul.f32 %v1200, %v1196
    %v1206 = vperm.slane %v1079, 0
    %v1207 = vperm.slane %v1079, 1
    %v1208 = vperm.slane %v1079, 2
    %v1209 = vperm.slane %v1079, 3
    %v1214 = vmul.f32 %v1201, %v1206
    %v1215 = vmul.f32 %v1202, %v1207
    %v1216 = vmul.f32 %v1203, %v1208
    %v1217 = vmul.f32 %v1204, %v1209
    %v1219 = vperm.slane %v1080, 0
    %v1220 = vperm.slane %v1080, 1
    %v1221 = vperm.slane %v1080, 2
    %v1222 = vperm.slane %v1080, 3
    %v1227 = vadd.f32 %v1214, %v1219
    %v1228 = vadd.f32 %v1215, %v1220
    %v1229 = vadd.f32 %v1216, %v1221
    %v1230 = vadd.f32 %v1217, %v1222
    %vm1231 = vcmp.gt.f32.partialorder %v1227, 0.0
    %vm1232 = vcmp.gt.f32.partialorder %v1228, 0.0
    %vm1233 = vcmp.gt.f32.partialorder %v1229, 0.0
    %vm1234 = vcmp.gt.f32.partialorder %v1230, 0.0
    %v1235 = vmul.f32 %v1227, 0.2
    %v1236 = vmul.f32 %v1228, 0.2
    %v1237 = vmul.f32 %v1229, 0.2
    %v1238 = vmul.f32 %v1230, 0.2
    %v1239 = vsel %vm1231, %v1227, %v1235
    %v1240 = vsel %vm1232, %v1228, %v1236
    %v1241 = vsel %vm1233, %v1229, %v1237
    %v1242 = vsel %vm1234, %v1230, %v1238
    %s1243 = smul.u32 4, 64
    %s1244 = smul.u32 %s1243, 8
    %s1245 = sshll.u32 %s1244, 4
    %1246 = dma.done %s243, %s1245
    %v1247 = vld [vmem:[#allocation3] sm:$0xff]
    %v1248 = vld [vmem:[#allocation3 + $0x8] sm:$0xff]
    %v1249 = vld [vmem:[#allocation3 + $0x10] sm:$0xff]
    %v1250 = vld [vmem:[#allocation3 + $0x18] sm:$0xff]
    %v1251 = vld [vmem:[#allocation3 + $0x20] sm:$0xff]
    %v1252 = vld [vmem:[#allocation3 + $0x28] sm:$0xff]
    %v1253 = vld [vmem:[#allocation3 + $0x30] sm:$0xff]
    %v1254 = vld [vmem:[#allocation3 + $0x38] sm:$0xff]
    %v1255 = vld [vmem:[#allocation3 + $0x40] sm:$0xff]
    %v1256 = vld [vmem:[#allocation3 + $0x48] sm:$0xff]
    %v1257 = vld [vmem:[#allocation3 + $0x50] sm:$0xff]
    %v1258 = vld [vmem:[#allocation3 + $0x58] sm:$0xff]
    %v1259 = vld [vmem:[#allocation3 + $0x60] sm:$0xff]
    %v1260 = vld [vmem:[#allocation3 + $0x68] sm:$0xff]
    %v1261 = vld [vmem:[#allocation3 + $0x70] sm:$0xff]
    %v1262 = vld [vmem:[#allocation3 + $0x78] sm:$0xff]
    %v1263 = vld [vmem:[#allocation3 + $0x80] sm:$0xff]
    %v1264 = vld [vmem:[#allocation3 + $0x88] sm:$0xff]
    %v1265 = vld [vmem:[#allocation3 + $0x90] sm:$0xff]
    %v1266 = vld [vmem:[#allocation3 + $0x98] sm:$0xff]
    %v1267 = vld [vmem:[#allocation3 + $0xa0] sm:$0xff]
    %v1268 = vld [vmem:[#allocation3 + $0xa8] sm:$0xff]
    %v1269 = vld [vmem:[#allocation3 + $0xb0] sm:$0xff]
    %v1270 = vld [vmem:[#allocation3 + $0xb8] sm:$0xff]
    %v1271 = vld [vmem:[#allocation3 + $0xc0] sm:$0xff]
    %v1272 = vld [vmem:[#allocation3 + $0xc8] sm:$0xff]
    %v1273 = vld [vmem:[#allocation3 + $0xd0] sm:$0xff]
    %v1274 = vld [vmem:[#allocation3 + $0xd8] sm:$0xff]
    %v1275 = vld [vmem:[#allocation3 + $0xe0] sm:$0xff]
    %v1276 = vld [vmem:[#allocation3 + $0xe8] sm:$0xff]
    %v1277 = vld [vmem:[#allocation3 + $0xf0] sm:$0xff]
    %v1278 = vld [vmem:[#allocation3 + $0xf8] sm:$0xff]
    %v1279 = vld [vmem:[#allocation3 + $0x100] sm:$0xff]
    %v1280 = vld [vmem:[#allocation3 + $0x108] sm:$0xff]
    %v1281 = vld [vmem:[#allocation3 + $0x110] sm:$0xff]
    %v1282 = vld [vmem:[#allocation3 + $0x118] sm:$0xff]
    %v1283 = vld [vmem:[#allocation3 + $0x120] sm:$0xff]
    %v1284 = vld [vmem:[#allocation3 + $0x128] sm:$0xff]
    %v1285 = vld [vmem:[#allocation3 + $0x130] sm:$0xff]
    %v1286 = vld [vmem:[#allocation3 + $0x138] sm:$0xff]
    %v1287 = vld [vmem:[#allocation3 + $0x140] sm:$0xff]
    %v1288 = vld [vmem:[#allocation3 + $0x148] sm:$0xff]
    %v1289 = vld [vmem:[#allocation3 + $0x150] sm:$0xff]
    %v1290 = vld [vmem:[#allocation3 + $0x158] sm:$0xff]
    %v1291 = vld [vmem:[#allocation3 + $0x160] sm:$0xff]
    %v1292 = vld [vmem:[#allocation3 + $0x168] sm:$0xff]
    %v1293 = vld [vmem:[#allocation3 + $0x170] sm:$0xff]
    %v1294 = vld [vmem:[#allocation3 + $0x178] sm:$0xff]
    %v1295 = vld [vmem:[#allocation3 + $0x180] sm:$0xff]
    %v1296 = vld [vmem:[#allocation3 + $0x188] sm:$0xff]
    %v1297 = vld [vmem:[#allocation3 + $0x190] sm:$0xff]
    %v1298 = vld [vmem:[#allocation3 + $0x198] sm:$0xff]
    %v1299 = vld [vmem:[#allocation3 + $0x1a0] sm:$0xff]
    %v1300 = vld [vmem:[#allocation3 + $0x1a8] sm:$0xff]
    %v1301 = vld [vmem:[#allocation3 + $0x1b0] sm:$0xff]
    %v1302 = vld [vmem:[#allocation3 + $0x1b8] sm:$0xff]
    %v1303 = vld [vmem:[#allocation3 + $0x1c0] sm:$0xff]
    %v1304 = vld [vmem:[#allocation3 + $0x1c8] sm:$0xff]
    %v1305 = vld [vmem:[#allocation3 + $0x1d0] sm:$0xff]
    %v1306 = vld [vmem:[#allocation3 + $0x1d8] sm:$0xff]
    %v1307 = vld [vmem:[#allocation3 + $0x1e0] sm:$0xff]
    %v1308 = vld [vmem:[#allocation3 + $0x1e8] sm:$0xff]
    %v1309 = vld [vmem:[#allocation3 + $0x1f0] sm:$0xff]
    %v1310 = vld [vmem:[#allocation3 + $0x1f8] sm:$0xff]
    %v1311 = vld [vmem:[#allocation3 + $0x200] sm:$0xff]
    %v1312 = vld [vmem:[#allocation3 + $0x208] sm:$0xff]
    %v1313 = vld [vmem:[#allocation3 + $0x210] sm:$0xff]
    %v1314 = vld [vmem:[#allocation3 + $0x218] sm:$0xff]
    %v1315 = vld [vmem:[#allocation3 + $0x220] sm:$0xff]
    %v1316 = vld [vmem:[#allocation3 + $0x228] sm:$0xff]
    %v1317 = vld [vmem:[#allocation3 + $0x230] sm:$0xff]
    %v1318 = vld [vmem:[#allocation3 + $0x238] sm:$0xff]
    %v1319 = vld [vmem:[#allocation3 + $0x240] sm:$0xff]
    %v1320 = vld [vmem:[#allocation3 + $0x248] sm:$0xff]
    %v1321 = vld [vmem:[#allocation3 + $0x250] sm:$0xff]
    %v1322 = vld [vmem:[#allocation3 + $0x258] sm:$0xff]
    %v1323 = vld [vmem:[#allocation3 + $0x260] sm:$0xff]
    %v1324 = vld [vmem:[#allocation3 + $0x268] sm:$0xff]
    %v1325 = vld [vmem:[#allocation3 + $0x270] sm:$0xff]
    %v1326 = vld [vmem:[#allocation3 + $0x278] sm:$0xff]
    %v1327 = vld [vmem:[#allocation3 + $0x280] sm:$0xff]
    %v1328 = vld [vmem:[#allocation3 + $0x288] sm:$0xff]
    %v1329 = vld [vmem:[#allocation3 + $0x290] sm:$0xff]
    %v1330 = vld [vmem:[#allocation3 + $0x298] sm:$0xff]
    %v1331 = vld [vmem:[#allocation3 + $0x2a0] sm:$0xff]
    %v1332 = vld [vmem:[#allocation3 + $0x2a8] sm:$0xff]
    %v1333 = vld [vmem:[#allocation3 + $0x2b0] sm:$0xff]
    %v1334 = vld [vmem:[#allocation3 + $0x2b8] sm:$0xff]
    %v1335 = vld [vmem:[#allocation3 + $0x2c0] sm:$0xff]
    %v1336 = vld [vmem:[#allocation3 + $0x2c8] sm:$0xff]
    %v1337 = vld [vmem:[#allocation3 + $0x2d0] sm:$0xff]
    %v1338 = vld [vmem:[#allocation3 + $0x2d8] sm:$0xff]
    %v1339 = vld [vmem:[#allocation3 + $0x2e0] sm:$0xff]
    %v1340 = vld [vmem:[#allocation3 + $0x2e8] sm:$0xff]
    %v1341 = vld [vmem:[#allocation3 + $0x2f0] sm:$0xff]
    %v1342 = vld [vmem:[#allocation3 + $0x2f8] sm:$0xff]
    %v1343 = vld [vmem:[#allocation3 + $0x300] sm:$0xff]
    %v1344 = vld [vmem:[#allocation3 + $0x308] sm:$0xff]
    %v1345 = vld [vmem:[#allocation3 + $0x310] sm:$0xff]
    %v1346 = vld [vmem:[#allocation3 + $0x318] sm:$0xff]
    %v1347 = vld [vmem:[#allocation3 + $0x320] sm:$0xff]
    %v1348 = vld [vmem:[#allocation3 + $0x328] sm:$0xff]
    %v1349 = vld [vmem:[#allocation3 + $0x330] sm:$0xff]
    %v1350 = vld [vmem:[#allocation3 + $0x338] sm:$0xff]
    %v1351 = vld [vmem:[#allocation3 + $0x340] sm:$0xff]
    %v1352 = vld [vmem:[#allocation3 + $0x348] sm:$0xff]
    %v1353 = vld [vmem:[#allocation3 + $0x350] sm:$0xff]
    %v1354 = vld [vmem:[#allocation3 + $0x358] sm:$0xff]
    %v1355 = vld [vmem:[#allocation3 + $0x360] sm:$0xff]
    %v1356 = vld [vmem:[#allocation3 + $0x368] sm:$0xff]
    %v1357 = vld [vmem:[#allocation3 + $0x370] sm:$0xff]
    %v1358 = vld [vmem:[#allocation3 + $0x378] sm:$0xff]
    %v1359 = vld [vmem:[#allocation3 + $0x380] sm:$0xff]
    %v1360 = vld [vmem:[#allocation3 + $0x388] sm:$0xff]
    %v1361 = vld [vmem:[#allocation3 + $0x390] sm:$0xff]
    %v1362 = vld [vmem:[#allocation3 + $0x398] sm:$0xff]
    %v1363 = vld [vmem:[#allocation3 + $0x3a0] sm:$0xff]
    %v1364 = vld [vmem:[#allocation3 + $0x3a8] sm:$0xff]
    %v1365 = vld [vmem:[#allocation3 + $0x3b0] sm:$0xff]
    %v1366 = vld [vmem:[#allocation3 + $0x3b8] sm:$0xff]
    %v1367 = vld [vmem:[#allocation3 + $0x3c0] sm:$0xff]
    %v1368 = vld [vmem:[#allocation3 + $0x3c8] sm:$0xff]
    %v1369 = vld [vmem:[#allocation3 + $0x3d0] sm:$0xff]
    %v1370 = vld [vmem:[#allocation3 + $0x3d8] sm:$0xff]
    %v1371 = vld [vmem:[#allocation3 + $0x3e0] sm:$0xff]
    %v1372 = vld [vmem:[#allocation3 + $0x3e8] sm:$0xff]
    %v1373 = vld [vmem:[#allocation3 + $0x3f0] sm:$0xff]
    %v1374 = vld [vmem:[#allocation3 + $0x3f8] sm:$0xff]
    %v1375 = vld [vmem:[#allocation3 + $0x400] sm:$0xff]
    %v1376 = vld [vmem:[#allocation3 + $0x408] sm:$0xff]
    %v1377 = vld [vmem:[#allocation3 + $0x410] sm:$0xff]
    %v1378 = vld [vmem:[#allocation3 + $0x418] sm:$0xff]
    %v1379 = vld [vmem:[#allocation3 + $0x420] sm:$0xff]
    %v1380 = vld [vmem:[#allocation3 + $0x428] sm:$0xff]
    %v1381 = vld [vmem:[#allocation3 + $0x430] sm:$0xff]
    %v1382 = vld [vmem:[#allocation3 + $0x438] sm:$0xff]
    %v1383 = vld [vmem:[#allocation3 + $0x440] sm:$0xff]
    %v1384 = vld [vmem:[#allocation3 + $0x448] sm:$0xff]
    %v1385 = vld [vmem:[#allocation3 + $0x450] sm:$0xff]
    %v1386 = vld [vmem:[#allocation3 + $0x458] sm:$0xff]
    %v1387 = vld [vmem:[#allocation3 + $0x460] sm:$0xff]
    %v1388 = vld [vmem:[#allocation3 + $0x468] sm:$0xff]
    %v1389 = vld [vmem:[#allocation3 + $0x470] sm:$0xff]
    %v1390 = vld [vmem:[#allocation3 + $0x478] sm:$0xff]
    %v1391 = vld [vmem:[#allocation3 + $0x480] sm:$0xff]
    %v1392 = vld [vmem:[#allocation3 + $0x488] sm:$0xff]
    %v1393 = vld [vmem:[#allocation3 + $0x490] sm:$0xff]
    %v1394 = vld [vmem:[#allocation3 + $0x498] sm:$0xff]
    %v1395 = vld [vmem:[#allocation3 + $0x4a0] sm:$0xff]
    %v1396 = vld [vmem:[#allocation3 + $0x4a8] sm:$0xff]
    %v1397 = vld [vmem:[#allocation3 + $0x4b0] sm:$0xff]
    %v1398 = vld [vmem:[#allocation3 + $0x4b8] sm:$0xff]
    %v1399 = vld [vmem:[#allocation3 + $0x4c0] sm:$0xff]
    %v1400 = vld [vmem:[#allocation3 + $0x4c8] sm:$0xff]
    %v1401 = vld [vmem:[#allocation3 + $0x4d0] sm:$0xff]
    %v1402 = vld [vmem:[#allocation3 + $0x4d8] sm:$0xff]
    %v1403 = vld [vmem:[#allocation3 + $0x4e0] sm:$0xff]
    %v1404 = vld [vmem:[#allocation3 + $0x4e8] sm:$0xff]
    %v1405 = vld [vmem:[#allocation3 + $0x4f0] sm:$0xff]
    %v1406 = vld [vmem:[#allocation3 + $0x4f8] sm:$0xff]
    %v1407 = vld [vmem:[#allocation3 + $0x500] sm:$0xff]
    %v1408 = vld [vmem:[#allocation3 + $0x508] sm:$0xff]
    %v1409 = vld [vmem:[#allocation3 + $0x510] sm:$0xff]
    %v1410 = vld [vmem:[#allocation3 + $0x518] sm:$0xff]
    %v1411 = vld [vmem:[#allocation3 + $0x520] sm:$0xff]
    %v1412 = vld [vmem:[#allocation3 + $0x528] sm:$0xff]
    %v1413 = vld [vmem:[#allocation3 + $0x530] sm:$0xff]
    %v1414 = vld [vmem:[#allocation3 + $0x538] sm:$0xff]
    %v1415 = vld [vmem:[#allocation3 + $0x540] sm:$0xff]
    %v1416 = vld [vmem:[#allocation3 + $0x548] sm:$0xff]
    %v1417 = vld [vmem:[#allocation3 + $0x550] sm:$0xff]
    %v1418 = vld [vmem:[#allocation3 + $0x558] sm:$0xff]
    %v1419 = vld [vmem:[#allocation3 + $0x560] sm:$0xff]
    %v1420 = vld [vmem:[#allocation3 + $0x568] sm:$0xff]
    %v1421 = vld [vmem:[#allocation3 + $0x570] sm:$0xff]
    %v1422 = vld [vmem:[#allocation3 + $0x578] sm:$0xff]
    %v1423 = vld [vmem:[#allocation3 + $0x580] sm:$0xff]
    %v1424 = vld [vmem:[#allocation3 + $0x588] sm:$0xff]
    %v1425 = vld [vmem:[#allocation3 + $0x590] sm:$0xff]
    %v1426 = vld [vmem:[#allocation3 + $0x598] sm:$0xff]
    %v1427 = vld [vmem:[#allocation3 + $0x5a0] sm:$0xff]
    %v1428 = vld [vmem:[#allocation3 + $0x5a8] sm:$0xff]
    %v1429 = vld [vmem:[#allocation3 + $0x5b0] sm:$0xff]
    %v1430 = vld [vmem:[#allocation3 + $0x5b8] sm:$0xff]
    %v1431 = vld [vmem:[#allocation3 + $0x5c0] sm:$0xff]
    %v1432 = vld [vmem:[#allocation3 + $0x5c8] sm:$0xff]
    %v1433 = vld [vmem:[#allocation3 + $0x5d0] sm:$0xff]
    %v1434 = vld [vmem:[#allocation3 + $0x5d8] sm:$0xff]
    %v1435 = vld [vmem:[#allocation3 + $0x5e0] sm:$0xff]
    %v1436 = vld [vmem:[#allocation3 + $0x5e8] sm:$0xff]
    %v1437 = vld [vmem:[#allocation3 + $0x5f0] sm:$0xff]
    %v1438 = vld [vmem:[#allocation3 + $0x5f8] sm:$0xff]
    %v1439 = vld [vmem:[#allocation3 + $0x600] sm:$0xff]
    %v1440 = vld [vmem:[#allocation3 + $0x608] sm:$0xff]
    %v1441 = vld [vmem:[#allocation3 + $0x610] sm:$0xff]
    %v1442 = vld [vmem:[#allocation3 + $0x618] sm:$0xff]
    %v1443 = vld [vmem:[#allocation3 + $0x620] sm:$0xff]
    %v1444 = vld [vmem:[#allocation3 + $0x628] sm:$0xff]
    %v1445 = vld [vmem:[#allocation3 + $0x630] sm:$0xff]
    %v1446 = vld [vmem:[#allocation3 + $0x638] sm:$0xff]
    %v1447 = vld [vmem:[#allocation3 + $0x640] sm:$0xff]
    %v1448 = vld [vmem:[#allocation3 + $0x648] sm:$0xff]
    %v1449 = vld [vmem:[#allocation3 + $0x650] sm:$0xff]
    %v1450 = vld [vmem:[#allocation3 + $0x658] sm:$0xff]
    %v1451 = vld [vmem:[#allocation3 + $0x660] sm:$0xff]
    %v1452 = vld [vmem:[#allocation3 + $0x668] sm:$0xff]
    %v1453 = vld [vmem:[#allocation3 + $0x670] sm:$0xff]
    %v1454 = vld [vmem:[#allocation3 + $0x678] sm:$0xff]
    %v1455 = vld [vmem:[#allocation3 + $0x680] sm:$0xff]
    %v1456 = vld [vmem:[#allocation3 + $0x688] sm:$0xff]
    %v1457 = vld [vmem:[#allocation3 + $0x690] sm:$0xff]
    %v1458 = vld [vmem:[#allocation3 + $0x698] sm:$0xff]
    %v1459 = vld [vmem:[#allocation3 + $0x6a0] sm:$0xff]
    %v1460 = vld [vmem:[#allocation3 + $0x6a8] sm:$0xff]
    %v1461 = vld [vmem:[#allocation3 + $0x6b0] sm:$0xff]
    %v1462 = vld [vmem:[#allocation3 + $0x6b8] sm:$0xff]
    %v1463 = vld [vmem:[#allocation3 + $0x6c0] sm:$0xff]
    %v1464 = vld [vmem:[#allocation3 + $0x6c8] sm:$0xff]
    %v1465 = vld [vmem:[#allocation3 + $0x6d0] sm:$0xff]
    %v1466 = vld [vmem:[#allocation3 + $0x6d8] sm:$0xff]
    %v1467 = vld [vmem:[#allocation3 + $0x6e0] sm:$0xff]
    %v1468 = vld [vmem:[#allocation3 + $0x6e8] sm:$0xff]
    %v1469 = vld [vmem:[#allocation3 + $0x6f0] sm:$0xff]
    %v1470 = vld [vmem:[#allocation3 + $0x6f8] sm:$0xff]
    %v1471 = vld [vmem:[#allocation3 + $0x700] sm:$0xff]
    %v1472 = vld [vmem:[#allocation3 + $0x708] sm:$0xff]
    %v1473 = vld [vmem:[#allocation3 + $0x710] sm:$0xff]
    %v1474 = vld [vmem:[#allocation3 + $0x718] sm:$0xff]
    %v1475 = vld [vmem:[#allocation3 + $0x720] sm:$0xff]
    %v1476 = vld [vmem:[#allocation3 + $0x728] sm:$0xff]
    %v1477 = vld [vmem:[#allocation3 + $0x730] sm:$0xff]
    %v1478 = vld [vmem:[#allocation3 + $0x738] sm:$0xff]
    %v1479 = vld [vmem:[#allocation3 + $0x740] sm:$0xff]
    %v1480 = vld [vmem:[#allocation3 + $0x748] sm:$0xff]
    %v1481 = vld [vmem:[#allocation3 + $0x750] sm:$0xff]
    %v1482 = vld [vmem:[#allocation3 + $0x758] sm:$0xff]
    %v1483 = vld [vmem:[#allocation3 + $0x760] sm:$0xff]
    %v1484 = vld [vmem:[#allocation3 + $0x768] sm:$0xff]
    %v1485 = vld [vmem:[#allocation3 + $0x770] sm:$0xff]
    %v1486 = vld [vmem:[#allocation3 + $0x778] sm:$0xff]
    %v1487 = vld [vmem:[#allocation3 + $0x780] sm:$0xff]
    %v1488 = vld [vmem:[#allocation3 + $0x788] sm:$0xff]
    %v1489 = vld [vmem:[#allocation3 + $0x790] sm:$0xff]
    %v1490 = vld [vmem:[#allocation3 + $0x798] sm:$0xff]
    %v1491 = vld [vmem:[#allocation3 + $0x7a0] sm:$0xff]
    %v1492 = vld [vmem:[#allocation3 + $0x7a8] sm:$0xff]
    %v1493 = vld [vmem:[#allocation3 + $0x7b0] sm:$0xff]
    %v1494 = vld [vmem:[#allocation3 + $0x7b8] sm:$0xff]
    %v1495 = vld [vmem:[#allocation3 + $0x7c0] sm:$0xff]
    %v1496 = vld [vmem:[#allocation3 + $0x7c8] sm:$0xff]
    %v1497 = vld [vmem:[#allocation3 + $0x7d0] sm:$0xff]
    %v1498 = vld [vmem:[#allocation3 + $0x7d8] sm:$0xff]
    %v1499 = vld [vmem:[#allocation3 + $0x7e0] sm:$0xff]
    %v1500 = vld [vmem:[#allocation3 + $0x7e8] sm:$0xff]
    %v1501 = vld [vmem:[#allocation3 + $0x7f0] sm:$0xff]
    %v1502 = vld [vmem:[#allocation3 + $0x7f8] sm:$0xff]
    %v1503 = vld [vmem:[#allocation20] sm:$0xff]
    %v1504 = vpack.c.bf16 %v1239, %v1239
    %v1505 = vpack.c.bf16 %v1240, %v1240
    %v1506 = vpack.c.bf16 %v1241, %v1241
    %v1507 = vpack.c.bf16 %v1242, %v1242
    %v1509 = vperm.slane %v1503, 0
    %v1510 = vperm.slane %v1503, 1
    %v1511 = vperm.slane %v1503, 2
    %v1512 = vperm.slane %v1503, 3
    %v1513 = vperm.slane %v1503, 4
    %v1514 = vperm.slane %v1503, 5
    %v1515 = vperm.slane %v1503, 6
    %v1516 = vperm.slane %v1503, 7
    %v1781 = vunpack.c.l.b16 %v1247
    %v1782 = vunpack.c.h.b16 %v1247
    %v1783 = vunpack.c.l.b16 %v1248
    %v1784 = vunpack.c.h.b16 %v1248
    %v1785 = vunpack.c.l.b16 %v1249
    %v1786 = vunpack.c.h.b16 %v1249
    %v1787 = vunpack.c.l.b16 %v1250
    %v1788 = vunpack.c.h.b16 %v1250
    %v1789 = vunpack.c.l.b16 %v1251
    %v1790 = vunpack.c.h.b16 %v1251
    %v1791 = vunpack.c.l.b16 %v1252
    %v1792 = vunpack.c.h.b16 %v1252
    %v1793 = vunpack.c.l.b16 %v1253
    %v1794 = vunpack.c.h.b16 %v1253
    %v1795 = vunpack.c.l.b16 %v1254
    %v1796 = vunpack.c.h.b16 %v1254
    %v1797 = vunpack.c.l.b16 %v1255
    %v1798 = vunpack.c.h.b16 %v1255
    %v1799 = vunpack.c.l.b16 %v1256
    %v1800 = vunpack.c.h.b16 %v1256
    %v1801 = vunpack.c.l.b16 %v1257
    %v1802 = vunpack.c.h.b16 %v1257
    %v1803 = vunpack.c.l.b16 %v1258
    %v1804 = vunpack.c.h.b16 %v1258
    %v1805 = vunpack.c.l.b16 %v1259
    %v1806 = vunpack.c.h.b16 %v1259
    %v1807 = vunpack.c.l.b16 %v1260
    %v1808 = vunpack.c.h.b16 %v1260
    %v1809 = vunpack.c.l.b16 %v1261
    %v1810 = vunpack.c.h.b16 %v1261
    %v1811 = vunpack.c.l.b16 %v1262
    %v1812 = vunpack.c.h.b16 %v1262
    %v1813 = vunpack.c.l.b16 %v1263
    %v1814 = vunpack.c.h.b16 %v1263
    %v1815 = vunpack.c.l.b16 %v1264
    %v1816 = vunpack.c.h.b16 %v1264
    %v1817 = vunpack.c.l.b16 %v1265
    %v1818 = vunpack.c.h.b16 %v1265
    %v1819 = vunpack.c.l.b16 %v1266
    %v1820 = vunpack.c.h.b16 %v1266
    %v1821 = vunpack.c.l.b16 %v1267
    %v1822 = vunpack.c.h.b16 %v1267
    %v1823 = vunpack.c.l.b16 %v1268
    %v1824 = vunpack.c.h.b16 %v1268
    %v1825 = vunpack.c.l.b16 %v1269
    %v1826 = vunpack.c.h.b16 %v1269
    %v1827 = vunpack.c.l.b16 %v1270
    %v1828 = vunpack.c.h.b16 %v1270
    %v1829 = vunpack.c.l.b16 %v1271
    %v1830 = vunpack.c.h.b16 %v1271
    %v1831 = vunpack.c.l.b16 %v1272
    %v1832 = vunpack.c.h.b16 %v1272
    %v1833 = vunpack.c.l.b16 %v1273
    %v1834 = vunpack.c.h.b16 %v1273
    %v1835 = vunpack.c.l.b16 %v1274
    %v1836 = vunpack.c.h.b16 %v1274
    %v1837 = vunpack.c.l.b16 %v1275
    %v1838 = vunpack.c.h.b16 %v1275
    %v1839 = vunpack.c.l.b16 %v1276
    %v1840 = vunpack.c.h.b16 %v1276
    %v1841 = vunpack.c.l.b16 %v1277
    %v1842 = vunpack.c.h.b16 %v1277
    %v1843 = vunpack.c.l.b16 %v1278
    %v1844 = vunpack.c.h.b16 %v1278
    %v1845 = vunpack.c.l.b16 %v1279
    %v1846 = vunpack.c.h.b16 %v1279
    %v1847 = vunpack.c.l.b16 %v1280
    %v1848 = vunpack.c.h.b16 %v1280
    %v1849 = vunpack.c.l.b16 %v1281
    %v1850 = vunpack.c.h.b16 %v1281
    %v1851 = vunpack.c.l.b16 %v1282
    %v1852 = vunpack.c.h.b16 %v1282
    %v1853 = vunpack.c.l.b16 %v1283
    %v1854 = vunpack.c.h.b16 %v1283
    %v1855 = vunpack.c.l.b16 %v1284
    %v1856 = vunpack.c.h.b16 %v1284
    %v1857 = vunpack.c.l.b16 %v1285
    %v1858 = vunpack.c.h.b16 %v1285
    %v1859 = vunpack.c.l.b16 %v1286
    %v1860 = vunpack.c.h.b16 %v1286
    %v1861 = vunpack.c.l.b16 %v1287
    %v1862 = vunpack.c.h.b16 %v1287
    %v1863 = vunpack.c.l.b16 %v1288
    %v1864 = vunpack.c.h.b16 %v1288
    %v1865 = vunpack.c.l.b16 %v1289
    %v1866 = vunpack.c.h.b16 %v1289
    %v1867 = vunpack.c.l.b16 %v1290
    %v1868 = vunpack.c.h.b16 %v1290
    %v1869 = vunpack.c.l.b16 %v1291
    %v1870 = vunpack.c.h.b16 %v1291
    %v1871 = vunpack.c.l.b16 %v1292
    %v1872 = vunpack.c.h.b16 %v1292
    %v1873 = vunpack.c.l.b16 %v1293
    %v1874 = vunpack.c.h.b16 %v1293
    %v1875 = vunpack.c.l.b16 %v1294
    %v1876 = vunpack.c.h.b16 %v1294
    %v1877 = vunpack.c.l.b16 %v1295
    %v1878 = vunpack.c.h.b16 %v1295
    %v1879 = vunpack.c.l.b16 %v1296
    %v1880 = vunpack.c.h.b16 %v1296
    %v1881 = vunpack.c.l.b16 %v1297
    %v1882 = vunpack.c.h.b16 %v1297
    %v1883 = vunpack.c.l.b16 %v1298
    %v1884 = vunpack.c.h.b16 %v1298
    %v1885 = vunpack.c.l.b16 %v1299
    %v1886 = vunpack.c.h.b16 %v1299
    %v1887 = vunpack.c.l.b16 %v1300
    %v1888 = vunpack.c.h.b16 %v1300
    %v1889 = vunpack.c.l.b16 %v1301
    %v1890 = vunpack.c.h.b16 %v1301
    %v1891 = vunpack.c.l.b16 %v1302
    %v1892 = vunpack.c.h.b16 %v1302
    %v1893 = vunpack.c.l.b16 %v1303
    %v1894 = vunpack.c.h.b16 %v1303
    %v1895 = vunpack.c.l.b16 %v1304
    %v1896 = vunpack.c.h.b16 %v1304
    %v1897 = vunpack.c.l.b16 %v1305
    %v1898 = vunpack.c.h.b16 %v1305
    %v1899 = vunpack.c.l.b16 %v1306
    %v1900 = vunpack.c.h.b16 %v1306
    %v1901 = vunpack.c.l.b16 %v1307
    %v1902 = vunpack.c.h.b16 %v1307
    %v1903 = vunpack.c.l.b16 %v1308
    %v1904 = vunpack.c.h.b16 %v1308
    %v1905 = vunpack.c.l.b16 %v1309
    %v1906 = vunpack.c.h.b16 %v1309
    %v1907 = vunpack.c.l.b16 %v1310
    %v1908 = vunpack.c.h.b16 %v1310
    %v1909 = vunpack.c.l.b16 %v1311
    %v1910 = vunpack.c.h.b16 %v1311
    %v1911 = vunpack.c.l.b16 %v1312
    %v1912 = vunpack.c.h.b16 %v1312
    %v1913 = vunpack.c.l.b16 %v1313
    %v1914 = vunpack.c.h.b16 %v1313
    %v1915 = vunpack.c.l.b16 %v1314
    %v1916 = vunpack.c.h.b16 %v1314
    %v1917 = vunpack.c.l.b16 %v1315
    %v1918 = vunpack.c.h.b16 %v1315
    %v1919 = vunpack.c.l.b16 %v1316
    %v1920 = vunpack.c.h.b16 %v1316
    %v1921 = vunpack.c.l.b16 %v1317
    %v1922 = vunpack.c.h.b16 %v1317
    %v1923 = vunpack.c.l.b16 %v1318
    %v1924 = vunpack.c.h.b16 %v1318
    %v1925 = vunpack.c.l.b16 %v1319
    %v1926 = vunpack.c.h.b16 %v1319
    %v1927 = vunpack.c.l.b16 %v1320
    %v1928 = vunpack.c.h.b16 %v1320
    %v1929 = vunpack.c.l.b16 %v1321
    %v1930 = vunpack.c.h.b16 %v1321
    %v1931 = vunpack.c.l.b16 %v1322
    %v1932 = vunpack.c.h.b16 %v1322
    %v1933 = vunpack.c.l.b16 %v1323
    %v1934 = vunpack.c.h.b16 %v1323
    %v1935 = vunpack.c.l.b16 %v1324
    %v1936 = vunpack.c.h.b16 %v1324
    %v1937 = vunpack.c.l.b16 %v1325
    %v1938 = vunpack.c.h.b16 %v1325
    %v1939 = vunpack.c.l.b16 %v1326
    %v1940 = vunpack.c.h.b16 %v1326
    %v1941 = vunpack.c.l.b16 %v1327
    %v1942 = vunpack.c.h.b16 %v1327
    %v1943 = vunpack.c.l.b16 %v1328
    %v1944 = vunpack.c.h.b16 %v1328
    %v1945 = vunpack.c.l.b16 %v1329
    %v1946 = vunpack.c.h.b16 %v1329
    %v1947 = vunpack.c.l.b16 %v1330
    %v1948 = vunpack.c.h.b16 %v1330
    %v1949 = vunpack.c.l.b16 %v1331
    %v1950 = vunpack.c.h.b16 %v1331
    %v1951 = vunpack.c.l.b16 %v1332
    %v1952 = vunpack.c.h.b16 %v1332
    %v1953 = vunpack.c.l.b16 %v1333
    %v1954 = vunpack.c.h.b16 %v1333
    %v1955 = vunpack.c.l.b16 %v1334
    %v1956 = vunpack.c.h.b16 %v1334
    %v1957 = vunpack.c.l.b16 %v1335
    %v1958 = vunpack.c.h.b16 %v1335
    %v1959 = vunpack.c.l.b16 %v1336
    %v1960 = vunpack.c.h.b16 %v1336
    %v1961 = vunpack.c.l.b16 %v1337
    %v1962 = vunpack.c.h.b16 %v1337
    %v1963 = vunpack.c.l.b16 %v1338
    %v1964 = vunpack.c.h.b16 %v1338
    %v1965 = vunpack.c.l.b16 %v1339
    %v1966 = vunpack.c.h.b16 %v1339
    %v1967 = vunpack.c.l.b16 %v1340
    %v1968 = vunpack.c.h.b16 %v1340
    %v1969 = vunpack.c.l.b16 %v1341
    %v1970 = vunpack.c.h.b16 %v1341
    %v1971 = vunpack.c.l.b16 %v1342
    %v1972 = vunpack.c.h.b16 %v1342
    %v1973 = vunpack.c.l.b16 %v1343
    %v1974 = vunpack.c.h.b16 %v1343
    %v1975 = vunpack.c.l.b16 %v1344
    %v1976 = vunpack.c.h.b16 %v1344
    %v1977 = vunpack.c.l.b16 %v1345
    %v1978 = vunpack.c.h.b16 %v1345
    %v1979 = vunpack.c.l.b16 %v1346
    %v1980 = vunpack.c.h.b16 %v1346
    %v1981 = vunpack.c.l.b16 %v1347
    %v1982 = vunpack.c.h.b16 %v1347
    %v1983 = vunpack.c.l.b16 %v1348
    %v1984 = vunpack.c.h.b16 %v1348
    %v1985 = vunpack.c.l.b16 %v1349
    %v1986 = vunpack.c.h.b16 %v1349
    %v1987 = vunpack.c.l.b16 %v1350
    %v1988 = vunpack.c.h.b16 %v1350
    %v1989 = vunpack.c.l.b16 %v1351
    %v1990 = vunpack.c.h.b16 %v1351
    %v1991 = vunpack.c.l.b16 %v1352
    %v1992 = vunpack.c.h.b16 %v1352
    %v1993 = vunpack.c.l.b16 %v1353
    %v1994 = vunpack.c.h.b16 %v1353
    %v1995 = vunpack.c.l.b16 %v1354
    %v1996 = vunpack.c.h.b16 %v1354
    %v1997 = vunpack.c.l.b16 %v1355
    %v1998 = vunpack.c.h.b16 %v1355
    %v1999 = vunpack.c.l.b16 %v1356
    %v2000 = vunpack.c.h.b16 %v1356
    %v2001 = vunpack.c.l.b16 %v1357
    %v2002 = vunpack.c.h.b16 %v1357
    %v2003 = vunpack.c.l.b16 %v1358
    %v2004 = vunpack.c.h.b16 %v1358
    %v2005 = vunpack.c.l.b16 %v1359
    %v2006 = vunpack.c.h.b16 %v1359
    %v2007 = vunpack.c.l.b16 %v1360
    %v2008 = vunpack.c.h.b16 %v1360
    %v2009 = vunpack.c.l.b16 %v1361
    %v2010 = vunpack.c.h.b16 %v1361
    %v2011 = vunpack.c.l.b16 %v1362
    %v2012 = vunpack.c.h.b16 %v1362
    %v2013 = vunpack.c.l.b16 %v1363
    %v2014 = vunpack.c.h.b16 %v1363
    %v2015 = vunpack.c.l.b16 %v1364
    %v2016 = vunpack.c.h.b16 %v1364
    %v2017 = vunpack.c.l.b16 %v1365
    %v2018 = vunpack.c.h.b16 %v1365
    %v2019 = vunpack.c.l.b16 %v1366
    %v2020 = vunpack.c.h.b16 %v1366
    %v2021 = vunpack.c.l.b16 %v1367
    %v2022 = vunpack.c.h.b16 %v1367
    %v2023 = vunpack.c.l.b16 %v1368
    %v2024 = vunpack.c.h.b16 %v1368
    %v2025 = vunpack.c.l.b16 %v1369
    %v2026 = vunpack.c.h.b16 %v1369
    %v2027 = vunpack.c.l.b16 %v1370
    %v2028 = vunpack.c.h.b16 %v1370
    %v2029 = vunpack.c.l.b16 %v1371
    %v2030 = vunpack.c.h.b16 %v1371
    %v2031 = vunpack.c.l.b16 %v1372
    %v2032 = vunpack.c.h.b16 %v1372
    %v2033 = vunpack.c.l.b16 %v1373
    %v2034 = vunpack.c.h.b16 %v1373
    %v2035 = vunpack.c.l.b16 %v1374
    %v2036 = vunpack.c.h.b16 %v1374
    %v2037 = vunpack.c.l.b16 %v1375
    %v2038 = vunpack.c.h.b16 %v1375
    %v2039 = vunpack.c.l.b16 %v1376
    %v2040 = vunpack.c.h.b16 %v1376
    %v2041 = vunpack.c.l.b16 %v1377
    %v2042 = vunpack.c.h.b16 %v1377
    %v2043 = vunpack.c.l.b16 %v1378
    %v2044 = vunpack.c.h.b16 %v1378
    %v2045 = vunpack.c.l.b16 %v1379
    %v2046 = vunpack.c.h.b16 %v1379
    %v2047 = vunpack.c.l.b16 %v1380
    %v2048 = vunpack.c.h.b16 %v1380
    %v2049 = vunpack.c.l.b16 %v1381
    %v2050 = vunpack.c.h.b16 %v1381
    %v2051 = vunpack.c.l.b16 %v1382
    %v2052 = vunpack.c.h.b16 %v1382
    %v2053 = vunpack.c.l.b16 %v1383
    %v2054 = vunpack.c.h.b16 %v1383
    %v2055 = vunpack.c.l.b16 %v1384
    %v2056 = vunpack.c.h.b16 %v1384
    %v2057 = vunpack.c.l.b16 %v1385
    %v2058 = vunpack.c.h.b16 %v1385
    %v2059 = vunpack.c.l.b16 %v1386
    %v2060 = vunpack.c.h.b16 %v1386
    %v2061 = vunpack.c.l.b16 %v1387
    %v2062 = vunpack.c.h.b16 %v1387
    %v2063 = vunpack.c.l.b16 %v1388
    %v2064 = vunpack.c.h.b16 %v1388
    %v2065 = vunpack.c.l.b16 %v1389
    %v2066 = vunpack.c.h.b16 %v1389
    %v2067 = vunpack.c.l.b16 %v1390
    %v2068 = vunpack.c.h.b16 %v1390
    %v2069 = vunpack.c.l.b16 %v1391
    %v2070 = vunpack.c.h.b16 %v1391
    %v2071 = vunpack.c.l.b16 %v1392
    %v2072 = vunpack.c.h.b16 %v1392
    %v2073 = vunpack.c.l.b16 %v1393
    %v2074 = vunpack.c.h.b16 %v1393
    %v2075 = vunpack.c.l.b16 %v1394
    %v2076 = vunpack.c.h.b16 %v1394
    %v2077 = vunpack.c.l.b16 %v1395
    %v2078 = vunpack.c.h.b16 %v1395
    %v2079 = vunpack.c.l.b16 %v1396
    %v2080 = vunpack.c.h.b16 %v1396
    %v2081 = vunpack.c.l.b16 %v1397
    %v2082 = vunpack.c.h.b16 %v1397
    %v2083 = vunpack.c.l.b16 %v1398
    %v2084 = vunpack.c.h.b16 %v1398
    %v2085 = vunpack.c.l.b16 %v1399
    %v2086 = vunpack.c.h.b16 %v1399
    %v2087 = vunpack.c.l.b16 %v1400
    %v2088 = vunpack.c.h.b16 %v1400
    %v2089 = vunpack.c.l.b16 %v1401
    %v2090 = vunpack.c.h.b16 %v1401
    %v2091 = vunpack.c.l.b16 %v1402
    %v2092 = vunpack.c.h.b16 %v1402
    %v2093 = vunpack.c.l.b16 %v1403
    %v2094 = vunpack.c.h.b16 %v1403
    %v2095 = vunpack.c.l.b16 %v1404
    %v2096 = vunpack.c.h.b16 %v1404
    %v2097 = vunpack.c.l.b16 %v1405
    %v2098 = vunpack.c.h.b16 %v1405
    %v2099 = vunpack.c.l.b16 %v1406
    %v2100 = vunpack.c.h.b16 %v1406
    %v2101 = vunpack.c.l.b16 %v1407
    %v2102 = vunpack.c.h.b16 %v1407
    %v2103 = vunpack.c.l.b16 %v1408
    %v2104 = vunpack.c.h.b16 %v1408
    %v2105 = vunpack.c.l.b16 %v1409
    %v2106 = vunpack.c.h.b16 %v1409
    %v2107 = vunpack.c.l.b16 %v1410
    %v2108 = vunpack.c.h.b16 %v1410
    %v2109 = vunpack.c.l.b16 %v1411
    %v2110 = vunpack.c.h.b16 %v1411
    %v2111 = vunpack.c.l.b16 %v1412
    %v2112 = vunpack.c.h.b16 %v1412
    %v2113 = vunpack.c.l.b16 %v1413
    %v2114 = vunpack.c.h.b16 %v1413
    %v2115 = vunpack.c.l.b16 %v1414
    %v2116 = vunpack.c.h.b16 %v1414
    %v2117 = vunpack.c.l.b16 %v1415
    %v2118 = vunpack.c.h.b16 %v1415
    %v2119 = vunpack.c.l.b16 %v1416
    %v2120 = vunpack.c.h.b16 %v1416
    %v2121 = vunpack.c.l.b16 %v1417
    %v2122 = vunpack.c.h.b16 %v1417
    %v2123 = vunpack.c.l.b16 %v1418
    %v2124 = vunpack.c.h.b16 %v1418
    %v2125 = vunpack.c.l.b16 %v1419
    %v2126 = vunpack.c.h.b16 %v1419
    %v2127 = vunpack.c.l.b16 %v1420
    %v2128 = vunpack.c.h.b16 %v1420
    %v2129 = vunpack.c.l.b16 %v1421
    %v2130 = vunpack.c.h.b16 %v1421
    %v2131 = vunpack.c.l.b16 %v1422
    %v2132 = vunpack.c.h.b16 %v1422
    %v2133 = vunpack.c.l.b16 %v1423
    %v2134 = vunpack.c.h.b16 %v1423
    %v2135 = vunpack.c.l.b16 %v1424
    %v2136 = vunpack.c.h.b16 %v1424
    %v2137 = vunpack.c.l.b16 %v1425
    %v2138 = vunpack.c.h.b16 %v1425
    %v2139 = vunpack.c.l.b16 %v1426
    %v2140 = vunpack.c.h.b16 %v1426
    %v2141 = vunpack.c.l.b16 %v1427
    %v2142 = vunpack.c.h.b16 %v1427
    %v2143 = vunpack.c.l.b16 %v1428
    %v2144 = vunpack.c.h.b16 %v1428
    %v2145 = vunpack.c.l.b16 %v1429
    %v2146 = vunpack.c.h.b16 %v1429
    %v2147 = vunpack.c.l.b16 %v1430
    %v2148 = vunpack.c.h.b16 %v1430
    %v2149 = vunpack.c.l.b16 %v1431
    %v2150 = vunpack.c.h.b16 %v1431
    %v2151 = vunpack.c.l.b16 %v1432
    %v2152 = vunpack.c.h.b16 %v1432
    %v2153 = vunpack.c.l.b16 %v1433
    %v2154 = vunpack.c.h.b16 %v1433
    %v2155 = vunpack.c.l.b16 %v1434
    %v2156 = vunpack.c.h.b16 %v1434
    %v2157 = vunpack.c.l.b16 %v1435
    %v2158 = vunpack.c.h.b16 %v1435
    %v2159 = vunpack.c.l.b16 %v1436
    %v2160 = vunpack.c.h.b16 %v1436
    %v2161 = vunpack.c.l.b16 %v1437
    %v2162 = vunpack.c.h.b16 %v1437
    %v2163 = vunpack.c.l.b16 %v1438
    %v2164 = vunpack.c.h.b16 %v1438
    %v2165 = vunpack.c.l.b16 %v1439
    %v2166 = vunpack.c.h.b16 %v1439
    %v2167 = vunpack.c.l.b16 %v1440
    %v2168 = vunpack.c.h.b16 %v1440
    %v2169 = vunpack.c.l.b16 %v1441
    %v2170 = vunpack.c.h.b16 %v1441
    %v2171 = vunpack.c.l.b16 %v1442
    %v2172 = vunpack.c.h.b16 %v1442
    %v2173 = vunpack.c.l.b16 %v1443
    %v2174 = vunpack.c.h.b16 %v1443
    %v2175 = vunpack.c.l.b16 %v1444
    %v2176 = vunpack.c.h.b16 %v1444
    %v2177 = vunpack.c.l.b16 %v1445
    %v2178 = vunpack.c.h.b16 %v1445
    %v2179 = vunpack.c.l.b16 %v1446
    %v2180 = vunpack.c.h.b16 %v1446
    %v2181 = vunpack.c.l.b16 %v1447
    %v2182 = vunpack.c.h.b16 %v1447
    %v2183 = vunpack.c.l.b16 %v1448
    %v2184 = vunpack.c.h.b16 %v1448
    %v2185 = vunpack.c.l.b16 %v1449
    %v2186 = vunpack.c.h.b16 %v1449
    %v2187 = vunpack.c.l.b16 %v1450
    %v2188 = vunpack.c.h.b16 %v1450
    %v2189 = vunpack.c.l.b16 %v1451
    %v2190 = vunpack.c.h.b16 %v1451
    %v2191 = vunpack.c.l.b16 %v1452
    %v2192 = vunpack.c.h.b16 %v1452
    %v2193 = vunpack.c.l.b16 %v1453
    %v2194 = vunpack.c.h.b16 %v1453
    %v2195 = vunpack.c.l.b16 %v1454
    %v2196 = vunpack.c.h.b16 %v1454
    %v2197 = vunpack.c.l.b16 %v1455
    %v2198 = vunpack.c.h.b16 %v1455
    %v2199 = vunpack.c.l.b16 %v1456
    %v2200 = vunpack.c.h.b16 %v1456
    %v2201 = vunpack.c.l.b16 %v1457
    %v2202 = vunpack.c.h.b16 %v1457
    %v2203 = vunpack.c.l.b16 %v1458
    %v2204 = vunpack.c.h.b16 %v1458
    %v2205 = vunpack.c.l.b16 %v1459
    %v2206 = vunpack.c.h.b16 %v1459
    %v2207 = vunpack.c.l.b16 %v1460
    %v2208 = vunpack.c.h.b16 %v1460
    %v2209 = vunpack.c.l.b16 %v1461
    %v2210 = vunpack.c.h.b16 %v1461
    %v2211 = vunpack.c.l.b16 %v1462
    %v2212 = vunpack.c.h.b16 %v1462
    %v2213 = vunpack.c.l.b16 %v1463
    %v2214 = vunpack.c.h.b16 %v1463
    %v2215 = vunpack.c.l.b16 %v1464
    %v2216 = vunpack.c.h.b16 %v1464
    %v2217 = vunpack.c.l.b16 %v1465
    %v2218 = vunpack.c.h.b16 %v1465
    %v2219 = vunpack.c.l.b16 %v1466
    %v2220 = vunpack.c.h.b16 %v1466
    %v2221 = vunpack.c.l.b16 %v1467
    %v2222 = vunpack.c.h.b16 %v1467
    %v2223 = vunpack.c.l.b16 %v1468
    %v2224 = vunpack.c.h.b16 %v1468
    %v2225 = vunpack.c.l.b16 %v1469
    %v2226 = vunpack.c.h.b16 %v1469
    %v2227 = vunpack.c.l.b16 %v1470
    %v2228 = vunpack.c.h.b16 %v1470
    %v2229 = vunpack.c.l.b16 %v1471
    %v2230 = vunpack.c.h.b16 %v1471
    %v2231 = vunpack.c.l.b16 %v1472
    %v2232 = vunpack.c.h.b16 %v1472
    %v2233 = vunpack.c.l.b16 %v1473
    %v2234 = vunpack.c.h.b16 %v1473
    %v2235 = vunpack.c.l.b16 %v1474
    %v2236 = vunpack.c.h.b16 %v1474
    %v2237 = vunpack.c.l.b16 %v1475
    %v2238 = vunpack.c.h.b16 %v1475
    %v2239 = vunpack.c.l.b16 %v1476
    %v2240 = vunpack.c.h.b16 %v1476
    %v2241 = vunpack.c.l.b16 %v1477
    %v2242 = vunpack.c.h.b16 %v1477
    %v2243 = vunpack.c.l.b16 %v1478
    %v2244 = vunpack.c.h.b16 %v1478
    %v2245 = vunpack.c.l.b16 %v1479
    %v2246 = vunpack.c.h.b16 %v1479
    %v2247 = vunpack.c.l.b16 %v1480
    %v2248 = vunpack.c.h.b16 %v1480
    %v2249 = vunpack.c.l.b16 %v1481
    %v2250 = vunpack.c.h.b16 %v1481
    %v2251 = vunpack.c.l.b16 %v1482
    %v2252 = vunpack.c.h.b16 %v1482
    %v2253 = vunpack.c.l.b16 %v1483
    %v2254 = vunpack.c.h.b16 %v1483
    %v2255 = vunpack.c.l.b16 %v1484
    %v2256 = vunpack.c.h.b16 %v1484
    %v2257 = vunpack.c.l.b16 %v1485
    %v2258 = vunpack.c.h.b16 %v1485
    %v2259 = vunpack.c.l.b16 %v1486
    %v2260 = vunpack.c.h.b16 %v1486
    %v2261 = vunpack.c.l.b16 %v1487
    %v2262 = vunpack.c.h.b16 %v1487
    %v2263 = vunpack.c.l.b16 %v1488
    %v2264 = vunpack.c.h.b16 %v1488
    %v2265 = vunpack.c.l.b16 %v1489
    %v2266 = vunpack.c.h.b16 %v1489
    %v2267 = vunpack.c.l.b16 %v1490
    %v2268 = vunpack.c.h.b16 %v1490
    %v2269 = vunpack.c.l.b16 %v1491
    %v2270 = vunpack.c.h.b16 %v1491
    %v2271 = vunpack.c.l.b16 %v1492
    %v2272 = vunpack.c.h.b16 %v1492
    %v2273 = vunpack.c.l.b16 %v1493
    %v2274 = vunpack.c.h.b16 %v1493
    %v2275 = vunpack.c.l.b16 %v1494
    %v2276 = vunpack.c.h.b16 %v1494
    %v2277 = vunpack.c.l.b16 %v1495
    %v2278 = vunpack.c.h.b16 %v1495
    %v2279 = vunpack.c.l.b16 %v1496
    %v2280 = vunpack.c.h.b16 %v1496
    %v2281 = vunpack.c.l.b16 %v1497
    %v2282 = vunpack.c.h.b16 %v1497
    %v2283 = vunpack.c.l.b16 %v1498
    %v2284 = vunpack.c.h.b16 %v1498
    %v2285 = vunpack.c.l.b16 %v1499
    %v2286 = vunpack.c.h.b16 %v1499
    %v2287 = vunpack.c.l.b16 %v1500
    %v2288 = vunpack.c.h.b16 %v1500
    %v2289 = vunpack.c.l.b16 %v1501
    %v2290 = vunpack.c.h.b16 %v1501
    %v2291 = vunpack.c.l.b16 %v1502
    %v2292 = vunpack.c.h.b16 %v1502
    %v2293 = vpack.c.b16 %v1789, %v1781
    %v2294 = vpack.c.b16 %v1790, %v1782
    %v2295 = vpack.c.b16 %v1791, %v1783
    %v2296 = vpack.c.b16 %v1792, %v1784
    %v2297 = vpack.c.b16 %v1793, %v1785
    %v2298 = vpack.c.b16 %v1794, %v1786
    %v2299 = vpack.c.b16 %v1795, %v1787
    %v2300 = vpack.c.b16 %v1796, %v1788
    %v2301 = vpack.c.b16 %v1805, %v1797
    %v2302 = vpack.c.b16 %v1806, %v1798
    %v2303 = vpack.c.b16 %v1807, %v1799
    %v2304 = vpack.c.b16 %v1808, %v1800
    %v2305 = vpack.c.b16 %v1809, %v1801
    %v2306 = vpack.c.b16 %v1810, %v1802
    %v2307 = vpack.c.b16 %v1811, %v1803
    %v2308 = vpack.c.b16 %v1812, %v1804
    %v2309 = vpack.c.b16 %v1821, %v1813
    %v2310 = vpack.c.b16 %v1822, %v1814
    %v2311 = vpack.c.b16 %v1823, %v1815
    %v2312 = vpack.c.b16 %v1824, %v1816
    %v2313 = vpack.c.b16 %v1825, %v1817
    %v2314 = vpack.c.b16 %v1826, %v1818
    %v2315 = vpack.c.b16 %v1827, %v1819
    %v2316 = vpack.c.b16 %v1828, %v1820
    %v2317 = vpack.c.b16 %v1837, %v1829
    %v2318 = vpack.c.b16 %v1838, %v1830
    %v2319 = vpack.c.b16 %v1839, %v1831
    %v2320 = vpack.c.b16 %v1840, %v1832
    %v2321 = vpack.c.b16 %v1841, %v1833
    %v2322 = vpack.c.b16 %v1842, %v1834
    %v2323 = vpack.c.b16 %v1843, %v1835
    %v2324 = vpack.c.b16 %v1844, %v1836
    %v2325 = vpack.c.b16 %v1853, %v1845
    %v2326 = vpack.c.b16 %v1854, %v1846
    %v2327 = vpack.c.b16 %v1855, %v1847
    %v2328 = vpack.c.b16 %v1856, %v1848
    %v2329 = vpack.c.b16 %v1857, %v1849
    %v2330 = vpack.c.b16 %v1858, %v1850
    %v2331 = vpack.c.b16 %v1859, %v1851
    %v2332 = vpack.c.b16 %v1860, %v1852
    %v2333 = vpack.c.b16 %v1869, %v1861
    %v2334 = vpack.c.b16 %v1870, %v1862
    %v2335 = vpack.c.b16 %v1871, %v1863
    %v2336 = vpack.c.b16 %v1872, %v1864
    %v2337 = vpack.c.b16 %v1873, %v1865
    %v2338 = vpack.c.b16 %v1874, %v1866
    %v2339 = vpack.c.b16 %v1875, %v1867
    %v2340 = vpack.c.b16 %v1876, %v1868
    %v2341 = vpack.c.b16 %v1885, %v1877
    %v2342 = vpack.c.b16 %v1886, %v1878
    %v2343 = vpack.c.b16 %v1887, %v1879
    %v2344 = vpack.c.b16 %v1888, %v1880
    %v2345 = vpack.c.b16 %v1889, %v1881
    %v2346 = vpack.c.b16 %v1890, %v1882
    %v2347 = vpack.c.b16 %v1891, %v1883
    %v2348 = vpack.c.b16 %v1892, %v1884
    %v2349 = vpack.c.b16 %v1901, %v1893
    %v2350 = vpack.c.b16 %v1902, %v1894
    %v2351 = vpack.c.b16 %v1903, %v1895
    %v2352 = vpack.c.b16 %v1904, %v1896
    %v2353 = vpack.c.b16 %v1905, %v1897
    %v2354 = vpack.c.b16 %v1906, %v1898
    %v2355 = vpack.c.b16 %v1907, %v1899
    %v2356 = vpack.c.b16 %v1908, %v1900
    %v2357 = vpack.c.b16 %v1917, %v1909
    %v2358 = vpack.c.b16 %v1918, %v1910
    %v2359 = vpack.c.b16 %v1919, %v1911
    %v2360 = vpack.c.b16 %v1920, %v1912
    %v2361 = vpack.c.b16 %v1921, %v1913
    %v2362 = vpack.c.b16 %v1922, %v1914
    %v2363 = vpack.c.b16 %v1923, %v1915
    %v2364 = vpack.c.b16 %v1924, %v1916
    %v2365 = vpack.c.b16 %v1933, %v1925
    %v2366 = vpack.c.b16 %v1934, %v1926
    %v2367 = vpack.c.b16 %v1935, %v1927
    %v2368 = vpack.c.b16 %v1936, %v1928
    %v2369 = vpack.c.b16 %v1937, %v1929
    %v2370 = vpack.c.b16 %v1938, %v1930
    %v2371 = vpack.c.b16 %v1939, %v1931
    %v2372 = vpack.c.b16 %v1940, %v1932
    %v2373 = vpack.c.b16 %v1949, %v1941
    %v2374 = vpack.c.b16 %v1950, %v1942
    %v2375 = vpack.c.b16 %v1951, %v1943
    %v2376 = vpack.c.b16 %v1952, %v1944
    %v2377 = vpack.c.b16 %v1953, %v1945
    %v2378 = vpack.c.b16 %v1954, %v1946
    %v2379 = vpack.c.b16 %v1955, %v1947
    %v2380 = vpack.c.b16 %v1956, %v1948
    %v2381 = vpack.c.b16 %v1965, %v1957
    %v2382 = vpack.c.b16 %v1966, %v1958
    %v2383 = vpack.c.b16 %v1967, %v1959
    %v2384 = vpack.c.b16 %v1968, %v1960
    %v2385 = vpack.c.b16 %v1969, %v1961
    %v2386 = vpack.c.b16 %v1970, %v1962
    %v2387 = vpack.c.b16 %v1971, %v1963
    %v2388 = vpack.c.b16 %v1972, %v1964
    %v2389 = vpack.c.b16 %v1981, %v1973
    %v2390 = vpack.c.b16 %v1982, %v1974
    %v2391 = vpack.c.b16 %v1983, %v1975
    %v2392 = vpack.c.b16 %v1984, %v1976
    %v2393 = vpack.c.b16 %v1985, %v1977
    %v2394 = vpack.c.b16 %v1986, %v1978
    %v2395 = vpack.c.b16 %v1987, %v1979
    %v2396 = vpack.c.b16 %v1988, %v1980
    %v2397 = vpack.c.b16 %v1997, %v1989
    %v2398 = vpack.c.b16 %v1998, %v1990
    %v2399 = vpack.c.b16 %v1999, %v1991
    %v2400 = vpack.c.b16 %v2000, %v1992
    %v2401 = vpack.c.b16 %v2001, %v1993
    %v2402 = vpack.c.b16 %v2002, %v1994
    %v2403 = vpack.c.b16 %v2003, %v1995
    %v2404 = vpack.c.b16 %v2004, %v1996
    %v2405 = vpack.c.b16 %v2013, %v2005
    %v2406 = vpack.c.b16 %v2014, %v2006
    %v2407 = vpack.c.b16 %v2015, %v2007
    %v2408 = vpack.c.b16 %v2016, %v2008
    %v2409 = vpack.c.b16 %v2017, %v2009
    %v2410 = vpack.c.b16 %v2018, %v2010
    %v2411 = vpack.c.b16 %v2019, %v2011
    %v2412 = vpack.c.b16 %v2020, %v2012
    %v2413 = vpack.c.b16 %v2029, %v2021
    %v2414 = vpack.c.b16 %v2030, %v2022
    %v2415 = vpack.c.b16 %v2031, %v2023
    %v2416 = vpack.c.b16 %v2032, %v2024
    %v2417 = vpack.c.b16 %v2033, %v2025
    %v2418 = vpack.c.b16 %v2034, %v2026
    %v2419 = vpack.c.b16 %v2035, %v2027
    %v2420 = vpack.c.b16 %v2036, %v2028
    %v2421 = vpack.c.b16 %v2045, %v2037
    %v2422 = vpack.c.b16 %v2046, %v2038
    %v2423 = vpack.c.b16 %v2047, %v2039
    %v2424 = vpack.c.b16 %v2048, %v2040
    %v2425 = vpack.c.b16 %v2049, %v2041
    %v2426 = vpack.c.b16 %v2050, %v2042
    %v2427 = vpack.c.b16 %v2051, %v2043
    %v2428 = vpack.c.b16 %v2052, %v2044
    %v2429 = vpack.c.b16 %v2061, %v2053
    %v2430 = vpack.c.b16 %v2062, %v2054
    %v2431 = vpack.c.b16 %v2063, %v2055
    %v2432 = vpack.c.b16 %v2064, %v2056
    %v2433 = vpack.c.b16 %v2065, %v2057
    %v2434 = vpack.c.b16 %v2066, %v2058
    %v2435 = vpack.c.b16 %v2067, %v2059
    %v2436 = vpack.c.b16 %v2068, %v2060
    %v2437 = vpack.c.b16 %v2077, %v2069
    %v2438 = vpack.c.b16 %v2078, %v2070
    %v2439 = vpack.c.b16 %v2079, %v2071
    %v2440 = vpack.c.b16 %v2080, %v2072
    %v2441 = vpack.c.b16 %v2081, %v2073
    %v2442 = vpack.c.b16 %v2082, %v2074
    %v2443 = vpack.c.b16 %v2083, %v2075
    %v2444 = vpack.c.b16 %v2084, %v2076
    %v2445 = vpack.c.b16 %v2093, %v2085
    %v2446 = vpack.c.b16 %v2094, %v2086
    %v2447 = vpack.c.b16 %v2095, %v2087
    %v2448 = vpack.c.b16 %v2096, %v2088
    %v2449 = vpack.c.b16 %v2097, %v2089
    %v2450 = vpack.c.b16 %v2098, %v2090
    %v2451 = vpack.c.b16 %v2099, %v2091
    %v2452 = vpack.c.b16 %v2100, %v2092
    %v2453 = vpack.c.b16 %v2109, %v2101
    %v2454 = vpack.c.b16 %v2110, %v2102
    %v2455 = vpack.c.b16 %v2111, %v2103
    %v2456 = vpack.c.b16 %v2112, %v2104
    %v2457 = vpack.c.b16 %v2113, %v2105
    %v2458 = vpack.c.b16 %v2114, %v2106
    %v2459 = vpack.c.b16 %v2115, %v2107
    %v2460 = vpack.c.b16 %v2116, %v2108
    %v2461 = vpack.c.b16 %v2125, %v2117
    %v2462 = vpack.c.b16 %v2126, %v2118
    %v2463 = vpack.c.b16 %v2127, %v2119
    %v2464 = vpack.c.b16 %v2128, %v2120
    %v2465 = vpack.c.b16 %v2129, %v2121
    %v2466 = vpack.c.b16 %v2130, %v2122
    %v2467 = vpack.c.b16 %v2131, %v2123
    %v2468 = vpack.c.b16 %v2132, %v2124
    %v2469 = vpack.c.b16 %v2141, %v2133
    %v2470 = vpack.c.b16 %v2142, %v2134
    %v2471 = vpack.c.b16 %v2143, %v2135
    %v2472 = vpack.c.b16 %v2144, %v2136
    %v2473 = vpack.c.b16 %v2145, %v2137
    %v2474 = vpack.c.b16 %v2146, %v2138
    %v2475 = vpack.c.b16 %v2147, %v2139
    %v2476 = vpack.c.b16 %v2148, %v2140
    %v2477 = vpack.c.b16 %v2157, %v2149
    %v2478 = vpack.c.b16 %v2158, %v2150
    %v2479 = vpack.c.b16 %v2159, %v2151
    %v2480 = vpack.c.b16 %v2160, %v2152
    %v2481 = vpack.c.b16 %v2161, %v2153
    %v2482 = vpack.c.b16 %v2162, %v2154
    %v2483 = vpack.c.b16 %v2163, %v2155
    %v2484 = vpack.c.b16 %v2164, %v2156
    %v2485 = vpack.c.b16 %v2173, %v2165
    %v2486 = vpack.c.b16 %v2174, %v2166
    %v2487 = vpack.c.b16 %v2175, %v2167
    %v2488 = vpack.c.b16 %v2176, %v2168
    %v2489 = vpack.c.b16 %v2177, %v2169
    %v2490 = vpack.c.b16 %v2178, %v2170
    %v2491 = vpack.c.b16 %v2179, %v2171
    %v2492 = vpack.c.b16 %v2180, %v2172
    %v2493 = vpack.c.b16 %v2189, %v2181
    %v2494 = vpack.c.b16 %v2190, %v2182
    %v2495 = vpack.c.b16 %v2191, %v2183
    %v2496 = vpack.c.b16 %v2192, %v2184
    %v2497 = vpack.c.b16 %v2193, %v2185
    %v2498 = vpack.c.b16 %v2194, %v2186
    %v2499 = vpack.c.b16 %v2195, %v2187
    %v2500 = vpack.c.b16 %v2196, %v2188
    %v2501 = vpack.c.b16 %v2205, %v2197
    %v2502 = vpack.c.b16 %v2206, %v2198
    %v2503 = vpack.c.b16 %v2207, %v2199
    %v2504 = vpack.c.b16 %v2208, %v2200
    %v2505 = vpack.c.b16 %v2209, %v2201
    %v2506 = vpack.c.b16 %v2210, %v2202
    %v2507 = vpack.c.b16 %v2211, %v2203
    %v2508 = vpack.c.b16 %v2212, %v2204
    %v2509 = vpack.c.b16 %v2221, %v2213
    %v2510 = vpack.c.b16 %v2222, %v2214
    %v2511 = vpack.c.b16 %v2223, %v2215
    %v2512 = vpack.c.b16 %v2224, %v2216
    %v2513 = vpack.c.b16 %v2225, %v2217
    %v2514 = vpack.c.b16 %v2226, %v2218
    %v2515 = vpack.c.b16 %v2227, %v2219
    %v2516 = vpack.c.b16 %v2228, %v2220
    %v2517 = vpack.c.b16 %v2237, %v2229
    %v2518 = vpack.c.b16 %v2238, %v2230
    %v2519 = vpack.c.b16 %v2239, %v2231
    %v2520 = vpack.c.b16 %v2240, %v2232
    %v2521 = vpack.c.b16 %v2241, %v2233
    %v2522 = vpack.c.b16 %v2242, %v2234
    %v2523 = vpack.c.b16 %v2243, %v2235
    %v2524 = vpack.c.b16 %v2244, %v2236
    %v2525 = vpack.c.b16 %v2253, %v2245
    %v2526 = vpack.c.b16 %v2254, %v2246
    %v2527 = vpack.c.b16 %v2255, %v2247
    %v2528 = vpack.c.b16 %v2256, %v2248
    %v2529 = vpack.c.b16 %v2257, %v2249
    %v2530 = vpack.c.b16 %v2258, %v2250
    %v2531 = vpack.c.b16 %v2259, %v2251
    %v2532 = vpack.c.b16 %v2260, %v2252
    %v2533 = vpack.c.b16 %v2269, %v2261
    %v2534 = vpack.c.b16 %v2270, %v2262
    %v2535 = vpack.c.b16 %v2271, %v2263
    %v2536 = vpack.c.b16 %v2272, %v2264
    %v2537 = vpack.c.b16 %v2273, %v2265
    %v2538 = vpack.c.b16 %v2274, %v2266
    %v2539 = vpack.c.b16 %v2275, %v2267
    %v2540 = vpack.c.b16 %v2276, %v2268
    %v2541 = vpack.c.b16 %v2285, %v2277
    %v2542 = vpack.c.b16 %v2286, %v2278
    %v2543 = vpack.c.b16 %v2287, %v2279
    %v2544 = vpack.c.b16 %v2288, %v2280
    %v2545 = vpack.c.b16 %v2289, %v2281
    %v2546 = vpack.c.b16 %v2290, %v2282
    %v2547 = vpack.c.b16 %v2291, %v2283
    %v2548 = vpack.c.b16 %v2292, %v2284
    %2805 = vmatpush.bf16.msra.mxu0 %v2349
    %2806 = vmatpush.bf16.msra.mxu0 %v2341
    %2807 = vmatpush.bf16.msra.mxu0 %v2333
    %2808 = vmatpush.bf16.msra.mxu0 %v2325
    %2809 = vmatpush.bf16.msra.mxu0 %v2317
    %2810 = vmatpush.bf16.msra.mxu0 %v2309
    %2811 = vmatpush.bf16.msra.mxu0 %v2301
    %2812 = vmatpush.bf16.msra.mxu0 %v2293
    %2813 = vmatmul.bf16.gmra.mxu0 %v1504
    %v2814 = vpop.f32.mrf.mxu0
    %v2815 = vadd.f32 %v1509, %v2814
    %v2816 = vpop.f32.mrf.mxu0
    %2817 = vdwg.mxu0
    %2818 = vmatpush.bf16.msra.mxu0 %v2413
    %2819 = vmatpush.bf16.msra.mxu0 %v2405
    %2820 = vmatpush.bf16.msra.mxu0 %v2397
    %2821 = vmatpush.bf16.msra.mxu0 %v2389
    %2822 = vmatpush.bf16.msra.mxu0 %v2381
    %2823 = vmatpush.bf16.msra.mxu0 %v2373
    %2824 = vmatpush.bf16.msra.mxu0 %v2365
    %2825 = vmatpush.bf16.msra.mxu0 %v2357
    %2826 = vmatmul.bf16.gmra.mxu0 %v1505
    %v2827 = vpop.f32.mrf.mxu0
    %v2828 = vadd.f32 %v2815, %v2827
    %v2829 = vpop.f32.mrf.mxu0
    %2830 = vdwg.mxu0
    %2831 = vmatpush.bf16.msra.mxu0 %v2477
    %2832 = vmatpush.bf16.msra.mxu0 %v2469
    %2833 = vmatpush.bf16.msra.mxu0 %v2461
    %2834 = vmatpush.bf16.msra.mxu0 %v2453
    %2835 = vmatpush.bf16.msra.mxu0 %v2445
    %2836 = vmatpush.bf16.msra.mxu0 %v2437
    %2837 = vmatpush.bf16.msra.mxu0 %v2429
    %2838 = vmatpush.bf16.msra.mxu0 %v2421
    %2839 = vmatmul.bf16.gmra.mxu0 %v1506
    %v2840 = vpop.f32.mrf.mxu0
    %v2841 = vadd.f32 %v2828, %v2840
    %v2842 = vpop.f32.mrf.mxu0
    %2843 = vdwg.mxu0
    %2844 = vmatpush.bf16.msra.mxu0 %v2541
    %2845 = vmatpush.bf16.msra.mxu0 %v2533
    %2846 = vmatpush.bf16.msra.mxu0 %v2525
    %2847 = vmatpush.bf16.msra.mxu0 %v2517
    %2848 = vmatpush.bf16.msra.mxu0 %v2509
    %2849 = vmatpush.bf16.msra.mxu0 %v2501
    %2850 = vmatpush.bf16.msra.mxu0 %v2493
    %2851 = vmatpush.bf16.msra.mxu0 %v2485
    %2852 = vmatmul.bf16.gmra.mxu0 %v1507
    %v2853 = vpop.f32.mrf.mxu0
    %v2854 = vadd.f32 %v2841, %v2853
    %v2855 = vpop.f32.mrf.mxu0
    %2856 = vdwg.mxu0
    %2857 = vmatpush.bf16.msra.mxu0 %v2350
    %2858 = vmatpush.bf16.msra.mxu0 %v2342
    %2859 = vmatpush.bf16.msra.mxu0 %v2334
    %2860 = vmatpush.bf16.msra.mxu0 %v2326
    %2861 = vmatpush.bf16.msra.mxu0 %v2318
    %2862 = vmatpush.bf16.msra.mxu0 %v2310
    %2863 = vmatpush.bf16.msra.mxu0 %v2302
    %2864 = vmatpush.bf16.msra.mxu0 %v2294
    %2865 = vmatmul.bf16.gmra.mxu0 %v1504
    %v2866 = vpop.f32.mrf.mxu0
    %v2867 = vadd.f32 %v1510, %v2866
    %v2868 = vpop.f32.mrf.mxu0
    %2869 = vdwg.mxu0
    %2870 = vmatpush.bf16.msra.mxu0 %v2414
    %2871 = vmatpush.bf16.msra.mxu0 %v2406
    %2872 = vmatpush.bf16.msra.mxu0 %v2398
    %2873 = vmatpush.bf16.msra.mxu0 %v2390
    %2874 = vmatpush.bf16.msra.mxu0 %v2382
    %2875 = vmatpush.bf16.msra.mxu0 %v2374
    %2876 = vmatpush.bf16.msra.mxu0 %v2366
    %2877 = vmatpush.bf16.msra.mxu0 %v2358
    %2878 = vmatmul.bf16.gmra.mxu0 %v1505
    %v2879 = vpop.f32.mrf.mxu0
    %v2880 = vadd.f32 %v2867, %v2879
    %v2881 = vpop.f32.mrf.mxu0
    %2882 = vdwg.mxu0
    %2883 = vmatpush.bf16.msra.mxu0 %v2478
    %2884 = vmatpush.bf16.msra.mxu0 %v2470
    %2885 = vmatpush.bf16.msra.mxu0 %v2462
    %2886 = vmatpush.bf16.msra.mxu0 %v2454
    %2887 = vmatpush.bf16.msra.mxu0 %v2446
    %2888 = vmatpush.bf16.msra.mxu0 %v2438
    %2889 = vmatpush.bf16.msra.mxu0 %v2430
    %2890 = vmatpush.bf16.msra.mxu0 %v2422
    %2891 = vmatmul.bf16.gmra.mxu0 %v1506
    %v2892 = vpop.f32.mrf.mxu0
    %v2893 = vadd.f32 %v2880, %v2892
    %v2894 = vpop.f32.mrf.mxu0
    %2895 = vdwg.mxu0
    %2896 = vmatpush.bf16.msra.mxu0 %v2542
    %2897 = vmatpush.bf16.msra.mxu0 %v2534
    %2898 = vmatpush.bf16.msra.mxu0 %v2526
    %2899 = vmatpush.bf16.msra.mxu0 %v2518
    %2900 = vmatpush.bf16.msra.mxu0 %v2510
    %2901 = vmatpush.bf16.msra.mxu0 %v2502
    %2902 = vmatpush.bf16.msra.mxu0 %v2494
    %2903 = vmatpush.bf16.msra.mxu0 %v2486
    %2904 = vmatmul.bf16.gmra.mxu0 %v1507
    %v2905 = vpop.f32.mrf.mxu0
    %v2906 = vadd.f32 %v2893, %v2905
    %v2907 = vpop.f32.mrf.mxu0
    %2908 = vdwg.mxu0
    %2909 = vmatpush.bf16.msra.mxu0 %v2351
    %2910 = vmatpush.bf16.msra.mxu0 %v2343
    %2911 = vmatpush.bf16.msra.mxu0 %v2335
    %2912 = vmatpush.bf16.msra.mxu0 %v2327
    %2913 = vmatpush.bf16.msra.mxu0 %v2319
    %2914 = vmatpush.bf16.msra.mxu0 %v2311
    %2915 = vmatpush.bf16.msra.mxu0 %v2303
    %2916 = vmatpush.bf16.msra.mxu0 %v2295
    %2917 = vmatmul.bf16.gmra.mxu0 %v1504
    %v2918 = vpop.f32.mrf.mxu0
    %v2919 = vadd.f32 %v1511, %v2918
    %v2920 = vpop.f32.mrf.mxu0
    %2921 = vdwg.mxu0
    %2922 = vmatpush.bf16.msra.mxu0 %v2415
    %2923 = vmatpush.bf16.msra.mxu0 %v2407
    %2924 = vmatpush.bf16.msra.mxu0 %v2399
    %2925 = vmatpush.bf16.msra.mxu0 %v2391
    %2926 = vmatpush.bf16.msra.mxu0 %v2383
    %2927 = vmatpush.bf16.msra.mxu0 %v2375
    %2928 = vmatpush.bf16.msra.mxu0 %v2367
    %2929 = vmatpush.bf16.msra.mxu0 %v2359
    %2930 = vmatmul.bf16.gmra.mxu0 %v1505
    %v2931 = vpop.f32.mrf.mxu0
    %v2932 = vadd.f32 %v2919, %v2931
    %v2933 = vpop.f32.mrf.mxu0
    %2934 = vdwg.mxu0
    %2935 = vmatpush.bf16.msra.mxu0 %v2479
    %2936 = vmatpush.bf16.msra.mxu0 %v2471
    %2937 = vmatpush.bf16.msra.mxu0 %v2463
    %2938 = vmatpush.bf16.msra.mxu0 %v2455
    %2939 = vmatpush.bf16.msra.mxu0 %v2447
    %2940 = vmatpush.bf16.msra.mxu0 %v2439
    %2941 = vmatpush.bf16.msra.mxu0 %v2431
    %2942 = vmatpush.bf16.msra.mxu0 %v2423
    %2943 = vmatmul.bf16.gmra.mxu0 %v1506
    %v2944 = vpop.f32.mrf.mxu0
    %v2945 = vadd.f32 %v2932, %v2944
    %v2946 = vpop.f32.mrf.mxu0
    %2947 = vdwg.mxu0
    %2948 = vmatpush.bf16.msra.mxu0 %v2543
    %2949 = vmatpush.bf16.msra.mxu0 %v2535
    %2950 = vmatpush.bf16.msra.mxu0 %v2527
    %2951 = vmatpush.bf16.msra.mxu0 %v2519
    %2952 = vmatpush.bf16.msra.mxu0 %v2511
    %2953 = vmatpush.bf16.msra.mxu0 %v2503
    %2954 = vmatpush.bf16.msra.mxu0 %v2495
    %2955 = vmatpush.bf16.msra.mxu0 %v2487
    %2956 = vmatmul.bf16.gmra.mxu0 %v1507
    %v2957 = vpop.f32.mrf.mxu0
    %v2958 = vadd.f32 %v2945, %v2957
    %v2959 = vpop.f32.mrf.mxu0
    %2960 = vdwg.mxu0
    %2961 = vmatpush.bf16.msra.mxu0 %v2352
    %2962 = vmatpush.bf16.msra.mxu0 %v2344
    %2963 = vmatpush.bf16.msra.mxu0 %v2336
    %2964 = vmatpush.bf16.msra.mxu0 %v2328
    %2965 = vmatpush.bf16.msra.mxu0 %v2320
    %2966 = vmatpush.bf16.msra.mxu0 %v2312
    %2967 = vmatpush.bf16.msra.mxu0 %v2304
    %2968 = vmatpush.bf16.msra.mxu0 %v2296
    %2969 = vmatmul.bf16.gmra.mxu0 %v1504
    %v2970 = vpop.f32.mrf.mxu0
    %v2971 = vadd.f32 %v1512, %v2970
    %v2972 = vpop.f32.mrf.mxu0
    %2973 = vdwg.mxu0
    %2974 = vmatpush.bf16.msra.mxu0 %v2416
    %2975 = vmatpush.bf16.msra.mxu0 %v2408
    %2976 = vmatpush.bf16.msra.mxu0 %v2400
    %2977 = vmatpush.bf16.msra.mxu0 %v2392
    %2978 = vmatpush.bf16.msra.mxu0 %v2384
    %2979 = vmatpush.bf16.msra.mxu0 %v2376
    %2980 = vmatpush.bf16.msra.mxu0 %v2368
    %2981 = vmatpush.bf16.msra.mxu0 %v2360
    %2982 = vmatmul.bf16.gmra.mxu0 %v1505
    %v2983 = vpop.f32.mrf.mxu0
    %v2984 = vadd.f32 %v2971, %v2983
    %v2985 = vpop.f32.mrf.mxu0
    %2986 = vdwg.mxu0
    %2987 = vmatpush.bf16.msra.mxu0 %v2480
    %2988 = vmatpush.bf16.msra.mxu0 %v2472
    %2989 = vmatpush.bf16.msra.mxu0 %v2464
    %2990 = vmatpush.bf16.msra.mxu0 %v2456
    %2991 = vmatpush.bf16.msra.mxu0 %v2448
    %2992 = vmatpush.bf16.msra.mxu0 %v2440
    %2993 = vmatpush.bf16.msra.mxu0 %v2432
    %2994 = vmatpush.bf16.msra.mxu0 %v2424
    %2995 = vmatmul.bf16.gmra.mxu0 %v1506
    %v2996 = vpop.f32.mrf.mxu0
    %v2997 = vadd.f32 %v2984, %v2996
    %v2998 = vpop.f32.mrf.mxu0
    %2999 = vdwg.mxu0
    %3000 = vmatpush.bf16.msra.mxu0 %v2544
    %3001 = vmatpush.bf16.msra.mxu0 %v2536
    %3002 = vmatpush.bf16.msra.mxu0 %v2528
    %3003 = vmatpush.bf16.msra.mxu0 %v2520
    %3004 = vmatpush.bf16.msra.mxu0 %v2512
    %3005 = vmatpush.bf16.msra.mxu0 %v2504
    %3006 = vmatpush.bf16.msra.mxu0 %v2496
    %3007 = vmatpush.bf16.msra.mxu0 %v2488
    %3008 = vmatmul.bf16.gmra.mxu0 %v1507
    %v3009 = vpop.f32.mrf.mxu0
    %v3010 = vadd.f32 %v2997, %v3009
    %v3011 = vpop.f32.mrf.mxu0
    %3012 = vdwg.mxu0
    %3013 = vmatpush.bf16.msra.mxu0 %v2353
    %3014 = vmatpush.bf16.msra.mxu0 %v2345
    %3015 = vmatpush.bf16.msra.mxu0 %v2337
    %3016 = vmatpush.bf16.msra.mxu0 %v2329
    %3017 = vmatpush.bf16.msra.mxu0 %v2321
    %3018 = vmatpush.bf16.msra.mxu0 %v2313
    %3019 = vmatpush.bf16.msra.mxu0 %v2305
    %3020 = vmatpush.bf16.msra.mxu0 %v2297
    %3021 = vmatmul.bf16.gmra.mxu0 %v1504
    %v3022 = vpop.f32.mrf.mxu0
    %v3023 = vadd.f32 %v1513, %v3022
    %v3024 = vpop.f32.mrf.mxu0
    %3025 = vdwg.mxu0
    %3026 = vmatpush.bf16.msra.mxu0 %v2417
    %3027 = vmatpush.bf16.msra.mxu0 %v2409
    %3028 = vmatpush.bf16.msra.mxu0 %v2401
    %3029 = vmatpush.bf16.msra.mxu0 %v2393
    %3030 = vmatpush.bf16.msra.mxu0 %v2385
    %3031 = vmatpush.bf16.msra.mxu0 %v2377
    %3032 = vmatpush.bf16.msra.mxu0 %v2369
    %3033 = vmatpush.bf16.msra.mxu0 %v2361
    %3034 = vmatmul.bf16.gmra.mxu0 %v1505
    %v3035 = vpop.f32.mrf.mxu0
    %v3036 = vadd.f32 %v3023, %v3035
    %v3037 = vpop.f32.mrf.mxu0
    %3038 = vdwg.mxu0
    %3039 = vmatpush.bf16.msra.mxu0 %v2481
    %3040 = vmatpush.bf16.msra.mxu0 %v2473
    %3041 = vmatpush.bf16.msra.mxu0 %v2465
    %3042 = vmatpush.bf16.msra.mxu0 %v2457
    %3043 = vmatpush.bf16.msra.mxu0 %v2449
    %3044 = vmatpush.bf16.msra.mxu0 %v2441
    %3045 = vmatpush.bf16.msra.mxu0 %v2433
    %3046 = vmatpush.bf16.msra.mxu0 %v2425
    %3047 = vmatmul.bf16.gmra.mxu0 %v1506
    %v3048 = vpop.f32.mrf.mxu0
    %v3049 = vadd.f32 %v3036, %v3048
    %v3050 = vpop.f32.mrf.mxu0
    %3051 = vdwg.mxu0
    %3052 = vmatpush.bf16.msra.mxu0 %v2545
    %3053 = vmatpush.bf16.msra.mxu0 %v2537
    %3054 = vmatpush.bf16.msra.mxu0 %v2529
    %3055 = vmatpush.bf16.msra.mxu0 %v2521
    %3056 = vmatpush.bf16.msra.mxu0 %v2513
    %3057 = vmatpush.bf16.msra.mxu0 %v2505
    %3058 = vmatpush.bf16.msra.mxu0 %v2497
    %3059 = vmatpush.bf16.msra.mxu0 %v2489
    %3060 = vmatmul.bf16.gmra.mxu0 %v1507
    %v3061 = vpop.f32.mrf.mxu0
    %v3062 = vadd.f32 %v3049, %v3061
    %v3063 = vpop.f32.mrf.mxu0
    %3064 = vdwg.mxu0
    %3065 = vmatpush.bf16.msra.mxu0 %v2354
    %3066 = vmatpush.bf16.msra.mxu0 %v2346
    %3067 = vmatpush.bf16.msra.mxu0 %v2338
    %3068 = vmatpush.bf16.msra.mxu0 %v2330
    %3069 = vmatpush.bf16.msra.mxu0 %v2322
    %3070 = vmatpush.bf16.msra.mxu0 %v2314
    %3071 = vmatpush.bf16.msra.mxu0 %v2306
    %3072 = vmatpush.bf16.msra.mxu0 %v2298
    %3073 = vmatmul.bf16.gmra.mxu0 %v1504
    %v3074 = vpop.f32.mrf.mxu0
    %v3075 = vadd.f32 %v1514, %v3074
    %v3076 = vpop.f32.mrf.mxu0
    %3077 = vdwg.mxu0
    %3078 = vmatpush.bf16.msra.mxu0 %v2418
    %3079 = vmatpush.bf16.msra.mxu0 %v2410
    %3080 = vmatpush.bf16.msra.mxu0 %v2402
    %3081 = vmatpush.bf16.msra.mxu0 %v2394
    %3082 = vmatpush.bf16.msra.mxu0 %v2386
    %3083 = vmatpush.bf16.msra.mxu0 %v2378
    %3084 = vmatpush.bf16.msra.mxu0 %v2370
    %3085 = vmatpush.bf16.msra.mxu0 %v2362
    %3086 = vmatmul.bf16.gmra.mxu0 %v1505
    %v3087 = vpop.f32.mrf.mxu0
    %v3088 = vadd.f32 %v3075, %v3087
    %v3089 = vpop.f32.mrf.mxu0
    %3090 = vdwg.mxu0
    %3091 = vmatpush.bf16.msra.mxu0 %v2482
    %3092 = vmatpush.bf16.msra.mxu0 %v2474
    %3093 = vmatpush.bf16.msra.mxu0 %v2466
    %3094 = vmatpush.bf16.msra.mxu0 %v2458
    %3095 = vmatpush.bf16.msra.mxu0 %v2450
    %3096 = vmatpush.bf16.msra.mxu0 %v2442
    %3097 = vmatpush.bf16.msra.mxu0 %v2434
    %3098 = vmatpush.bf16.msra.mxu0 %v2426
    %3099 = vmatmul.bf16.gmra.mxu0 %v1506
    %v3100 = vpop.f32.mrf.mxu0
    %v3101 = vadd.f32 %v3088, %v3100
    %v3102 = vpop.f32.mrf.mxu0
    %3103 = vdwg.mxu0
    %3104 = vmatpush.bf16.msra.mxu0 %v2546
    %3105 = vmatpush.bf16.msra.mxu0 %v2538
    %3106 = vmatpush.bf16.msra.mxu0 %v2530
    %3107 = vmatpush.bf16.msra.mxu0 %v2522
    %3108 = vmatpush.bf16.msra.mxu0 %v2514
    %3109 = vmatpush.bf16.msra.mxu0 %v2506
    %3110 = vmatpush.bf16.msra.mxu0 %v2498
    %3111 = vmatpush.bf16.msra.mxu0 %v2490
    %3112 = vmatmul.bf16.gmra.mxu0 %v1507
    %v3113 = vpop.f32.mrf.mxu0
    %v3114 = vadd.f32 %v3101, %v3113
    %v3115 = vpop.f32.mrf.mxu0
    %3116 = vdwg.mxu0
    %3117 = vmatpush.bf16.msra.mxu0 %v2355
    %3118 = vmatpush.bf16.msra.mxu0 %v2347
    %3119 = vmatpush.bf16.msra.mxu0 %v2339
    %3120 = vmatpush.bf16.msra.mxu0 %v2331
    %3121 = vmatpush.bf16.msra.mxu0 %v2323
    %3122 = vmatpush.bf16.msra.mxu0 %v2315
    %3123 = vmatpush.bf16.msra.mxu0 %v2307
    %3124 = vmatpush.bf16.msra.mxu0 %v2299
    %3125 = vmatmul.bf16.gmra.mxu0 %v1504
    %v3126 = vpop.f32.mrf.mxu0
    %v3127 = vadd.f32 %v1515, %v3126
    %v3128 = vpop.f32.mrf.mxu0
    %3129 = vdwg.mxu0
    %3130 = vmatpush.bf16.msra.mxu0 %v2419
    %3131 = vmatpush.bf16.msra.mxu0 %v2411
    %3132 = vmatpush.bf16.msra.mxu0 %v2403
    %3133 = vmatpush.bf16.msra.mxu0 %v2395
    %3134 = vmatpush.bf16.msra.mxu0 %v2387
    %3135 = vmatpush.bf16.msra.mxu0 %v2379
    %3136 = vmatpush.bf16.msra.mxu0 %v2371
    %3137 = vmatpush.bf16.msra.mxu0 %v2363
    %3138 = vmatmul.bf16.gmra.mxu0 %v1505
    %v3139 = vpop.f32.mrf.mxu0
    %v3140 = vadd.f32 %v3127, %v3139
    %v3141 = vpop.f32.mrf.mxu0
    %3142 = vdwg.mxu0
    %3143 = vmatpush.bf16.msra.mxu0 %v2483
    %3144 = vmatpush.bf16.msra.mxu0 %v2475
    %3145 = vmatpush.bf16.msra.mxu0 %v2467
    %3146 = vmatpush.bf16.msra.mxu0 %v2459
    %3147 = vmatpush.bf16.msra.mxu0 %v2451
    %3148 = vmatpush.bf16.msra.mxu0 %v2443
    %3149 = vmatpush.bf16.msra.mxu0 %v2435
    %3150 = vmatpush.bf16.msra.mxu0 %v2427
    %3151 = vmatmul.bf16.gmra.mxu0 %v1506
    %v3152 = vpop.f32.mrf.mxu0
    %v3153 = vadd.f32 %v3140, %v3152
    %v3154 = vpop.f32.mrf.mxu0
    %3155 = vdwg.mxu0
    %3156 = vmatpush.bf16.msra.mxu0 %v2547
    %3157 = vmatpush.bf16.msra.mxu0 %v2539
    %3158 = vmatpush.bf16.msra.mxu0 %v2531
    %3159 = vmatpush.bf16.msra.mxu0 %v2523
    %3160 = vmatpush.bf16.msra.mxu0 %v2515
    %3161 = vmatpush.bf16.msra.mxu0 %v2507
    %3162 = vmatpush.bf16.msra.mxu0 %v2499
    %3163 = vmatpush.bf16.msra.mxu0 %v2491
    %3164 = vmatmul.bf16.gmra.mxu0 %v1507
    %v3165 = vpop.f32.mrf.mxu0
    %v3166 = vadd.f32 %v3153, %v3165
    %v3167 = vpop.f32.mrf.mxu0
    %3168 = vdwg.mxu0
    %3169 = vmatpush.bf16.msra.mxu0 %v2356
    %3170 = vmatpush.bf16.msra.mxu0 %v2348
    %3171 = vmatpush.bf16.msra.mxu0 %v2340
    %3172 = vmatpush.bf16.msra.mxu0 %v2332
    %3173 = vmatpush.bf16.msra.mxu0 %v2324
    %3174 = vmatpush.bf16.msra.mxu0 %v2316
    %3175 = vmatpush.bf16.msra.mxu0 %v2308
    %3176 = vmatpush.bf16.msra.mxu0 %v2300
    %3177 = vmatmul.bf16.gmra.mxu0 %v1504
    %v3178 = vpop.f32.mrf.mxu0
    %v3179 = vadd.f32 %v1516, %v3178
    %v3180 = vpop.f32.mrf.mxu0
    %3181 = vdwg.mxu0
    %3182 = vmatpush.bf16.msra.mxu0 %v2420
    %3183 = vmatpush.bf16.msra.mxu0 %v2412
    %3184 = vmatpush.bf16.msra.mxu0 %v2404
    %3185 = vmatpush.bf16.msra.mxu0 %v2396
    %3186 = vmatpush.bf16.msra.mxu0 %v2388
    %3187 = vmatpush.bf16.msra.mxu0 %v2380
    %3188 = vmatpush.bf16.msra.mxu0 %v2372
    %3189 = vmatpush.bf16.msra.mxu0 %v2364
    %3190 = vmatmul.bf16.gmra.mxu0 %v1505
    %v3191 = vpop.f32.mrf.mxu0
    %v3192 = vadd.f32 %v3179, %v3191
    %v3193 = vpop.f32.mrf.mxu0
    %3194 = vdwg.mxu0
    %3195 = vmatpush.bf16.msra.mxu0 %v2484
    %3196 = vmatpush.bf16.msra.mxu0 %v2476
    %3197 = vmatpush.bf16.msra.mxu0 %v2468
    %3198 = vmatpush.bf16.msra.mxu0 %v2460
    %3199 = vmatpush.bf16.msra.mxu0 %v2452
    %3200 = vmatpush.bf16.msra.mxu0 %v2444
    %3201 = vmatpush.bf16.msra.mxu0 %v2436
    %3202 = vmatpush.bf16.msra.mxu0 %v2428
    %3203 = vmatmul.bf16.gmra.mxu0 %v1506
    %v3204 = vpop.f32.mrf.mxu0
    %v3205 = vadd.f32 %v3192, %v3204
    %v3206 = vpop.f32.mrf.mxu0
    %3207 = vdwg.mxu0
    %3208 = vmatpush.bf16.msra.mxu0 %v2548
    %3209 = vmatpush.bf16.msra.mxu0 %v2540
    %3210 = vmatpush.bf16.msra.mxu0 %v2532
    %3211 = vmatpush.bf16.msra.mxu0 %v2524
    %3212 = vmatpush.bf16.msra.mxu0 %v2516
    %3213 = vmatpush.bf16.msra.mxu0 %v2508
    %3214 = vmatpush.bf16.msra.mxu0 %v2500
    %3215 = vmatpush.bf16.msra.mxu0 %v2492
    %3216 = vmatmul.bf16.gmra.mxu0 %v1507
    %v3217 = vpop.f32.mrf.mxu0
    %v3218 = vadd.f32 %v3205, %v3217
    %v3219 = vpop.f32.mrf.mxu0
    %3220 = vdwg.mxu0
    %v3221 = vld [vmem:[#allocation22] sm:$0xff]
    %v3222 = vld [vmem:[#allocation23] sm:$0xff]
    %v3223 = vsel %vm492, %v2854, 0.0
    %v3224 = vsel %vm492, %v2906, 0.0
    %v3225 = vsel %vm492, %v2958, 0.0
    %v3226 = vsel %vm492, %v3010, 0.0
    %v3227 = vsel %vm492, %v3062, 0.0
    %v3228 = vsel %vm492, %v3114, 0.0
    %v3229 = vsel %vm492, %v3166, 0.0
    %v3230 = vsel %vm492, %v3218, 0.0
    %v3231 = vrot.slane %v3223, 4
    %v3232 = vadd.f32 %v3223, %v3231
    %v3233 = vrot.slane %v3232, 2
    %v3234 = vadd.f32 %v3232, %v3233
    %v3235 = vrot.slane %v3234, 1
    %v3236 = vadd.f32 %v3234, %v3235
    %v3237 = vrot.slane %v3224, 4
    %v3238 = vadd.f32 %v3224, %v3237
    %v3239 = vrot.slane %v3238, 2
    %v3240 = vadd.f32 %v3238, %v3239
    %v3241 = vrot.slane %v3240, 1
    %v3242 = vadd.f32 %v3240, %v3241
    %v3243 = vrot.slane %v3225, 4
    %v3244 = vadd.f32 %v3225, %v3243
    %v3245 = vrot.slane %v3244, 2
    %v3246 = vadd.f32 %v3244, %v3245
    %v3247 = vrot.slane %v3246, 1
    %v3248 = vadd.f32 %v3246, %v3247
    %v3249 = vrot.slane %v3226, 4
    %v3250 = vadd.f32 %v3226, %v3249
    %v3251 = vrot.slane %v3250, 2
    %v3252 = vadd.f32 %v3250, %v3251
    %v3253 = vrot.slane %v3252, 1
    %v3254 = vadd.f32 %v3252, %v3253
    %v3255 = vrot.slane %v3227, 4
    %v3256 = vadd.f32 %v3227, %v3255
    %v3257 = vrot.slane %v3256, 2
    %v3258 = vadd.f32 %v3256, %v3257
    %v3259 = vrot.slane %v3258, 1
    %v3260 = vadd.f32 %v3258, %v3259
    %v3261 = vrot.slane %v3228, 4
    %v3262 = vadd.f32 %v3228, %v3261
    %v3263 = vrot.slane %v3262, 2
    %v3264 = vadd.f32 %v3262, %v3263
    %v3265 = vrot.slane %v3264, 1
    %v3266 = vadd.f32 %v3264, %v3265
    %v3267 = vrot.slane %v3229, 4
    %v3268 = vadd.f32 %v3229, %v3267
    %v3269 = vrot.slane %v3268, 2
    %v3270 = vadd.f32 %v3268, %v3269
    %v3271 = vrot.slane %v3270, 1
    %v3272 = vadd.f32 %v3270, %v3271
    %v3273 = vrot.slane %v3230, 4
    %v3274 = vadd.f32 %v3230, %v3273
    %v3275 = vrot.slane %v3274, 2
    %v3276 = vadd.f32 %v3274, %v3275
    %v3277 = vrot.slane %v3276, 1
    %v3278 = vadd.f32 %v3276, %v3277
    %v3279 = vmul.f32 %v3223, %v3223
    %v3280 = vmul.f32 %v3224, %v3224
    %v3281 = vmul.f32 %v3225, %v3225
    %v3282 = vmul.f32 %v3226, %v3226
    %v3283 = vmul.f32 %v3227, %v3227
    %v3284 = vmul.f32 %v3228, %v3228
    %v3285 = vmul.f32 %v3229, %v3229
    %v3286 = vmul.f32 %v3230, %v3230
    %v3287 = vrot.slane %v3279, 4
    %v3288 = vadd.f32 %v3279, %v3287
    %v3289 = vrot.slane %v3288, 2
    %v3290 = vadd.f32 %v3288, %v3289
    %v3291 = vrot.slane %v3290, 1
    %v3292 = vadd.f32 %v3290, %v3291
    %v3293 = vrot.slane %v3280, 4
    %v3294 = vadd.f32 %v3280, %v3293
    %v3295 = vrot.slane %v3294, 2
    %v3296 = vadd.f32 %v3294, %v3295
    %v3297 = vrot.slane %v3296, 1
    %v3298 = vadd.f32 %v3296, %v3297
    %v3299 = vrot.slane %v3281, 4
    %v3300 = vadd.f32 %v3281, %v3299
    %v3301 = vrot.slane %v3300, 2
    %v3302 = vadd.f32 %v3300, %v3301
    %v3303 = vrot.slane %v3302, 1
    %v3304 = vadd.f32 %v3302, %v3303
    %v3305 = vrot.slane %v3282, 4
    %v3306 = vadd.f32 %v3282, %v3305
    %v3307 = vrot.slane %v3306, 2
    %v3308 = vadd.f32 %v3306, %v3307
    %v3309 = vrot.slane %v3308, 1
    %v3310 = vadd.f32 %v3308, %v3309
    %v3311 = vrot.slane %v3283, 4
    %v3312 = vadd.f32 %v3283, %v3311
    %v3313 = vrot.slane %v3312, 2
    %v3314 = vadd.f32 %v3312, %v3313
    %v3315 = vrot.slane %v3314, 1
    %v3316 = vadd.f32 %v3314, %v3315
    %v3317 = vrot.slane %v3284, 4
    %v3318 = vadd.f32 %v3284, %v3317
    %v3319 = vrot.slane %v3318, 2
    %v3320 = vadd.f32 %v3318, %v3319
    %v3321 = vrot.slane %v3320, 1
    %v3322 = vadd.f32 %v3320, %v3321
    %v3323 = vrot.slane %v3285, 4
    %v3324 = vadd.f32 %v3285, %v3323
    %v3325 = vrot.slane %v3324, 2
    %v3326 = vadd.f32 %v3324, %v3325
    %v3327 = vrot.slane %v3326, 1
    %v3328 = vadd.f32 %v3326, %v3327
    %v3329 = vrot.slane %v3286, 4
    %v3330 = vadd.f32 %v3286, %v3329
    %v3331 = vrot.slane %v3330, 2
    %v3332 = vadd.f32 %v3330, %v3331
    %v3333 = vrot.slane %v3332, 1
    %v3334 = vadd.f32 %v3332, %v3333
    %v3335 = vmul.f32 %v3236, 0.25
    %v3336 = vmul.f32 %v3242, 0.25
    %v3337 = vmul.f32 %v3248, 0.25
    %v3338 = vmul.f32 %v3254, 0.25
    %v3339 = vmul.f32 %v3260, 0.25
    %v3340 = vmul.f32 %v3266, 0.25
    %v3341 = vmul.f32 %v3272, 0.25
    %v3342 = vmul.f32 %v3278, 0.25
    %v3343 = vmul.f32 %v3292, 0.25
    %v3344 = vmul.f32 %v3298, 0.25
    %v3345 = vmul.f32 %v3304, 0.25
    %v3346 = vmul.f32 %v3310, 0.25
    %v3347 = vmul.f32 %v3316, 0.25
    %v3348 = vmul.f32 %v3322, 0.25
    %v3349 = vmul.f32 %v3328, 0.25
    %v3350 = vmul.f32 %v3334, 0.25
    %v3351 = vmul.f32 %v3335, %v3335
    %v3352 = vmul.f32 %v3336, %v3336
    %v3353 = vmul.f32 %v3337, %v3337
    %v3354 = vmul.f32 %v3338, %v3338
    %v3355 = vmul.f32 %v3339, %v3339
    %v3356 = vmul.f32 %v3340, %v3340
    %v3357 = vmul.f32 %v3341, %v3341
    %v3358 = vmul.f32 %v3342, %v3342
    %v3359 = vsub.f32 %v3343, %v3351
    %v3360 = vsub.f32 %v3344, %v3352
    %v3361 = vsub.f32 %v3345, %v3353
    %v3362 = vsub.f32 %v3346, %v3354
    %v3363 = vsub.f32 %v3347, %v3355
    %v3364 = vsub.f32 %v3348, %v3356
    %v3365 = vsub.f32 %v3349, %v3357
    %v3366 = vsub.f32 %v3350, %v3358
    %v3367 = vadd.f32 %v3359, 0.8
    %v3368 = vadd.f32 %v3360, 0.8
    %v3369 = vadd.f32 %v3361, 0.8
    %v3370 = vadd.f32 %v3362, 0.8
    %v3371 = vadd.f32 %v3363, 0.8
    %v3372 = vadd.f32 %v3364, 0.8
    %v3373 = vadd.f32 %v3365, 0.8
    %v3374 = vadd.f32 %v3366, 0.8
    %v3375 = vrsqrt.pop %v3367
    %v3376 = vmul.f32 %v3375, %v3367
    %v3377 = vmul.f32 %v3376, %v3375
    %v3378 = vmul.f32 0.5, %v3377
    %v3379 = vsub.f32 1.5, %v3378
    %v3380 = vmul.f32 %v3375, %v3379
    %vm3381 = vweird.f32 %v3367
    %vm3382 = vweird.f32 %v3375
    %vm3383 = vmor %vm3381, %vm3382
    %v3384 = vsel %vm3383, %v3375, %v3380
    %v3385 = vrsqrt.pop %v3368
    %v3386 = vmul.f32 %v3385, %v3368
    %v3387 = vmul.f32 %v3386, %v3385
    %v3388 = vmul.f32 0.5, %v3387
    %v3389 = vsub.f32 1.5, %v3388
    %v3390 = vmul.f32 %v3385, %v3389
    %vm3391 = vweird.f32 %v3368
    %vm3392 = vweird.f32 %v3385
    %vm3393 = vmor %vm3391, %vm3392
    %v3394 = vsel %vm3393, %v3385, %v3390
    %v3395 = vrsqrt.pop %v3369
    %v3396 = vmul.f32 %v3395, %v3369
    %v3397 = vmul.f32 %v3396, %v3395
    %v3398 = vmul.f32 0.5, %v3397
    %v3399 = vsub.f32 1.5, %v3398
    %v3400 = vmul.f32 %v3395, %v3399
    %vm3401 = vweird.f32 %v3369
    %vm3402 = vweird.f32 %v3395
    %vm3403 = vmor %vm3401, %vm3402
    %v3404 = vsel %vm3403, %v3395, %v3400
    %v3405 = vrsqrt.pop %v3370
    %v3406 = vmul.f32 %v3405, %v3370
    %v3407 = vmul.f32 %v3406, %v3405
    %v3408 = vmul.f32 0.5, %v3407
    %v3409 = vsub.f32 1.5, %v3408
    %v3410 = vmul.f32 %v3405, %v3409
    %vm3411 = vweird.f32 %v3370
    %vm3412 = vweird.f32 %v3405
    %vm3413 = vmor %vm3411, %vm3412
    %v3414 = vsel %vm3413, %v3405, %v3410
    %v3415 = vrsqrt.pop %v3371
    %v3416 = vmul.f32 %v3415, %v3371
    %v3417 = vmul.f32 %v3416, %v3415
    %v3418 = vmul.f32 0.5, %v3417
    %v3419 = vsub.f32 1.5, %v3418
    %v3420 = vmul.f32 %v3415, %v3419
    %vm3421 = vweird.f32 %v3371
    %vm3422 = vweird.f32 %v3415
    %vm3423 = vmor %vm3421, %vm3422
    %v3424 = vsel %vm3423, %v3415, %v3420
    %v3425 = vrsqrt.pop %v3372
    %v3426 = vmul.f32 %v3425, %v3372
    %v3427 = vmul.f32 %v3426, %v3425
    %v3428 = vmul.f32 0.5, %v3427
    %v3429 = vsub.f32 1.5, %v3428
    %v3430 = vmul.f32 %v3425, %v3429
    %vm3431 = vweird.f32 %v3372
    %vm3432 = vweird.f32 %v3425
    %vm3433 = vmor %vm3431, %vm3432
    %v3434 = vsel %vm3433, %v3425, %v3430
    %v3435 = vrsqrt.pop %v3373
    %v3436 = vmul.f32 %v3435, %v3373
    %v3437 = vmul.f32 %v3436, %v3435
    %v3438 = vmul.f32 0.5, %v3437
    %v3439 = vsub.f32 1.5, %v3438
    %v3440 = vmul.f32 %v3435, %v3439
    %vm3441 = vweird.f32 %v3373
    %vm3442 = vweird.f32 %v3435
    %vm3443 = vmor %vm3441, %vm3442
    %v3444 = vsel %vm3443, %v3435, %v3440
    %v3445 = vrsqrt.pop %v3374
    %v3446 = vmul.f32 %v3445, %v3374
    %v3447 = vmul.f32 %v3446, %v3445
    %v3448 = vmul.f32 0.5, %v3447
    %v3449 = vsub.f32 1.5, %v3448
    %v3450 = vmul.f32 %v3445, %v3449
    %vm3451 = vweird.f32 %v3374
    %vm3452 = vweird.f32 %v3445
    %vm3453 = vmor %vm3451, %vm3452
    %v3454 = vsel %vm3453, %v3445, %v3450
    %v3455 = vsub.f32 %v2854, %v3335
    %v3456 = vsub.f32 %v2906, %v3336
    %v3457 = vsub.f32 %v2958, %v3337
    %v3458 = vsub.f32 %v3010, %v3338
    %v3459 = vsub.f32 %v3062, %v3339
    %v3460 = vsub.f32 %v3114, %v3340
    %v3461 = vsub.f32 %v3166, %v3341
    %v3462 = vsub.f32 %v3218, %v3342
    %v3463 = vmul.f32 %v3455, %v3384
    %v3464 = vmul.f32 %v3456, %v3394
    %v3465 = vmul.f32 %v3457, %v3404
    %v3466 = vmul.f32 %v3458, %v3414
    %v3467 = vmul.f32 %v3459, %v3424
    %v3468 = vmul.f32 %v3460, %v3434
    %v3469 = vmul.f32 %v3461, %v3444
    %v3470 = vmul.f32 %v3462, %v3454
    %v3472 = vperm.slane %v3221, 0
    %v3473 = vperm.slane %v3221, 1
    %v3474 = vperm.slane %v3221, 2
    %v3475 = vperm.slane %v3221, 3
    %v3476 = vperm.slane %v3221, 4
    %v3477 = vperm.slane %v3221, 5
    %v3478 = vperm.slane %v3221, 6
    %v3479 = vperm.slane %v3221, 7
    %v3488 = vmul.f32 %v3463, %v3472
    %v3489 = vmul.f32 %v3464, %v3473
    %v3490 = vmul.f32 %v3465, %v3474
    %v3491 = vmul.f32 %v3466, %v3475
    %v3492 = vmul.f32 %v3467, %v3476
    %v3493 = vmul.f32 %v3468, %v3477
    %v3494 = vmul.f32 %v3469, %v3478
    %v3495 = vmul.f32 %v3470, %v3479
    %v3497 = vperm.slane %v3222, 0
    %v3498 = vperm.slane %v3222, 1
    %v3499 = vperm.slane %v3222, 2
    %v3500 = vperm.slane %v3222, 3
    %v3501 = vperm.slane %v3222, 4
    %v3502 = vperm.slane %v3222, 5
    %v3503 = vperm.slane %v3222, 6
    %v3504 = vperm.slane %v3222, 7
    %v3513 = vadd.f32 %v3488, %v3497
    %v3514 = vadd.f32 %v3489, %v3498
    %v3515 = vadd.f32 %v3490, %v3499
    %v3516 = vadd.f32 %v3491, %v3500
    %v3517 = vadd.f32 %v3492, %v3501
    %v3518 = vadd.f32 %v3493, %v3502
    %v3519 = vadd.f32 %v3494, %v3503
    %v3520 = vadd.f32 %v3495, %v3504
    %vm3521 = vcmp.gt.f32.partialorder %v3513, 0.0
    %vm3522 = vcmp.gt.f32.partialorder %v3514, 0.0
    %vm3523 = vcmp.gt.f32.partialorder %v3515, 0.0
    %vm3524 = vcmp.gt.f32.partialorder %v3516, 0.0
    %vm3525 = vcmp.gt.f32.partialorder %v3517, 0.0
    %vm3526 = vcmp.gt.f32.partialorder %v3518, 0.0
    %vm3527 = vcmp.gt.f32.partialorder %v3519, 0.0
    %vm3528 = vcmp.gt.f32.partialorder %v3520, 0.0
    %v3529 = vmul.f32 %v3513, 0.2
    %v3530 = vmul.f32 %v3514, 0.2
    %v3531 = vmul.f32 %v3515, 0.2
    %v3532 = vmul.f32 %v3516, 0.2
    %v3533 = vmul.f32 %v3517, 0.2
    %v3534 = vmul.f32 %v3518, 0.2
    %v3535 = vmul.f32 %v3519, 0.2
    %v3536 = vmul.f32 %v3520, 0.2
    %v3537 = vsel %vm3521, %v3513, %v3529
    %v3538 = vsel %vm3522, %v3514, %v3530
    %v3539 = vsel %vm3523, %v3515, %v3531
    %v3540 = vsel %vm3524, %v3516, %v3532
    %v3541 = vsel %vm3525, %v3517, %v3533
    %v3542 = vsel %vm3526, %v3518, %v3534
    %v3543 = vsel %vm3527, %v3519, %v3535
    %v3544 = vsel %vm3528, %v3520, %v3536
    %s3545 = smul.u32 4, 128
    %s3546 = smul.u32 %s3545, 7
    %s3547 = sshll.u32 %s3546, 4
    %3548 = dma.done %s257, %s3547
    %v3549 = vld [vmem:[#allocation4] sm:$0xff]
    %v3550 = vld [vmem:[#allocation4 + $0x8] sm:$0xff]
    %v3551 = vld [vmem:[#allocation4 + $0x10] sm:$0xff]
    %v3552 = vld [vmem:[#allocation4 + $0x18] sm:$0xf]
    %v3553 = vld [vmem:[#allocation4 + $0x1c] sm:$0xff]
    %v3554 = vld [vmem:[#allocation4 + $0x24] sm:$0xff]
    %v3555 = vld [vmem:[#allocation4 + $0x2c] sm:$0xff]
    %v3556 = vld [vmem:[#allocation4 + $0x34] sm:$0xf]
    %v3557 = vld [vmem:[#allocation4 + $0x38] sm:$0xff]
    %v3558 = vld [vmem:[#allocation4 + $0x40] sm:$0xff]
    %v3559 = vld [vmem:[#allocation4 + $0x48] sm:$0xff]
    %v3560 = vld [vmem:[#allocation4 + $0x50] sm:$0xf]
    %v3561 = vld [vmem:[#allocation4 + $0x54] sm:$0xff]
    %v3562 = vld [vmem:[#allocation4 + $0x5c] sm:$0xff]
    %v3563 = vld [vmem:[#allocation4 + $0x64] sm:$0xff]
    %v3564 = vld [vmem:[#allocation4 + $0x6c] sm:$0xf]
    %v3565 = vld [vmem:[#allocation4 + $0x70] sm:$0xff]
    %v3566 = vld [vmem:[#allocation4 + $0x78] sm:$0xff]
    %v3567 = vld [vmem:[#allocation4 + $0x80] sm:$0xff]
    %v3568 = vld [vmem:[#allocation4 + $0x88] sm:$0xf]
    %v3569 = vld [vmem:[#allocation4 + $0x8c] sm:$0xff]
    %v3570 = vld [vmem:[#allocation4 + $0x94] sm:$0xff]
    %v3571 = vld [vmem:[#allocation4 + $0x9c] sm:$0xff]
    %v3572 = vld [vmem:[#allocation4 + $0xa4] sm:$0xf]
    %v3573 = vld [vmem:[#allocation4 + $0xa8] sm:$0xff]
    %v3574 = vld [vmem:[#allocation4 + $0xb0] sm:$0xff]
    %v3575 = vld [vmem:[#allocation4 + $0xb8] sm:$0xff]
    %v3576 = vld [vmem:[#allocation4 + $0xc0] sm:$0xf]
    %v3577 = vld [vmem:[#allocation4 + $0xc4] sm:$0xff]
    %v3578 = vld [vmem:[#allocation4 + $0xcc] sm:$0xff]
    %v3579 = vld [vmem:[#allocation4 + $0xd4] sm:$0xff]
    %v3580 = vld [vmem:[#allocation4 + $0xdc] sm:$0xf]
    %v3581 = vld [vmem:[#allocation4 + $0xe0] sm:$0xff]
    %v3582 = vld [vmem:[#allocation4 + $0xe8] sm:$0xff]
    %v3583 = vld [vmem:[#allocation4 + $0xf0] sm:$0xff]
    %v3584 = vld [vmem:[#allocation4 + $0xf8] sm:$0xf]
    %v3585 = vld [vmem:[#allocation4 + $0xfc] sm:$0xff]
    %v3586 = vld [vmem:[#allocation4 + $0x104] sm:$0xff]
    %v3587 = vld [vmem:[#allocation4 + $0x10c] sm:$0xff]
    %v3588 = vld [vmem:[#allocation4 + $0x114] sm:$0xf]
    %v3589 = vld [vmem:[#allocation4 + $0x118] sm:$0xff]
    %v3590 = vld [vmem:[#allocation4 + $0x120] sm:$0xff]
    %v3591 = vld [vmem:[#allocation4 + $0x128] sm:$0xff]
    %v3592 = vld [vmem:[#allocation4 + $0x130] sm:$0xf]
    %v3593 = vld [vmem:[#allocation4 + $0x134] sm:$0xff]
    %v3594 = vld [vmem:[#allocation4 + $0x13c] sm:$0xff]
    %v3595 = vld [vmem:[#allocation4 + $0x144] sm:$0xff]
    %v3596 = vld [vmem:[#allocation4 + $0x14c] sm:$0xf]
    %v3597 = vld [vmem:[#allocation4 + $0x150] sm:$0xff]
    %v3598 = vld [vmem:[#allocation4 + $0x158] sm:$0xff]
    %v3599 = vld [vmem:[#allocation4 + $0x160] sm:$0xff]
    %v3600 = vld [vmem:[#allocation4 + $0x168] sm:$0xf]
    %v3601 = vld [vmem:[#allocation4 + $0x16c] sm:$0xff]
    %v3602 = vld [vmem:[#allocation4 + $0x174] sm:$0xff]
    %v3603 = vld [vmem:[#allocation4 + $0x17c] sm:$0xff]
    %v3604 = vld [vmem:[#allocation4 + $0x184] sm:$0xf]
    %v3605 = vld [vmem:[#allocation4 + $0x188] sm:$0xff]
    %v3606 = vld [vmem:[#allocation4 + $0x190] sm:$0xff]
    %v3607 = vld [vmem:[#allocation4 + $0x198] sm:$0xff]
    %v3608 = vld [vmem:[#allocation4 + $0x1a0] sm:$0xf]
    %v3609 = vld [vmem:[#allocation4 + $0x1a4] sm:$0xff]
    %v3610 = vld [vmem:[#allocation4 + $0x1ac] sm:$0xff]
    %v3611 = vld [vmem:[#allocation4 + $0x1b4] sm:$0xff]
    %v3612 = vld [vmem:[#allocation4 + $0x1bc] sm:$0xf]
    %v3613 = vld [vmem:[#allocation4 + $0x1c0] sm:$0xff]
    %v3614 = vld [vmem:[#allocation4 + $0x1c8] sm:$0xff]
    %v3615 = vld [vmem:[#allocation4 + $0x1d0] sm:$0xff]
    %v3616 = vld [vmem:[#allocation4 + $0x1d8] sm:$0xf]
    %v3617 = vld [vmem:[#allocation4 + $0x1dc] sm:$0xff]
    %v3618 = vld [vmem:[#allocation4 + $0x1e4] sm:$0xff]
    %v3619 = vld [vmem:[#allocation4 + $0x1ec] sm:$0xff]
    %v3620 = vld [vmem:[#allocation4 + $0x1f4] sm:$0xf]
    %v3621 = vld [vmem:[#allocation4 + $0x1f8] sm:$0xff]
    %v3622 = vld [vmem:[#allocation4 + $0x200] sm:$0xff]
    %v3623 = vld [vmem:[#allocation4 + $0x208] sm:$0xff]
    %v3624 = vld [vmem:[#allocation4 + $0x210] sm:$0xf]
    %v3625 = vld [vmem:[#allocation4 + $0x214] sm:$0xff]
    %v3626 = vld [vmem:[#allocation4 + $0x21c] sm:$0xff]
    %v3627 = vld [vmem:[#allocation4 + $0x224] sm:$0xff]
    %v3628 = vld [vmem:[#allocation4 + $0x22c] sm:$0xf]
    %v3629 = vld [vmem:[#allocation4 + $0x230] sm:$0xff]
    %v3630 = vld [vmem:[#allocation4 + $0x238] sm:$0xff]
    %v3631 = vld [vmem:[#allocation4 + $0x240] sm:$0xff]
    %v3632 = vld [vmem:[#allocation4 + $0x248] sm:$0xf]
    %v3633 = vld [vmem:[#allocation4 + $0x24c] sm:$0xff]
    %v3634 = vld [vmem:[#allocation4 + $0x254] sm:$0xff]
    %v3635 = vld [vmem:[#allocation4 + $0x25c] sm:$0xff]
    %v3636 = vld [vmem:[#allocation4 + $0x264] sm:$0xf]
    %v3637 = vld [vmem:[#allocation4 + $0x268] sm:$0xff]
    %v3638 = vld [vmem:[#allocation4 + $0x270] sm:$0xff]
    %v3639 = vld [vmem:[#allocation4 + $0x278] sm:$0xff]
    %v3640 = vld [vmem:[#allocation4 + $0x280] sm:$0xf]
    %v3641 = vld [vmem:[#allocation4 + $0x284] sm:$0xff]
    %v3642 = vld [vmem:[#allocation4 + $0x28c] sm:$0xff]
    %v3643 = vld [vmem:[#allocation4 + $0x294] sm:$0xff]
    %v3644 = vld [vmem:[#allocation4 + $0x29c] sm:$0xf]
    %v3645 = vld [vmem:[#allocation4 + $0x2a0] sm:$0xff]
    %v3646 = vld [vmem:[#allocation4 + $0x2a8] sm:$0xff]
    %v3647 = vld [vmem:[#allocation4 + $0x2b0] sm:$0xff]
    %v3648 = vld [vmem:[#allocation4 + $0x2b8] sm:$0xf]
    %v3649 = vld [vmem:[#allocation4 + $0x2bc] sm:$0xff]
    %v3650 = vld [vmem:[#allocation4 + $0x2c4] sm:$0xff]
    %v3651 = vld [vmem:[#allocation4 + $0x2cc] sm:$0xff]
    %v3652 = vld [vmem:[#allocation4 + $0x2d4] sm:$0xf]
    %v3653 = vld [vmem:[#allocation4 + $0x2d8] sm:$0xff]
    %v3654 = vld [vmem:[#allocation4 + $0x2e0] sm:$0xff]
    %v3655 = vld [vmem:[#allocation4 + $0x2e8] sm:$0xff]
    %v3656 = vld [vmem:[#allocation4 + $0x2f0] sm:$0xf]
    %v3657 = vld [vmem:[#allocation4 + $0x2f4] sm:$0xff]
    %v3658 = vld [vmem:[#allocation4 + $0x2fc] sm:$0xff]
    %v3659 = vld [vmem:[#allocation4 + $0x304] sm:$0xff]
    %v3660 = vld [vmem:[#allocation4 + $0x30c] sm:$0xf]
    %v3661 = vld [vmem:[#allocation4 + $0x310] sm:$0xff]
    %v3662 = vld [vmem:[#allocation4 + $0x318] sm:$0xff]
    %v3663 = vld [vmem:[#allocation4 + $0x320] sm:$0xff]
    %v3664 = vld [vmem:[#allocation4 + $0x328] sm:$0xf]
    %v3665 = vld [vmem:[#allocation4 + $0x32c] sm:$0xff]
    %v3666 = vld [vmem:[#allocation4 + $0x334] sm:$0xff]
    %v3667 = vld [vmem:[#allocation4 + $0x33c] sm:$0xff]
    %v3668 = vld [vmem:[#allocation4 + $0x344] sm:$0xf]
    %v3669 = vld [vmem:[#allocation4 + $0x348] sm:$0xff]
    %v3670 = vld [vmem:[#allocation4 + $0x350] sm:$0xff]
    %v3671 = vld [vmem:[#allocation4 + $0x358] sm:$0xff]
    %v3672 = vld [vmem:[#allocation4 + $0x360] sm:$0xf]
    %v3673 = vld [vmem:[#allocation4 + $0x364] sm:$0xff]
    %v3674 = vld [vmem:[#allocation4 + $0x36c] sm:$0xff]
    %v3675 = vld [vmem:[#allocation4 + $0x374] sm:$0xff]
    %v3676 = vld [vmem:[#allocation4 + $0x37c] sm:$0xf]
    %v3677 = vld [vmem:[#allocation4 + $0x380] sm:$0xff]
    %v3678 = vld [vmem:[#allocation4 + $0x388] sm:$0xff]
    %v3679 = vld [vmem:[#allocation4 + $0x390] sm:$0xff]
    %v3680 = vld [vmem:[#allocation4 + $0x398] sm:$0xf]
    %v3681 = vld [vmem:[#allocation4 + $0x39c] sm:$0xff]
    %v3682 = vld [vmem:[#allocation4 + $0x3a4] sm:$0xff]
    %v3683 = vld [vmem:[#allocation4 + $0x3ac] sm:$0xff]
    %v3684 = vld [vmem:[#allocation4 + $0x3b4] sm:$0xf]
    %v3685 = vld [vmem:[#allocation4 + $0x3b8] sm:$0xff]
    %v3686 = vld [vmem:[#allocation4 + $0x3c0] sm:$0xff]
    %v3687 = vld [vmem:[#allocation4 + $0x3c8] sm:$0xff]
    %v3688 = vld [vmem:[#allocation4 + $0x3d0] sm:$0xf]
    %v3689 = vld [vmem:[#allocation4 + $0x3d4] sm:$0xff]
    %v3690 = vld [vmem:[#allocation4 + $0x3dc] sm:$0xff]
    %v3691 = vld [vmem:[#allocation4 + $0x3e4] sm:$0xff]
    %v3692 = vld [vmem:[#allocation4 + $0x3ec] sm:$0xf]
    %v3693 = vld [vmem:[#allocation4 + $0x3f0] sm:$0xff]
    %v3694 = vld [vmem:[#allocation4 + $0x3f8] sm:$0xff]
    %v3695 = vld [vmem:[#allocation4 + $0x400] sm:$0xff]
    %v3696 = vld [vmem:[#allocation4 + $0x408] sm:$0xf]
    %v3697 = vld [vmem:[#allocation4 + $0x40c] sm:$0xff]
    %v3698 = vld [vmem:[#allocation4 + $0x414] sm:$0xff]
    %v3699 = vld [vmem:[#allocation4 + $0x41c] sm:$0xff]
    %v3700 = vld [vmem:[#allocation4 + $0x424] sm:$0xf]
    %v3701 = vld [vmem:[#allocation4 + $0x428] sm:$0xff]
    %v3702 = vld [vmem:[#allocation4 + $0x430] sm:$0xff]
    %v3703 = vld [vmem:[#allocation4 + $0x438] sm:$0xff]
    %v3704 = vld [vmem:[#allocation4 + $0x440] sm:$0xf]
    %v3705 = vld [vmem:[#allocation4 + $0x444] sm:$0xff]
    %v3706 = vld [vmem:[#allocation4 + $0x44c] sm:$0xff]
    %v3707 = vld [vmem:[#allocation4 + $0x454] sm:$0xff]
    %v3708 = vld [vmem:[#allocation4 + $0x45c] sm:$0xf]
    %v3709 = vld [vmem:[#allocation4 + $0x460] sm:$0xff]
    %v3710 = vld [vmem:[#allocation4 + $0x468] sm:$0xff]
    %v3711 = vld [vmem:[#allocation4 + $0x470] sm:$0xff]
    %v3712 = vld [vmem:[#allocation4 + $0x478] sm:$0xf]
    %v3713 = vld [vmem:[#allocation4 + $0x47c] sm:$0xff]
    %v3714 = vld [vmem:[#allocation4 + $0x484] sm:$0xff]
    %v3715 = vld [vmem:[#allocation4 + $0x48c] sm:$0xff]
    %v3716 = vld [vmem:[#allocation4 + $0x494] sm:$0xf]
    %v3717 = vld [vmem:[#allocation4 + $0x498] sm:$0xff]
    %v3718 = vld [vmem:[#allocation4 + $0x4a0] sm:$0xff]
    %v3719 = vld [vmem:[#allocation4 + $0x4a8] sm:$0xff]
    %v3720 = vld [vmem:[#allocation4 + $0x4b0] sm:$0xf]
    %v3721 = vld [vmem:[#allocation4 + $0x4b4] sm:$0xff]
    %v3722 = vld [vmem:[#allocation4 + $0x4bc] sm:$0xff]
    %v3723 = vld [vmem:[#allocation4 + $0x4c4] sm:$0xff]
    %v3724 = vld [vmem:[#allocation4 + $0x4cc] sm:$0xf]
    %v3725 = vld [vmem:[#allocation4 + $0x4d0] sm:$0xff]
    %v3726 = vld [vmem:[#allocation4 + $0x4d8] sm:$0xff]
    %v3727 = vld [vmem:[#allocation4 + $0x4e0] sm:$0xff]
    %v3728 = vld [vmem:[#allocation4 + $0x4e8] sm:$0xf]
    %v3729 = vld [vmem:[#allocation4 + $0x4ec] sm:$0xff]
    %v3730 = vld [vmem:[#allocation4 + $0x4f4] sm:$0xff]
    %v3731 = vld [vmem:[#allocation4 + $0x4fc] sm:$0xff]
    %v3732 = vld [vmem:[#allocation4 + $0x504] sm:$0xf]
    %v3733 = vld [vmem:[#allocation4 + $0x508] sm:$0xff]
    %v3734 = vld [vmem:[#allocation4 + $0x510] sm:$0xff]
    %v3735 = vld [vmem:[#allocation4 + $0x518] sm:$0xff]
    %v3736 = vld [vmem:[#allocation4 + $0x520] sm:$0xf]
    %v3737 = vld [vmem:[#allocation4 + $0x524] sm:$0xff]
    %v3738 = vld [vmem:[#allocation4 + $0x52c] sm:$0xff]
    %v3739 = vld [vmem:[#allocation4 + $0x534] sm:$0xff]
    %v3740 = vld [vmem:[#allocation4 + $0x53c] sm:$0xf]
    %v3741 = vld [vmem:[#allocation4 + $0x540] sm:$0xff]
    %v3742 = vld [vmem:[#allocation4 + $0x548] sm:$0xff]
    %v3743 = vld [vmem:[#allocation4 + $0x550] sm:$0xff]
    %v3744 = vld [vmem:[#allocation4 + $0x558] sm:$0xf]
    %v3745 = vld [vmem:[#allocation4 + $0x55c] sm:$0xff]
    %v3746 = vld [vmem:[#allocation4 + $0x564] sm:$0xff]
    %v3747 = vld [vmem:[#allocation4 + $0x56c] sm:$0xff]
    %v3748 = vld [vmem:[#allocation4 + $0x574] sm:$0xf]
    %v3749 = vld [vmem:[#allocation4 + $0x578] sm:$0xff]
    %v3750 = vld [vmem:[#allocation4 + $0x580] sm:$0xff]
    %v3751 = vld [vmem:[#allocation4 + $0x588] sm:$0xff]
    %v3752 = vld [vmem:[#allocation4 + $0x590] sm:$0xf]
    %v3753 = vld [vmem:[#allocation4 + $0x594] sm:$0xff]
    %v3754 = vld [vmem:[#allocation4 + $0x59c] sm:$0xff]
    %v3755 = vld [vmem:[#allocation4 + $0x5a4] sm:$0xff]
    %v3756 = vld [vmem:[#allocation4 + $0x5ac] sm:$0xf]
    %v3757 = vld [vmem:[#allocation4 + $0x5b0] sm:$0xff]
    %v3758 = vld [vmem:[#allocation4 + $0x5b8] sm:$0xff]
    %v3759 = vld [vmem:[#allocation4 + $0x5c0] sm:$0xff]
    %v3760 = vld [vmem:[#allocation4 + $0x5c8] sm:$0xf]
    %v3761 = vld [vmem:[#allocation4 + $0x5cc] sm:$0xff]
    %v3762 = vld [vmem:[#allocation4 + $0x5d4] sm:$0xff]
    %v3763 = vld [vmem:[#allocation4 + $0x5dc] sm:$0xff]
    %v3764 = vld [vmem:[#allocation4 + $0x5e4] sm:$0xf]
    %v3765 = vld [vmem:[#allocation4 + $0x5e8] sm:$0xff]
    %v3766 = vld [vmem:[#allocation4 + $0x5f0] sm:$0xff]
    %v3767 = vld [vmem:[#allocation4 + $0x5f8] sm:$0xff]
    %v3768 = vld [vmem:[#allocation4 + $0x600] sm:$0xf]
    %v3769 = vld [vmem:[#allocation4 + $0x604] sm:$0xff]
    %v3770 = vld [vmem:[#allocation4 + $0x60c] sm:$0xff]
    %v3771 = vld [vmem:[#allocation4 + $0x614] sm:$0xff]
    %v3772 = vld [vmem:[#allocation4 + $0x61c] sm:$0xf]
    %v3773 = vld [vmem:[#allocation4 + $0x620] sm:$0xff]
    %v3774 = vld [vmem:[#allocation4 + $0x628] sm:$0xff]
    %v3775 = vld [vmem:[#allocation4 + $0x630] sm:$0xff]
    %v3776 = vld [vmem:[#allocation4 + $0x638] sm:$0xf]
    %v3777 = vld [vmem:[#allocation4 + $0x63c] sm:$0xff]
    %v3778 = vld [vmem:[#allocation4 + $0x644] sm:$0xff]
    %v3779 = vld [vmem:[#allocation4 + $0x64c] sm:$0xff]
    %v3780 = vld [vmem:[#allocation4 + $0x654] sm:$0xf]
    %v3781 = vld [vmem:[#allocation4 + $0x658] sm:$0xff]
    %v3782 = vld [vmem:[#allocation4 + $0x660] sm:$0xff]
    %v3783 = vld [vmem:[#allocation4 + $0x668] sm:$0xff]
    %v3784 = vld [vmem:[#allocation4 + $0x670] sm:$0xf]
    %v3785 = vld [vmem:[#allocation4 + $0x674] sm:$0xff]
    %v3786 = vld [vmem:[#allocation4 + $0x67c] sm:$0xff]
    %v3787 = vld [vmem:[#allocation4 + $0x684] sm:$0xff]
    %v3788 = vld [vmem:[#allocation4 + $0x68c] sm:$0xf]
    %v3789 = vld [vmem:[#allocation4 + $0x690] sm:$0xff]
    %v3790 = vld [vmem:[#allocation4 + $0x698] sm:$0xff]
    %v3791 = vld [vmem:[#allocation4 + $0x6a0] sm:$0xff]
    %v3792 = vld [vmem:[#allocation4 + $0x6a8] sm:$0xf]
    %v3793 = vld [vmem:[#allocation4 + $0x6ac] sm:$0xff]
    %v3794 = vld [vmem:[#allocation4 + $0x6b4] sm:$0xff]
    %v3795 = vld [vmem:[#allocation4 + $0x6bc] sm:$0xff]
    %v3796 = vld [vmem:[#allocation4 + $0x6c4] sm:$0xf]
    %v3797 = vld [vmem:[#allocation4 + $0x6c8] sm:$0xff]
    %v3798 = vld [vmem:[#allocation4 + $0x6d0] sm:$0xff]
    %v3799 = vld [vmem:[#allocation4 + $0x6d8] sm:$0xff]
    %v3800 = vld [vmem:[#allocation4 + $0x6e0] sm:$0xf]
    %v3801 = vld [vmem:[#allocation4 + $0x6e4] sm:$0xff]
    %v3802 = vld [vmem:[#allocation4 + $0x6ec] sm:$0xff]
    %v3803 = vld [vmem:[#allocation4 + $0x6f4] sm:$0xff]
    %v3804 = vld [vmem:[#allocation4 + $0x6fc] sm:$0xf]
    %v3805 = vld [vmem:[#allocation4 + $0x700] sm:$0xff]
    %v3806 = vld [vmem:[#allocation4 + $0x708] sm:$0xff]
    %v3807 = vld [vmem:[#allocation4 + $0x710] sm:$0xff]
    %v3808 = vld [vmem:[#allocation4 + $0x718] sm:$0xf]
    %v3809 = vld [vmem:[#allocation4 + $0x71c] sm:$0xff]
    %v3810 = vld [vmem:[#allocation4 + $0x724] sm:$0xff]
    %v3811 = vld [vmem:[#allocation4 + $0x72c] sm:$0xff]
    %v3812 = vld [vmem:[#allocation4 + $0x734] sm:$0xf]
    %v3813 = vld [vmem:[#allocation4 + $0x738] sm:$0xff]
    %v3814 = vld [vmem:[#allocation4 + $0x740] sm:$0xff]
    %v3815 = vld [vmem:[#allocation4 + $0x748] sm:$0xff]
    %v3816 = vld [vmem:[#allocation4 + $0x750] sm:$0xf]
    %v3817 = vld [vmem:[#allocation4 + $0x754] sm:$0xff]
    %v3818 = vld [vmem:[#allocation4 + $0x75c] sm:$0xff]
    %v3819 = vld [vmem:[#allocation4 + $0x764] sm:$0xff]
    %v3820 = vld [vmem:[#allocation4 + $0x76c] sm:$0xf]
    %v3821 = vld [vmem:[#allocation4 + $0x770] sm:$0xff]
    %v3822 = vld [vmem:[#allocation4 + $0x778] sm:$0xff]
    %v3823 = vld [vmem:[#allocation4 + $0x780] sm:$0xff]
    %v3824 = vld [vmem:[#allocation4 + $0x788] sm:$0xf]
    %v3825 = vld [vmem:[#allocation4 + $0x78c] sm:$0xff]
    %v3826 = vld [vmem:[#allocation4 + $0x794] sm:$0xff]
    %v3827 = vld [vmem:[#allocation4 + $0x79c] sm:$0xff]
    %v3828 = vld [vmem:[#allocation4 + $0x7a4] sm:$0xf]
    %v3829 = vld [vmem:[#allocation4 + $0x7a8] sm:$0xff]
    %v3830 = vld [vmem:[#allocation4 + $0x7b0] sm:$0xff]
    %v3831 = vld [vmem:[#allocation4 + $0x7b8] sm:$0xff]
    %v3832 = vld [vmem:[#allocation4 + $0x7c0] sm:$0xf]
    %v3833 = vld [vmem:[#allocation4 + $0x7c4] sm:$0xff]
    %v3834 = vld [vmem:[#allocation4 + $0x7cc] sm:$0xff]
    %v3835 = vld [vmem:[#allocation4 + $0x7d4] sm:$0xff]
    %v3836 = vld [vmem:[#allocation4 + $0x7dc] sm:$0xf]
    %v3837 = vld [vmem:[#allocation4 + $0x7e0] sm:$0xff]
    %v3838 = vld [vmem:[#allocation4 + $0x7e8] sm:$0xff]
    %v3839 = vld [vmem:[#allocation4 + $0x7f0] sm:$0xff]
    %v3840 = vld [vmem:[#allocation4 + $0x7f8] sm:$0xf]
    %v3841 = vld [vmem:[#allocation4 + $0x7fc] sm:$0xff]
    %v3842 = vld [vmem:[#allocation4 + $0x804] sm:$0xff]
    %v3843 = vld [vmem:[#allocation4 + $0x80c] sm:$0xff]
    %v3844 = vld [vmem:[#allocation4 + $0x814] sm:$0xf]
    %v3845 = vld [vmem:[#allocation4 + $0x818] sm:$0xff]
    %v3846 = vld [vmem:[#allocation4 + $0x820] sm:$0xff]
    %v3847 = vld [vmem:[#allocation4 + $0x828] sm:$0xff]
    %v3848 = vld [vmem:[#allocation4 + $0x830] sm:$0xf]
    %v3849 = vld [vmem:[#allocation4 + $0x834] sm:$0xff]
    %v3850 = vld [vmem:[#allocation4 + $0x83c] sm:$0xff]
    %v3851 = vld [vmem:[#allocation4 + $0x844] sm:$0xff]
    %v3852 = vld [vmem:[#allocation4 + $0x84c] sm:$0xf]
    %v3853 = vld [vmem:[#allocation4 + $0x850] sm:$0xff]
    %v3854 = vld [vmem:[#allocation4 + $0x858] sm:$0xff]
    %v3855 = vld [vmem:[#allocation4 + $0x860] sm:$0xff]
    %v3856 = vld [vmem:[#allocation4 + $0x868] sm:$0xf]
    %v3857 = vld [vmem:[#allocation4 + $0x86c] sm:$0xff]
    %v3858 = vld [vmem:[#allocation4 + $0x874] sm:$0xff]
    %v3859 = vld [vmem:[#allocation4 + $0x87c] sm:$0xff]
    %v3860 = vld [vmem:[#allocation4 + $0x884] sm:$0xf]
    %v3861 = vld [vmem:[#allocation4 + $0x888] sm:$0xff]
    %v3862 = vld [vmem:[#allocation4 + $0x890] sm:$0xff]
    %v3863 = vld [vmem:[#allocation4 + $0x898] sm:$0xff]
    %v3864 = vld [vmem:[#allocation4 + $0x8a0] sm:$0xf]
    %v3865 = vld [vmem:[#allocation4 + $0x8a4] sm:$0xff]
    %v3866 = vld [vmem:[#allocation4 + $0x8ac] sm:$0xff]
    %v3867 = vld [vmem:[#allocation4 + $0x8b4] sm:$0xff]
    %v3868 = vld [vmem:[#allocation4 + $0x8bc] sm:$0xf]
    %v3869 = vld [vmem:[#allocation4 + $0x8c0] sm:$0xff]
    %v3870 = vld [vmem:[#allocation4 + $0x8c8] sm:$0xff]
    %v3871 = vld [vmem:[#allocation4 + $0x8d0] sm:$0xff]
    %v3872 = vld [vmem:[#allocation4 + $0x8d8] sm:$0xf]
    %v3873 = vld [vmem:[#allocation4 + $0x8dc] sm:$0xff]
    %v3874 = vld [vmem:[#allocation4 + $0x8e4] sm:$0xff]
    %v3875 = vld [vmem:[#allocation4 + $0x8ec] sm:$0xff]
    %v3876 = vld [vmem:[#allocation4 + $0x8f4] sm:$0xf]
    %v3877 = vld [vmem:[#allocation4 + $0x8f8] sm:$0xff]
    %v3878 = vld [vmem:[#allocation4 + $0x900] sm:$0xff]
    %v3879 = vld [vmem:[#allocation4 + $0x908] sm:$0xff]
    %v3880 = vld [vmem:[#allocation4 + $0x910] sm:$0xf]
    %v3881 = vld [vmem:[#allocation4 + $0x914] sm:$0xff]
    %v3882 = vld [vmem:[#allocation4 + $0x91c] sm:$0xff]
    %v3883 = vld [vmem:[#allocation4 + $0x924] sm:$0xff]
    %v3884 = vld [vmem:[#allocation4 + $0x92c] sm:$0xf]
    %v3885 = vld [vmem:[#allocation4 + $0x930] sm:$0xff]
    %v3886 = vld [vmem:[#allocation4 + $0x938] sm:$0xff]
    %v3887 = vld [vmem:[#allocation4 + $0x940] sm:$0xff]
    %v3888 = vld [vmem:[#allocation4 + $0x948] sm:$0xf]
    %v3889 = vld [vmem:[#allocation4 + $0x94c] sm:$0xff]
    %v3890 = vld [vmem:[#allocation4 + $0x954] sm:$0xff]
    %v3891 = vld [vmem:[#allocation4 + $0x95c] sm:$0xff]
    %v3892 = vld [vmem:[#allocation4 + $0x964] sm:$0xf]
    %v3893 = vld [vmem:[#allocation4 + $0x968] sm:$0xff]
    %v3894 = vld [vmem:[#allocation4 + $0x970] sm:$0xff]
    %v3895 = vld [vmem:[#allocation4 + $0x978] sm:$0xff]
    %v3896 = vld [vmem:[#allocation4 + $0x980] sm:$0xf]
    %v3897 = vld [vmem:[#allocation4 + $0x984] sm:$0xff]
    %v3898 = vld [vmem:[#allocation4 + $0x98c] sm:$0xff]
    %v3899 = vld [vmem:[#allocation4 + $0x994] sm:$0xff]
    %v3900 = vld [vmem:[#allocation4 + $0x99c] sm:$0xf]
    %v3901 = vld [vmem:[#allocation4 + $0x9a0] sm:$0xff]
    %v3902 = vld [vmem:[#allocation4 + $0x9a8] sm:$0xff]
    %v3903 = vld [vmem:[#allocation4 + $0x9b0] sm:$0xff]
    %v3904 = vld [vmem:[#allocation4 + $0x9b8] sm:$0xf]
    %v3905 = vld [vmem:[#allocation4 + $0x9bc] sm:$0xff]
    %v3906 = vld [vmem:[#allocation4 + $0x9c4] sm:$0xff]
    %v3907 = vld [vmem:[#allocation4 + $0x9cc] sm:$0xff]
    %v3908 = vld [vmem:[#allocation4 + $0x9d4] sm:$0xf]
    %v3909 = vld [vmem:[#allocation4 + $0x9d8] sm:$0xff]
    %v3910 = vld [vmem:[#allocation4 + $0x9e0] sm:$0xff]
    %v3911 = vld [vmem:[#allocation4 + $0x9e8] sm:$0xff]
    %v3912 = vld [vmem:[#allocation4 + $0x9f0] sm:$0xf]
    %v3913 = vld [vmem:[#allocation4 + $0x9f4] sm:$0xff]
    %v3914 = vld [vmem:[#allocation4 + $0x9fc] sm:$0xff]
    %v3915 = vld [vmem:[#allocation4 + $0xa04] sm:$0xff]
    %v3916 = vld [vmem:[#allocation4 + $0xa0c] sm:$0xf]
    %v3917 = vld [vmem:[#allocation4 + $0xa10] sm:$0xff]
    %v3918 = vld [vmem:[#allocation4 + $0xa18] sm:$0xff]
    %v3919 = vld [vmem:[#allocation4 + $0xa20] sm:$0xff]
    %v3920 = vld [vmem:[#allocation4 + $0xa28] sm:$0xf]
    %v3921 = vld [vmem:[#allocation4 + $0xa2c] sm:$0xff]
    %v3922 = vld [vmem:[#allocation4 + $0xa34] sm:$0xff]
    %v3923 = vld [vmem:[#allocation4 + $0xa3c] sm:$0xff]
    %v3924 = vld [vmem:[#allocation4 + $0xa44] sm:$0xf]
    %v3925 = vld [vmem:[#allocation4 + $0xa48] sm:$0xff]
    %v3926 = vld [vmem:[#allocation4 + $0xa50] sm:$0xff]
    %v3927 = vld [vmem:[#allocation4 + $0xa58] sm:$0xff]
    %v3928 = vld [vmem:[#allocation4 + $0xa60] sm:$0xf]
    %v3929 = vld [vmem:[#allocation4 + $0xa64] sm:$0xff]
    %v3930 = vld [vmem:[#allocation4 + $0xa6c] sm:$0xff]
    %v3931 = vld [vmem:[#allocation4 + $0xa74] sm:$0xff]
    %v3932 = vld [vmem:[#allocation4 + $0xa7c] sm:$0xf]
    %v3933 = vld [vmem:[#allocation4 + $0xa80] sm:$0xff]
    %v3934 = vld [vmem:[#allocation4 + $0xa88] sm:$0xff]
    %v3935 = vld [vmem:[#allocation4 + $0xa90] sm:$0xff]
    %v3936 = vld [vmem:[#allocation4 + $0xa98] sm:$0xf]
    %v3937 = vld [vmem:[#allocation4 + $0xa9c] sm:$0xff]
    %v3938 = vld [vmem:[#allocation4 + $0xaa4] sm:$0xff]
    %v3939 = vld [vmem:[#allocation4 + $0xaac] sm:$0xff]
    %v3940 = vld [vmem:[#allocation4 + $0xab4] sm:$0xf]
    %v3941 = vld [vmem:[#allocation4 + $0xab8] sm:$0xff]
    %v3942 = vld [vmem:[#allocation4 + $0xac0] sm:$0xff]
    %v3943 = vld [vmem:[#allocation4 + $0xac8] sm:$0xff]
    %v3944 = vld [vmem:[#allocation4 + $0xad0] sm:$0xf]
    %v3945 = vld [vmem:[#allocation4 + $0xad4] sm:$0xff]
    %v3946 = vld [vmem:[#allocation4 + $0xadc] sm:$0xff]
    %v3947 = vld [vmem:[#allocation4 + $0xae4] sm:$0xff]
    %v3948 = vld [vmem:[#allocation4 + $0xaec] sm:$0xf]
    %v3949 = vld [vmem:[#allocation4 + $0xaf0] sm:$0xff]
    %v3950 = vld [vmem:[#allocation4 + $0xaf8] sm:$0xff]
    %v3951 = vld [vmem:[#allocation4 + $0xb00] sm:$0xff]
    %v3952 = vld [vmem:[#allocation4 + $0xb08] sm:$0xf]
    %v3953 = vld [vmem:[#allocation4 + $0xb0c] sm:$0xff]
    %v3954 = vld [vmem:[#allocation4 + $0xb14] sm:$0xff]
    %v3955 = vld [vmem:[#allocation4 + $0xb1c] sm:$0xff]
    %v3956 = vld [vmem:[#allocation4 + $0xb24] sm:$0xf]
    %v3957 = vld [vmem:[#allocation4 + $0xb28] sm:$0xff]
    %v3958 = vld [vmem:[#allocation4 + $0xb30] sm:$0xff]
    %v3959 = vld [vmem:[#allocation4 + $0xb38] sm:$0xff]
    %v3960 = vld [vmem:[#allocation4 + $0xb40] sm:$0xf]
    %v3961 = vld [vmem:[#allocation4 + $0xb44] sm:$0xff]
    %v3962 = vld [vmem:[#allocation4 + $0xb4c] sm:$0xff]
    %v3963 = vld [vmem:[#allocation4 + $0xb54] sm:$0xff]
    %v3964 = vld [vmem:[#allocation4 + $0xb5c] sm:$0xf]
    %v3965 = vld [vmem:[#allocation4 + $0xb60] sm:$0xff]
    %v3966 = vld [vmem:[#allocation4 + $0xb68] sm:$0xff]
    %v3967 = vld [vmem:[#allocation4 + $0xb70] sm:$0xff]
    %v3968 = vld [vmem:[#allocation4 + $0xb78] sm:$0xf]
    %v3969 = vld [vmem:[#allocation4 + $0xb7c] sm:$0xff]
    %v3970 = vld [vmem:[#allocation4 + $0xb84] sm:$0xff]
    %v3971 = vld [vmem:[#allocation4 + $0xb8c] sm:$0xff]
    %v3972 = vld [vmem:[#allocation4 + $0xb94] sm:$0xf]
    %v3973 = vld [vmem:[#allocation4 + $0xb98] sm:$0xff]
    %v3974 = vld [vmem:[#allocation4 + $0xba0] sm:$0xff]
    %v3975 = vld [vmem:[#allocation4 + $0xba8] sm:$0xff]
    %v3976 = vld [vmem:[#allocation4 + $0xbb0] sm:$0xf]
    %v3977 = vld [vmem:[#allocation4 + $0xbb4] sm:$0xff]
    %v3978 = vld [vmem:[#allocation4 + $0xbbc] sm:$0xff]
    %v3979 = vld [vmem:[#allocation4 + $0xbc4] sm:$0xff]
    %v3980 = vld [vmem:[#allocation4 + $0xbcc] sm:$0xf]
    %v3981 = vld [vmem:[#allocation4 + $0xbd0] sm:$0xff]
    %v3982 = vld [vmem:[#allocation4 + $0xbd8] sm:$0xff]
    %v3983 = vld [vmem:[#allocation4 + $0xbe0] sm:$0xff]
    %v3984 = vld [vmem:[#allocation4 + $0xbe8] sm:$0xf]
    %v3985 = vld [vmem:[#allocation4 + $0xbec] sm:$0xff]
    %v3986 = vld [vmem:[#allocation4 + $0xbf4] sm:$0xff]
    %v3987 = vld [vmem:[#allocation4 + $0xbfc] sm:$0xff]
    %v3988 = vld [vmem:[#allocation4 + $0xc04] sm:$0xf]
    %v3989 = vld [vmem:[#allocation4 + $0xc08] sm:$0xff]
    %v3990 = vld [vmem:[#allocation4 + $0xc10] sm:$0xff]
    %v3991 = vld [vmem:[#allocation4 + $0xc18] sm:$0xff]
    %v3992 = vld [vmem:[#allocation4 + $0xc20] sm:$0xf]
    %v3993 = vld [vmem:[#allocation4 + $0xc24] sm:$0xff]
    %v3994 = vld [vmem:[#allocation4 + $0xc2c] sm:$0xff]
    %v3995 = vld [vmem:[#allocation4 + $0xc34] sm:$0xff]
    %v3996 = vld [vmem:[#allocation4 + $0xc3c] sm:$0xf]
    %v3997 = vld [vmem:[#allocation4 + $0xc40] sm:$0xff]
    %v3998 = vld [vmem:[#allocation4 + $0xc48] sm:$0xff]
    %v3999 = vld [vmem:[#allocation4 + $0xc50] sm:$0xff]
    %v4000 = vld [vmem:[#allocation4 + $0xc58] sm:$0xf]
    %v4001 = vld [vmem:[#allocation4 + $0xc5c] sm:$0xff]
    %v4002 = vld [vmem:[#allocation4 + $0xc64] sm:$0xff]
    %v4003 = vld [vmem:[#allocation4 + $0xc6c] sm:$0xff]
    %v4004 = vld [vmem:[#allocation4 + $0xc74] sm:$0xf]
    %v4005 = vld [vmem:[#allocation4 + $0xc78] sm:$0xff]
    %v4006 = vld [vmem:[#allocation4 + $0xc80] sm:$0xff]
    %v4007 = vld [vmem:[#allocation4 + $0xc88] sm:$0xff]
    %v4008 = vld [vmem:[#allocation4 + $0xc90] sm:$0xf]
    %v4009 = vld [vmem:[#allocation4 + $0xc94] sm:$0xff]
    %v4010 = vld [vmem:[#allocation4 + $0xc9c] sm:$0xff]
    %v4011 = vld [vmem:[#allocation4 + $0xca4] sm:$0xff]
    %v4012 = vld [vmem:[#allocation4 + $0xcac] sm:$0xf]
    %v4013 = vld [vmem:[#allocation4 + $0xcb0] sm:$0xff]
    %v4014 = vld [vmem:[#allocation4 + $0xcb8] sm:$0xff]
    %v4015 = vld [vmem:[#allocation4 + $0xcc0] sm:$0xff]
    %v4016 = vld [vmem:[#allocation4 + $0xcc8] sm:$0xf]
    %v4017 = vld [vmem:[#allocation4 + $0xccc] sm:$0xff]
    %v4018 = vld [vmem:[#allocation4 + $0xcd4] sm:$0xff]
    %v4019 = vld [vmem:[#allocation4 + $0xcdc] sm:$0xff]
    %v4020 = vld [vmem:[#allocation4 + $0xce4] sm:$0xf]
    %v4021 = vld [vmem:[#allocation4 + $0xce8] sm:$0xff]
    %v4022 = vld [vmem:[#allocation4 + $0xcf0] sm:$0xff]
    %v4023 = vld [vmem:[#allocation4 + $0xcf8] sm:$0xff]
    %v4024 = vld [vmem:[#allocation4 + $0xd00] sm:$0xf]
    %v4025 = vld [vmem:[#allocation4 + $0xd04] sm:$0xff]
    %v4026 = vld [vmem:[#allocation4 + $0xd0c] sm:$0xff]
    %v4027 = vld [vmem:[#allocation4 + $0xd14] sm:$0xff]
    %v4028 = vld [vmem:[#allocation4 + $0xd1c] sm:$0xf]
    %v4029 = vld [vmem:[#allocation4 + $0xd20] sm:$0xff]
    %v4030 = vld [vmem:[#allocation4 + $0xd28] sm:$0xff]
    %v4031 = vld [vmem:[#allocation4 + $0xd30] sm:$0xff]
    %v4032 = vld [vmem:[#allocation4 + $0xd38] sm:$0xf]
    %v4033 = vld [vmem:[#allocation4 + $0xd3c] sm:$0xff]
    %v4034 = vld [vmem:[#allocation4 + $0xd44] sm:$0xff]
    %v4035 = vld [vmem:[#allocation4 + $0xd4c] sm:$0xff]
    %v4036 = vld [vmem:[#allocation4 + $0xd54] sm:$0xf]
    %v4037 = vld [vmem:[#allocation4 + $0xd58] sm:$0xff]
    %v4038 = vld [vmem:[#allocation4 + $0xd60] sm:$0xff]
    %v4039 = vld [vmem:[#allocation4 + $0xd68] sm:$0xff]
    %v4040 = vld [vmem:[#allocation4 + $0xd70] sm:$0xf]
    %v4041 = vld [vmem:[#allocation4 + $0xd74] sm:$0xff]
    %v4042 = vld [vmem:[#allocation4 + $0xd7c] sm:$0xff]
    %v4043 = vld [vmem:[#allocation4 + $0xd84] sm:$0xff]
    %v4044 = vld [vmem:[#allocation4 + $0xd8c] sm:$0xf]
    %v4045 = vld [vmem:[#allocation4 + $0xd90] sm:$0xff]
    %v4046 = vld [vmem:[#allocation4 + $0xd98] sm:$0xff]
    %v4047 = vld [vmem:[#allocation4 + $0xda0] sm:$0xff]
    %v4048 = vld [vmem:[#allocation4 + $0xda8] sm:$0xf]
    %v4049 = vld [vmem:[#allocation4 + $0xdac] sm:$0xff]
    %v4050 = vld [vmem:[#allocation4 + $0xdb4] sm:$0xff]
    %v4051 = vld [vmem:[#allocation4 + $0xdbc] sm:$0xff]
    %v4052 = vld [vmem:[#allocation4 + $0xdc4] sm:$0xf]
    %v4053 = vld [vmem:[#allocation4 + $0xdc8] sm:$0xff]
    %v4054 = vld [vmem:[#allocation4 + $0xdd0] sm:$0xff]
    %v4055 = vld [vmem:[#allocation4 + $0xdd8] sm:$0xff]
    %v4056 = vld [vmem:[#allocation4 + $0xde0] sm:$0xf]
    %v4057 = vld [vmem:[#allocation4 + $0xde4] sm:$0xff]
    %v4058 = vld [vmem:[#allocation4 + $0xdec] sm:$0xff]
    %v4059 = vld [vmem:[#allocation4 + $0xdf4] sm:$0xff]
    %v4060 = vld [vmem:[#allocation4 + $0xdfc] sm:$0xf]
    %v4061 = vld [vmem:[#allocation25] sm:$0xff]
    %v4062 = vpack.c.bf16 %v3537, %v3537
    %v4063 = vpack.c.bf16 %v3538, %v3538
    %v4064 = vpack.c.bf16 %v3539, %v3539
    %v4065 = vpack.c.bf16 %v3540, %v3540
    %v4066 = vpack.c.bf16 %v3541, %v3541
    %v4067 = vpack.c.bf16 %v3542, %v3542
    %v4068 = vpack.c.bf16 %v3543, %v3543
    %v4069 = vpack.c.bf16 %v3544, %v3544
    %v4071 = vperm.slane %v4061, 0
    %v4072 = vperm.slane %v4061, 1
    %v4073 = vperm.slane %v4061, 2
    %v4074 = vperm.slane %v4061, 3
    %v4075 = vperm.slane %v4061, 4
    %v4076 = vperm.slane %v4061, 5
    %v4077 = vperm.slane %v4061, 6
    %v4597 = vunpack.c.l.b16 %v3549
    %v4598 = vunpack.c.h.b16 %v3549
    %v4599 = vunpack.c.l.b16 %v3550
    %v4600 = vunpack.c.h.b16 %v3550
    %v4601 = vunpack.c.l.b16 %v3551
    %v4602 = vunpack.c.h.b16 %v3551
    %v4603 = vunpack.c.l.b16 %v3552
    %v4604 = vunpack.c.l.b16 %v3553
    %v4605 = vunpack.c.h.b16 %v3553
    %v4606 = vunpack.c.l.b16 %v3554
    %v4607 = vunpack.c.h.b16 %v3554
    %v4608 = vunpack.c.l.b16 %v3555
    %v4609 = vunpack.c.h.b16 %v3555
    %v4610 = vunpack.c.l.b16 %v3556
    %v4611 = vunpack.c.l.b16 %v3557
    %v4612 = vunpack.c.h.b16 %v3557
    %v4613 = vunpack.c.l.b16 %v3558
    %v4614 = vunpack.c.h.b16 %v3558
    %v4615 = vunpack.c.l.b16 %v3559
    %v4616 = vunpack.c.h.b16 %v3559
    %v4617 = vunpack.c.l.b16 %v3560
    %v4618 = vunpack.c.l.b16 %v3561
    %v4619 = vunpack.c.h.b16 %v3561
    %v4620 = vunpack.c.l.b16 %v3562
    %v4621 = vunpack.c.h.b16 %v3562
    %v4622 = vunpack.c.l.b16 %v3563
    %v4623 = vunpack.c.h.b16 %v3563
    %v4624 = vunpack.c.l.b16 %v3564
    %v4625 = vunpack.c.l.b16 %v3565
    %v4626 = vunpack.c.h.b16 %v3565
    %v4627 = vunpack.c.l.b16 %v3566
    %v4628 = vunpack.c.h.b16 %v3566
    %v4629 = vunpack.c.l.b16 %v3567
    %v4630 = vunpack.c.h.b16 %v3567
    %v4631 = vunpack.c.l.b16 %v3568
    %v4632 = vunpack.c.l.b16 %v3569
    %v4633 = vunpack.c.h.b16 %v3569
    %v4634 = vunpack.c.l.b16 %v3570
    %v4635 = vunpack.c.h.b16 %v3570
    %v4636 = vunpack.c.l.b16 %v3571
    %v4637 = vunpack.c.h.b16 %v3571
    %v4638 = vunpack.c.l.b16 %v3572
    %v4639 = vunpack.c.l.b16 %v3573
    %v4640 = vunpack.c.h.b16 %v3573
    %v4641 = vunpack.c.l.b16 %v3574
    %v4642 = vunpack.c.h.b16 %v3574
    %v4643 = vunpack.c.l.b16 %v3575
    %v4644 = vunpack.c.h.b16 %v3575
    %v4645 = vunpack.c.l.b16 %v3576
    %v4646 = vunpack.c.l.b16 %v3577
    %v4647 = vunpack.c.h.b16 %v3577
    %v4648 = vunpack.c.l.b16 %v3578
    %v4649 = vunpack.c.h.b16 %v3578
    %v4650 = vunpack.c.l.b16 %v3579
    %v4651 = vunpack.c.h.b16 %v3579
    %v4652 = vunpack.c.l.b16 %v3580
    %v4653 = vunpack.c.l.b16 %v3581
    %v4654 = vunpack.c.h.b16 %v3581
    %v4655 = vunpack.c.l.b16 %v3582
    %v4656 = vunpack.c.h.b16 %v3582
    %v4657 = vunpack.c.l.b16 %v3583
    %v4658 = vunpack.c.h.b16 %v3583
    %v4659 = vunpack.c.l.b16 %v3584
    %v4660 = vunpack.c.l.b16 %v3585
    %v4661 = vunpack.c.h.b16 %v3585
    %v4662 = vunpack.c.l.b16 %v3586
    %v4663 = vunpack.c.h.b16 %v3586
    %v4664 = vunpack.c.l.b16 %v3587
    %v4665 = vunpack.c.h.b16 %v3587
    %v4666 = vunpack.c.l.b16 %v3588
    %v4667 = vunpack.c.l.b16 %v3589
    %v4668 = vunpack.c.h.b16 %v3589
    %v4669 = vunpack.c.l.b16 %v3590
    %v4670 = vunpack.c.h.b16 %v3590
    %v4671 = vunpack.c.l.b16 %v3591
    %v4672 = vunpack.c.h.b16 %v3591
    %v4673 = vunpack.c.l.b16 %v3592
    %v4674 = vunpack.c.l.b16 %v3593
    %v4675 = vunpack.c.h.b16 %v3593
    %v4676 = vunpack.c.l.b16 %v3594
    %v4677 = vunpack.c.h.b16 %v3594
    %v4678 = vunpack.c.l.b16 %v3595
    %v4679 = vunpack.c.h.b16 %v3595
    %v4680 = vunpack.c.l.b16 %v3596
    %v4681 = vunpack.c.l.b16 %v3597
    %v4682 = vunpack.c.h.b16 %v3597
    %v4683 = vunpack.c.l.b16 %v3598
    %v4684 = vunpack.c.h.b16 %v3598
    %v4685 = vunpack.c.l.b16 %v3599
    %v4686 = vunpack.c.h.b16 %v3599
    %v4687 = vunpack.c.l.b16 %v3600
    %v4688 = vunpack.c.l.b16 %v3601
    %v4689 = vunpack.c.h.b16 %v3601
    %v4690 = vunpack.c.l.b16 %v3602
    %v4691 = vunpack.c.h.b16 %v3602
    %v4692 = vunpack.c.l.b16 %v3603
    %v4693 = vunpack.c.h.b16 %v3603
    %v4694 = vunpack.c.l.b16 %v3604
    %v4695 = vunpack.c.l.b16 %v3605
    %v4696 = vunpack.c.h.b16 %v3605
    %v4697 = vunpack.c.l.b16 %v3606
    %v4698 = vunpack.c.h.b16 %v3606
    %v4699 = vunpack.c.l.b16 %v3607
    %v4700 = vunpack.c.h.b16 %v3607
    %v4701 = vunpack.c.l.b16 %v3608
    %v4702 = vunpack.c.l.b16 %v3609
    %v4703 = vunpack.c.h.b16 %v3609
    %v4704 = vunpack.c.l.b16 %v3610
    %v4705 = vunpack.c.h.b16 %v3610
    %v4706 = vunpack.c.l.b16 %v3611
    %v4707 = vunpack.c.h.b16 %v3611
    %v4708 = vunpack.c.l.b16 %v3612
    %v4709 = vunpack.c.l.b16 %v3613
    %v4710 = vunpack.c.h.b16 %v3613
    %v4711 = vunpack.c.l.b16 %v3614
    %v4712 = vunpack.c.h.b16 %v3614
    %v4713 = vunpack.c.l.b16 %v3615
    %v4714 = vunpack.c.h.b16 %v3615
    %v4715 = vunpack.c.l.b16 %v3616
    %v4716 = vunpack.c.l.b16 %v3617
    %v4717 = vunpack.c.h.b16 %v3617
    %v4718 = vunpack.c.l.b16 %v3618
    %v4719 = vunpack.c.h.b16 %v3618
    %v4720 = vunpack.c.l.b16 %v3619
    %v4721 = vunpack.c.h.b16 %v3619
    %v4722 = vunpack.c.l.b16 %v3620
    %v4723 = vunpack.c.l.b16 %v3621
    %v4724 = vunpack.c.h.b16 %v3621
    %v4725 = vunpack.c.l.b16 %v3622
    %v4726 = vunpack.c.h.b16 %v3622
    %v4727 = vunpack.c.l.b16 %v3623
    %v4728 = vunpack.c.h.b16 %v3623
    %v4729 = vunpack.c.l.b16 %v3624
    %v4730 = vunpack.c.l.b16 %v3625
    %v4731 = vunpack.c.h.b16 %v3625
    %v4732 = vunpack.c.l.b16 %v3626
    %v4733 = vunpack.c.h.b16 %v3626
    %v4734 = vunpack.c.l.b16 %v3627
    %v4735 = vunpack.c.h.b16 %v3627
    %v4736 = vunpack.c.l.b16 %v3628
    %v4737 = vunpack.c.l.b16 %v3629
    %v4738 = vunpack.c.h.b16 %v3629
    %v4739 = vunpack.c.l.b16 %v3630
    %v4740 = vunpack.c.h.b16 %v3630
    %v4741 = vunpack.c.l.b16 %v3631
    %v4742 = vunpack.c.h.b16 %v3631
    %v4743 = vunpack.c.l.b16 %v3632
    %v4744 = vunpack.c.l.b16 %v3633
    %v4745 = vunpack.c.h.b16 %v3633
    %v4746 = vunpack.c.l.b16 %v3634
    %v4747 = vunpack.c.h.b16 %v3634
    %v4748 = vunpack.c.l.b16 %v3635
    %v4749 = vunpack.c.h.b16 %v3635
    %v4750 = vunpack.c.l.b16 %v3636
    %v4751 = vunpack.c.l.b16 %v3637
    %v4752 = vunpack.c.h.b16 %v3637
    %v4753 = vunpack.c.l.b16 %v3638
    %v4754 = vunpack.c.h.b16 %v3638
    %v4755 = vunpack.c.l.b16 %v3639
    %v4756 = vunpack.c.h.b16 %v3639
    %v4757 = vunpack.c.l.b16 %v3640
    %v4758 = vunpack.c.l.b16 %v3641
    %v4759 = vunpack.c.h.b16 %v3641
    %v4760 = vunpack.c.l.b16 %v3642
    %v4761 = vunpack.c.h.b16 %v3642
    %v4762 = vunpack.c.l.b16 %v3643
    %v4763 = vunpack.c.h.b16 %v3643
    %v4764 = vunpack.c.l.b16 %v3644
    %v4765 = vunpack.c.l.b16 %v3645
    %v4766 = vunpack.c.h.b16 %v3645
    %v4767 = vunpack.c.l.b16 %v3646
    %v4768 = vunpack.c.h.b16 %v3646
    %v4769 = vunpack.c.l.b16 %v3647
    %v4770 = vunpack.c.h.b16 %v3647
    %v4771 = vunpack.c.l.b16 %v3648
    %v4772 = vunpack.c.l.b16 %v3649
    %v4773 = vunpack.c.h.b16 %v3649
    %v4774 = vunpack.c.l.b16 %v3650
    %v4775 = vunpack.c.h.b16 %v3650
    %v4776 = vunpack.c.l.b16 %v3651
    %v4777 = vunpack.c.h.b16 %v3651
    %v4778 = vunpack.c.l.b16 %v3652
    %v4779 = vunpack.c.l.b16 %v3653
    %v4780 = vunpack.c.h.b16 %v3653
    %v4781 = vunpack.c.l.b16 %v3654
    %v4782 = vunpack.c.h.b16 %v3654
    %v4783 = vunpack.c.l.b16 %v3655
    %v4784 = vunpack.c.h.b16 %v3655
    %v4785 = vunpack.c.l.b16 %v3656
    %v4786 = vunpack.c.l.b16 %v3657
    %v4787 = vunpack.c.h.b16 %v3657
    %v4788 = vunpack.c.l.b16 %v3658
    %v4789 = vunpack.c.h.b16 %v3658
    %v4790 = vunpack.c.l.b16 %v3659
    %v4791 = vunpack.c.h.b16 %v3659
    %v4792 = vunpack.c.l.b16 %v3660
    %v4793 = vunpack.c.l.b16 %v3661
    %v4794 = vunpack.c.h.b16 %v3661
    %v4795 = vunpack.c.l.b16 %v3662
    %v4796 = vunpack.c.h.b16 %v3662
    %v4797 = vunpack.c.l.b16 %v3663
    %v4798 = vunpack.c.h.b16 %v3663
    %v4799 = vunpack.c.l.b16 %v3664
    %v4800 = vunpack.c.l.b16 %v3665
    %v4801 = vunpack.c.h.b16 %v3665
    %v4802 = vunpack.c.l.b16 %v3666
    %v4803 = vunpack.c.h.b16 %v3666
    %v4804 = vunpack.c.l.b16 %v3667
    %v4805 = vunpack.c.h.b16 %v3667
    %v4806 = vunpack.c.l.b16 %v3668
    %v4807 = vunpack.c.l.b16 %v3669
    %v4808 = vunpack.c.h.b16 %v3669
    %v4809 = vunpack.c.l.b16 %v3670
    %v4810 = vunpack.c.h.b16 %v3670
    %v4811 = vunpack.c.l.b16 %v3671
    %v4812 = vunpack.c.h.b16 %v3671
    %v4813 = vunpack.c.l.b16 %v3672
    %v4814 = vunpack.c.l.b16 %v3673
    %v4815 = vunpack.c.h.b16 %v3673
    %v4816 = vunpack.c.l.b16 %v3674
    %v4817 = vunpack.c.h.b16 %v3674
    %v4818 = vunpack.c.l.b16 %v3675
    %v4819 = vunpack.c.h.b16 %v3675
    %v4820 = vunpack.c.l.b16 %v3676
    %v4821 = vunpack.c.l.b16 %v3677
    %v4822 = vunpack.c.h.b16 %v3677
    %v4823 = vunpack.c.l.b16 %v3678
    %v4824 = vunpack.c.h.b16 %v3678
    %v4825 = vunpack.c.l.b16 %v3679
    %v4826 = vunpack.c.h.b16 %v3679
    %v4827 = vunpack.c.l.b16 %v3680
    %v4828 = vunpack.c.l.b16 %v3681
    %v4829 = vunpack.c.h.b16 %v3681
    %v4830 = vunpack.c.l.b16 %v3682
    %v4831 = vunpack.c.h.b16 %v3682
    %v4832 = vunpack.c.l.b16 %v3683
    %v4833 = vunpack.c.h.b16 %v3683
    %v4834 = vunpack.c.l.b16 %v3684
    %v4835 = vunpack.c.l.b16 %v3685
    %v4836 = vunpack.c.h.b16 %v3685
    %v4837 = vunpack.c.l.b16 %v3686
    %v4838 = vunpack.c.h.b16 %v3686
    %v4839 = vunpack.c.l.b16 %v3687
    %v4840 = vunpack.c.h.b16 %v3687
    %v4841 = vunpack.c.l.b16 %v3688
    %v4842 = vunpack.c.l.b16 %v3689
    %v4843 = vunpack.c.h.b16 %v3689
    %v4844 = vunpack.c.l.b16 %v3690
    %v4845 = vunpack.c.h.b16 %v3690
    %v4846 = vunpack.c.l.b16 %v3691
    %v4847 = vunpack.c.h.b16 %v3691
    %v4848 = vunpack.c.l.b16 %v3692
    %v4849 = vunpack.c.l.b16 %v3693
    %v4850 = vunpack.c.h.b16 %v3693
    %v4851 = vunpack.c.l.b16 %v3694
    %v4852 = vunpack.c.h.b16 %v3694
    %v4853 = vunpack.c.l.b16 %v3695
    %v4854 = vunpack.c.h.b16 %v3695
    %v4855 = vunpack.c.l.b16 %v3696
    %v4856 = vunpack.c.l.b16 %v3697
    %v4857 = vunpack.c.h.b16 %v3697
    %v4858 = vunpack.c.l.b16 %v3698
    %v4859 = vunpack.c.h.b16 %v3698
    %v4860 = vunpack.c.l.b16 %v3699
    %v4861 = vunpack.c.h.b16 %v3699
    %v4862 = vunpack.c.l.b16 %v3700
    %v4863 = vunpack.c.l.b16 %v3701
    %v4864 = vunpack.c.h.b16 %v3701
    %v4865 = vunpack.c.l.b16 %v3702
    %v4866 = vunpack.c.h.b16 %v3702
    %v4867 = vunpack.c.l.b16 %v3703
    %v4868 = vunpack.c.h.b16 %v3703
    %v4869 = vunpack.c.l.b16 %v3704
    %v4870 = vunpack.c.l.b16 %v3705
    %v4871 = vunpack.c.h.b16 %v3705
    %v4872 = vunpack.c.l.b16 %v3706
    %v4873 = vunpack.c.h.b16 %v3706
    %v4874 = vunpack.c.l.b16 %v3707
    %v4875 = vunpack.c.h.b16 %v3707
    %v4876 = vunpack.c.l.b16 %v3708
    %v4877 = vunpack.c.l.b16 %v3709
    %v4878 = vunpack.c.h.b16 %v3709
    %v4879 = vunpack.c.l.b16 %v3710
    %v4880 = vunpack.c.h.b16 %v3710
    %v4881 = vunpack.c.l.b16 %v3711
    %v4882 = vunpack.c.h.b16 %v3711
    %v4883 = vunpack.c.l.b16 %v3712
    %v4884 = vunpack.c.l.b16 %v3713
    %v4885 = vunpack.c.h.b16 %v3713
    %v4886 = vunpack.c.l.b16 %v3714
    %v4887 = vunpack.c.h.b16 %v3714
    %v4888 = vunpack.c.l.b16 %v3715
    %v4889 = vunpack.c.h.b16 %v3715
    %v4890 = vunpack.c.l.b16 %v3716
    %v4891 = vunpack.c.l.b16 %v3717
    %v4892 = vunpack.c.h.b16 %v3717
    %v4893 = vunpack.c.l.b16 %v3718
    %v4894 = vunpack.c.h.b16 %v3718
    %v4895 = vunpack.c.l.b16 %v3719
    %v4896 = vunpack.c.h.b16 %v3719
    %v4897 = vunpack.c.l.b16 %v3720
    %v4898 = vunpack.c.l.b16 %v3721
    %v4899 = vunpack.c.h.b16 %v3721
    %v4900 = vunpack.c.l.b16 %v3722
    %v4901 = vunpack.c.h.b16 %v3722
    %v4902 = vunpack.c.l.b16 %v3723
    %v4903 = vunpack.c.h.b16 %v3723
    %v4904 = vunpack.c.l.b16 %v3724
    %v4905 = vunpack.c.l.b16 %v3725
    %v4906 = vunpack.c.h.b16 %v3725
    %v4907 = vunpack.c.l.b16 %v3726
    %v4908 = vunpack.c.h.b16 %v3726
    %v4909 = vunpack.c.l.b16 %v3727
    %v4910 = vunpack.c.h.b16 %v3727
    %v4911 = vunpack.c.l.b16 %v3728
    %v4912 = vunpack.c.l.b16 %v3729
    %v4913 = vunpack.c.h.b16 %v3729
    %v4914 = vunpack.c.l.b16 %v3730
    %v4915 = vunpack.c.h.b16 %v3730
    %v4916 = vunpack.c.l.b16 %v3731
    %v4917 = vunpack.c.h.b16 %v3731
    %v4918 = vunpack.c.l.b16 %v3732
    %v4919 = vunpack.c.l.b16 %v3733
    %v4920 = vunpack.c.h.b16 %v3733
    %v4921 = vunpack.c.l.b16 %v3734
    %v4922 = vunpack.c.h.b16 %v3734
    %v4923 = vunpack.c.l.b16 %v3735
    %v4924 = vunpack.c.h.b16 %v3735
    %v4925 = vunpack.c.l.b16 %v3736
    %v4926 = vunpack.c.l.b16 %v3737
    %v4927 = vunpack.c.h.b16 %v3737
    %v4928 = vunpack.c.l.b16 %v3738
    %v4929 = vunpack.c.h.b16 %v3738
    %v4930 = vunpack.c.l.b16 %v3739
    %v4931 = vunpack.c.h.b16 %v3739
    %v4932 = vunpack.c.l.b16 %v3740
    %v4933 = vunpack.c.l.b16 %v3741
    %v4934 = vunpack.c.h.b16 %v3741
    %v4935 = vunpack.c.l.b16 %v3742
    %v4936 = vunpack.c.h.b16 %v3742
    %v4937 = vunpack.c.l.b16 %v3743
    %v4938 = vunpack.c.h.b16 %v3743
    %v4939 = vunpack.c.l.b16 %v3744
    %v4940 = vunpack.c.l.b16 %v3745
    %v4941 = vunpack.c.h.b16 %v3745
    %v4942 = vunpack.c.l.b16 %v3746
    %v4943 = vunpack.c.h.b16 %v3746
    %v4944 = vunpack.c.l.b16 %v3747
    %v4945 = vunpack.c.h.b16 %v3747
    %v4946 = vunpack.c.l.b16 %v3748
    %v4947 = vunpack.c.l.b16 %v3749
    %v4948 = vunpack.c.h.b16 %v3749
    %v4949 = vunpack.c.l.b16 %v3750
    %v4950 = vunpack.c.h.b16 %v3750
    %v4951 = vunpack.c.l.b16 %v3751
    %v4952 = vunpack.c.h.b16 %v3751
    %v4953 = vunpack.c.l.b16 %v3752
    %v4954 = vunpack.c.l.b16 %v3753
    %v4955 = vunpack.c.h.b16 %v3753
    %v4956 = vunpack.c.l.b16 %v3754
    %v4957 = vunpack.c.h.b16 %v3754
    %v4958 = vunpack.c.l.b16 %v3755
    %v4959 = vunpack.c.h.b16 %v3755
    %v4960 = vunpack.c.l.b16 %v3756
    %v4961 = vunpack.c.l.b16 %v3757
    %v4962 = vunpack.c.h.b16 %v3757
    %v4963 = vunpack.c.l.b16 %v3758
    %v4964 = vunpack.c.h.b16 %v3758
    %v4965 = vunpack.c.l.b16 %v3759
    %v4966 = vunpack.c.h.b16 %v3759
    %v4967 = vunpack.c.l.b16 %v3760
    %v4968 = vunpack.c.l.b16 %v3761
    %v4969 = vunpack.c.h.b16 %v3761
    %v4970 = vunpack.c.l.b16 %v3762
    %v4971 = vunpack.c.h.b16 %v3762
    %v4972 = vunpack.c.l.b16 %v3763
    %v4973 = vunpack.c.h.b16 %v3763
    %v4974 = vunpack.c.l.b16 %v3764
    %v4975 = vunpack.c.l.b16 %v3765
    %v4976 = vunpack.c.h.b16 %v3765
    %v4977 = vunpack.c.l.b16 %v3766
    %v4978 = vunpack.c.h.b16 %v3766
    %v4979 = vunpack.c.l.b16 %v3767
    %v4980 = vunpack.c.h.b16 %v3767
    %v4981 = vunpack.c.l.b16 %v3768
    %v4982 = vunpack.c.l.b16 %v3769
    %v4983 = vunpack.c.h.b16 %v3769
    %v4984 = vunpack.c.l.b16 %v3770
    %v4985 = vunpack.c.h.b16 %v3770
    %v4986 = vunpack.c.l.b16 %v3771
    %v4987 = vunpack.c.h.b16 %v3771
    %v4988 = vunpack.c.l.b16 %v3772
    %v4989 = vunpack.c.l.b16 %v3773
    %v4990 = vunpack.c.h.b16 %v3773
    %v4991 = vunpack.c.l.b16 %v3774
    %v4992 = vunpack.c.h.b16 %v3774
    %v4993 = vunpack.c.l.b16 %v3775
    %v4994 = vunpack.c.h.b16 %v3775
    %v4995 = vunpack.c.l.b16 %v3776
    %v4996 = vunpack.c.l.b16 %v3777
    %v4997 = vunpack.c.h.b16 %v3777
    %v4998 = vunpack.c.l.b16 %v3778
    %v4999 = vunpack.c.h.b16 %v3778
    %v5000 = vunpack.c.l.b16 %v3779
    %v5001 = vunpack.c.h.b16 %v3779
    %v5002 = vunpack.c.l.b16 %v3780
    %v5003 = vunpack.c.l.b16 %v3781
    %v5004 = vunpack.c.h.b16 %v3781
    %v5005 = vunpack.c.l.b16 %v3782
    %v5006 = vunpack.c.h.b16 %v3782
    %v5007 = vunpack.c.l.b16 %v3783
    %v5008 = vunpack.c.h.b16 %v3783
    %v5009 = vunpack.c.l.b16 %v3784
    %v5010 = vunpack.c.l.b16 %v3785
    %v5011 = vunpack.c.h.b16 %v3785
    %v5012 = vunpack.c.l.b16 %v3786
    %v5013 = vunpack.c.h.b16 %v3786
    %v5014 = vunpack.c.l.b16 %v3787
    %v5015 = vunpack.c.h.b16 %v3787
    %v5016 = vunpack.c.l.b16 %v3788
    %v5017 = vunpack.c.l.b16 %v3789
    %v5018 = vunpack.c.h.b16 %v3789
    %v5019 = vunpack.c.l.b16 %v3790
    %v5020 = vunpack.c.h.b16 %v3790
    %v5021 = vunpack.c.l.b16 %v3791
    %v5022 = vunpack.c.h.b16 %v3791
    %v5023 = vunpack.c.l.b16 %v3792
    %v5024 = vunpack.c.l.b16 %v3793
    %v5025 = vunpack.c.h.b16 %v3793
    %v5026 = vunpack.c.l.b16 %v3794
    %v5027 = vunpack.c.h.b16 %v3794
    %v5028 = vunpack.c.l.b16 %v3795
    %v5029 = vunpack.c.h.b16 %v3795
    %v5030 = vunpack.c.l.b16 %v3796
    %v5031 = vunpack.c.l.b16 %v3797
    %v5032 = vunpack.c.h.b16 %v3797
    %v5033 = vunpack.c.l.b16 %v3798
    %v5034 = vunpack.c.h.b16 %v3798
    %v5035 = vunpack.c.l.b16 %v3799
    %v5036 = vunpack.c.h.b16 %v3799
    %v5037 = vunpack.c.l.b16 %v3800
    %v5038 = vunpack.c.l.b16 %v3801
    %v5039 = vunpack.c.h.b16 %v3801
    %v5040 = vunpack.c.l.b16 %v3802
    %v5041 = vunpack.c.h.b16 %v3802
    %v5042 = vunpack.c.l.b16 %v3803
    %v5043 = vunpack.c.h.b16 %v3803
    %v5044 = vunpack.c.l.b16 %v3804
    %v5045 = vunpack.c.l.b16 %v3805
    %v5046 = vunpack.c.h.b16 %v3805
    %v5047 = vunpack.c.l.b16 %v3806
    %v5048 = vunpack.c.h.b16 %v3806
    %v5049 = vunpack.c.l.b16 %v3807
    %v5050 = vunpack.c.h.b16 %v3807
    %v5051 = vunpack.c.l.b16 %v3808
    %v5052 = vunpack.c.l.b16 %v3809
    %v5053 = vunpack.c.h.b16 %v3809
    %v5054 = vunpack.c.l.b16 %v3810
    %v5055 = vunpack.c.h.b16 %v3810
    %v5056 = vunpack.c.l.b16 %v3811
    %v5057 = vunpack.c.h.b16 %v3811
    %v5058 = vunpack.c.l.b16 %v3812
    %v5059 = vunpack.c.l.b16 %v3813
    %v5060 = vunpack.c.h.b16 %v3813
    %v5061 = vunpack.c.l.b16 %v3814
    %v5062 = vunpack.c.h.b16 %v3814
    %v5063 = vunpack.c.l.b16 %v3815
    %v5064 = vunpack.c.h.b16 %v3815
    %v5065 = vunpack.c.l.b16 %v3816
    %v5066 = vunpack.c.l.b16 %v3817
    %v5067 = vunpack.c.h.b16 %v3817
    %v5068 = vunpack.c.l.b16 %v3818
    %v5069 = vunpack.c.h.b16 %v3818
    %v5070 = vunpack.c.l.b16 %v3819
    %v5071 = vunpack.c.h.b16 %v3819
    %v5072 = vunpack.c.l.b16 %v3820
    %v5073 = vunpack.c.l.b16 %v3821
    %v5074 = vunpack.c.h.b16 %v3821
    %v5075 = vunpack.c.l.b16 %v3822
    %v5076 = vunpack.c.h.b16 %v3822
    %v5077 = vunpack.c.l.b16 %v3823
    %v5078 = vunpack.c.h.b16 %v3823
    %v5079 = vunpack.c.l.b16 %v3824
    %v5080 = vunpack.c.l.b16 %v3825
    %v5081 = vunpack.c.h.b16 %v3825
    %v5082 = vunpack.c.l.b16 %v3826
    %v5083 = vunpack.c.h.b16 %v3826
    %v5084 = vunpack.c.l.b16 %v3827
    %v5085 = vunpack.c.h.b16 %v3827
    %v5086 = vunpack.c.l.b16 %v3828
    %v5087 = vunpack.c.l.b16 %v3829
    %v5088 = vunpack.c.h.b16 %v3829
    %v5089 = vunpack.c.l.b16 %v3830
    %v5090 = vunpack.c.h.b16 %v3830
    %v5091 = vunpack.c.l.b16 %v3831
    %v5092 = vunpack.c.h.b16 %v3831
    %v5093 = vunpack.c.l.b16 %v3832
    %v5094 = vunpack.c.l.b16 %v3833
    %v5095 = vunpack.c.h.b16 %v3833
    %v5096 = vunpack.c.l.b16 %v3834
    %v5097 = vunpack.c.h.b16 %v3834
    %v5098 = vunpack.c.l.b16 %v3835
    %v5099 = vunpack.c.h.b16 %v3835
    %v5100 = vunpack.c.l.b16 %v3836
    %v5101 = vunpack.c.l.b16 %v3837
    %v5102 = vunpack.c.h.b16 %v3837
    %v5103 = vunpack.c.l.b16 %v3838
    %v5104 = vunpack.c.h.b16 %v3838
    %v5105 = vunpack.c.l.b16 %v3839
    %v5106 = vunpack.c.h.b16 %v3839
    %v5107 = vunpack.c.l.b16 %v3840
    %v5108 = vunpack.c.l.b16 %v3841
    %v5109 = vunpack.c.h.b16 %v3841
    %v5110 = vunpack.c.l.b16 %v3842
    %v5111 = vunpack.c.h.b16 %v3842
    %v5112 = vunpack.c.l.b16 %v3843
    %v5113 = vunpack.c.h.b16 %v3843
    %v5114 = vunpack.c.l.b16 %v3844
    %v5115 = vunpack.c.l.b16 %v3845
    %v5116 = vunpack.c.h.b16 %v3845
    %v5117 = vunpack.c.l.b16 %v3846
    %v5118 = vunpack.c.h.b16 %v3846
    %v5119 = vunpack.c.l.b16 %v3847
    %v5120 = vunpack.c.h.b16 %v3847
    %v5121 = vunpack.c.l.b16 %v3848
    %v5122 = vunpack.c.l.b16 %v3849
    %v5123 = vunpack.c.h.b16 %v3849
    %v5124 = vunpack.c.l.b16 %v3850
    %v5125 = vunpack.c.h.b16 %v3850
    %v5126 = vunpack.c.l.b16 %v3851
    %v5127 = vunpack.c.h.b16 %v3851
    %v5128 = vunpack.c.l.b16 %v3852
    %v5129 = vunpack.c.l.b16 %v3853
    %v5130 = vunpack.c.h.b16 %v3853
    %v5131 = vunpack.c.l.b16 %v3854
    %v5132 = vunpack.c.h.b16 %v3854
    %v5133 = vunpack.c.l.b16 %v3855
    %v5134 = vunpack.c.h.b16 %v3855
    %v5135 = vunpack.c.l.b16 %v3856
    %v5136 = vunpack.c.l.b16 %v3857
    %v5137 = vunpack.c.h.b16 %v3857
    %v5138 = vunpack.c.l.b16 %v3858
    %v5139 = vunpack.c.h.b16 %v3858
    %v5140 = vunpack.c.l.b16 %v3859
    %v5141 = vunpack.c.h.b16 %v3859
    %v5142 = vunpack.c.l.b16 %v3860
    %v5143 = vunpack.c.l.b16 %v3861
    %v5144 = vunpack.c.h.b16 %v3861
    %v5145 = vunpack.c.l.b16 %v3862
    %v5146 = vunpack.c.h.b16 %v3862
    %v5147 = vunpack.c.l.b16 %v3863
    %v5148 = vunpack.c.h.b16 %v3863
    %v5149 = vunpack.c.l.b16 %v3864
    %v5150 = vunpack.c.l.b16 %v3865
    %v5151 = vunpack.c.h.b16 %v3865
    %v5152 = vunpack.c.l.b16 %v3866
    %v5153 = vunpack.c.h.b16 %v3866
    %v5154 = vunpack.c.l.b16 %v3867
    %v5155 = vunpack.c.h.b16 %v3867
    %v5156 = vunpack.c.l.b16 %v3868
    %v5157 = vunpack.c.l.b16 %v3869
    %v5158 = vunpack.c.h.b16 %v3869
    %v5159 = vunpack.c.l.b16 %v3870
    %v5160 = vunpack.c.h.b16 %v3870
    %v5161 = vunpack.c.l.b16 %v3871
    %v5162 = vunpack.c.h.b16 %v3871
    %v5163 = vunpack.c.l.b16 %v3872
    %v5164 = vunpack.c.l.b16 %v3873
    %v5165 = vunpack.c.h.b16 %v3873
    %v5166 = vunpack.c.l.b16 %v3874
    %v5167 = vunpack.c.h.b16 %v3874
    %v5168 = vunpack.c.l.b16 %v3875
    %v5169 = vunpack.c.h.b16 %v3875
    %v5170 = vunpack.c.l.b16 %v3876
    %v5171 = vunpack.c.l.b16 %v3877
    %v5172 = vunpack.c.h.b16 %v3877
    %v5173 = vunpack.c.l.b16 %v3878
    %v5174 = vunpack.c.h.b16 %v3878
    %v5175 = vunpack.c.l.b16 %v3879
    %v5176 = vunpack.c.h.b16 %v3879
    %v5177 = vunpack.c.l.b16 %v3880
    %v5178 = vunpack.c.l.b16 %v3881
    %v5179 = vunpack.c.h.b16 %v3881
    %v5180 = vunpack.c.l.b16 %v3882
    %v5181 = vunpack.c.h.b16 %v3882
    %v5182 = vunpack.c.l.b16 %v3883
    %v5183 = vunpack.c.h.b16 %v3883
    %v5184 = vunpack.c.l.b16 %v3884
    %v5185 = vunpack.c.l.b16 %v3885
    %v5186 = vunpack.c.h.b16 %v3885
    %v5187 = vunpack.c.l.b16 %v3886
    %v5188 = vunpack.c.h.b16 %v3886
    %v5189 = vunpack.c.l.b16 %v3887
    %v5190 = vunpack.c.h.b16 %v3887
    %v5191 = vunpack.c.l.b16 %v3888
    %v5192 = vunpack.c.l.b16 %v3889
    %v5193 = vunpack.c.h.b16 %v3889
    %v5194 = vunpack.c.l.b16 %v3890
    %v5195 = vunpack.c.h.b16 %v3890
    %v5196 = vunpack.c.l.b16 %v3891
    %v5197 = vunpack.c.h.b16 %v3891
    %v5198 = vunpack.c.l.b16 %v3892
    %v5199 = vunpack.c.l.b16 %v3893
    %v5200 = vunpack.c.h.b16 %v3893
    %v5201 = vunpack.c.l.b16 %v3894
    %v5202 = vunpack.c.h.b16 %v3894
    %v5203 = vunpack.c.l.b16 %v3895
    %v5204 = vunpack.c.h.b16 %v3895
    %v5205 = vunpack.c.l.b16 %v3896
    %v5206 = vunpack.c.l.b16 %v3897
    %v5207 = vunpack.c.h.b16 %v3897
    %v5208 = vunpack.c.l.b16 %v3898
    %v5209 = vunpack.c.h.b16 %v3898
    %v5210 = vunpack.c.l.b16 %v3899
    %v5211 = vunpack.c.h.b16 %v3899
    %v5212 = vunpack.c.l.b16 %v3900
    %v5213 = vunpack.c.l.b16 %v3901
    %v5214 = vunpack.c.h.b16 %v3901
    %v5215 = vunpack.c.l.b16 %v3902
    %v5216 = vunpack.c.h.b16 %v3902
    %v5217 = vunpack.c.l.b16 %v3903
    %v5218 = vunpack.c.h.b16 %v3903
    %v5219 = vunpack.c.l.b16 %v3904
    %v5220 = vunpack.c.l.b16 %v3905
    %v5221 = vunpack.c.h.b16 %v3905
    %v5222 = vunpack.c.l.b16 %v3906
    %v5223 = vunpack.c.h.b16 %v3906
    %v5224 = vunpack.c.l.b16 %v3907
    %v5225 = vunpack.c.h.b16 %v3907
    %v5226 = vunpack.c.l.b16 %v3908
    %v5227 = vunpack.c.l.b16 %v3909
    %v5228 = vunpack.c.h.b16 %v3909
    %v5229 = vunpack.c.l.b16 %v3910
    %v5230 = vunpack.c.h.b16 %v3910
    %v5231 = vunpack.c.l.b16 %v3911
    %v5232 = vunpack.c.h.b16 %v3911
    %v5233 = vunpack.c.l.b16 %v3912
    %v5234 = vunpack.c.l.b16 %v3913
    %v5235 = vunpack.c.h.b16 %v3913
    %v5236 = vunpack.c.l.b16 %v3914
    %v5237 = vunpack.c.h.b16 %v3914
    %v5238 = vunpack.c.l.b16 %v3915
    %v5239 = vunpack.c.h.b16 %v3915
    %v5240 = vunpack.c.l.b16 %v3916
    %v5241 = vunpack.c.l.b16 %v3917
    %v5242 = vunpack.c.h.b16 %v3917
    %v5243 = vunpack.c.l.b16 %v3918
    %v5244 = vunpack.c.h.b16 %v3918
    %v5245 = vunpack.c.l.b16 %v3919
    %v5246 = vunpack.c.h.b16 %v3919
    %v5247 = vunpack.c.l.b16 %v3920
    %v5248 = vunpack.c.l.b16 %v3921
    %v5249 = vunpack.c.h.b16 %v3921
    %v5250 = vunpack.c.l.b16 %v3922
    %v5251 = vunpack.c.h.b16 %v3922
    %v5252 = vunpack.c.l.b16 %v3923
    %v5253 = vunpack.c.h.b16 %v3923
    %v5254 = vunpack.c.l.b16 %v3924
    %v5255 = vunpack.c.l.b16 %v3925
    %v5256 = vunpack.c.h.b16 %v3925
    %v5257 = vunpack.c.l.b16 %v3926
    %v5258 = vunpack.c.h.b16 %v3926
    %v5259 = vunpack.c.l.b16 %v3927
    %v5260 = vunpack.c.h.b16 %v3927
    %v5261 = vunpack.c.l.b16 %v3928
    %v5262 = vunpack.c.l.b16 %v3929
    %v5263 = vunpack.c.h.b16 %v3929
    %v5264 = vunpack.c.l.b16 %v3930
    %v5265 = vunpack.c.h.b16 %v3930
    %v5266 = vunpack.c.l.b16 %v3931
    %v5267 = vunpack.c.h.b16 %v3931
    %v5268 = vunpack.c.l.b16 %v3932
    %v5269 = vunpack.c.l.b16 %v3933
    %v5270 = vunpack.c.h.b16 %v3933
    %v5271 = vunpack.c.l.b16 %v3934
    %v5272 = vunpack.c.h.b16 %v3934
    %v5273 = vunpack.c.l.b16 %v3935
    %v5274 = vunpack.c.h.b16 %v3935
    %v5275 = vunpack.c.l.b16 %v3936
    %v5276 = vunpack.c.l.b16 %v3937
    %v5277 = vunpack.c.h.b16 %v3937
    %v5278 = vunpack.c.l.b16 %v3938
    %v5279 = vunpack.c.h.b16 %v3938
    %v5280 = vunpack.c.l.b16 %v3939
    %v5281 = vunpack.c.h.b16 %v3939
    %v5282 = vunpack.c.l.b16 %v3940
    %v5283 = vunpack.c.l.b16 %v3941
    %v5284 = vunpack.c.h.b16 %v3941
    %v5285 = vunpack.c.l.b16 %v3942
    %v5286 = vunpack.c.h.b16 %v3942
    %v5287 = vunpack.c.l.b16 %v3943
    %v5288 = vunpack.c.h.b16 %v3943
    %v5289 = vunpack.c.l.b16 %v3944
    %v5290 = vunpack.c.l.b16 %v3945
    %v5291 = vunpack.c.h.b16 %v3945
    %v5292 = vunpack.c.l.b16 %v3946
    %v5293 = vunpack.c.h.b16 %v3946
    %v5294 = vunpack.c.l.b16 %v3947
    %v5295 = vunpack.c.h.b16 %v3947
    %v5296 = vunpack.c.l.b16 %v3948
    %v5297 = vunpack.c.l.b16 %v3949
    %v5298 = vunpack.c.h.b16 %v3949
    %v5299 = vunpack.c.l.b16 %v3950
    %v5300 = vunpack.c.h.b16 %v3950
    %v5301 = vunpack.c.l.b16 %v3951
    %v5302 = vunpack.c.h.b16 %v3951
    %v5303 = vunpack.c.l.b16 %v3952
    %v5304 = vunpack.c.l.b16 %v3953
    %v5305 = vunpack.c.h.b16 %v3953
    %v5306 = vunpack.c.l.b16 %v3954
    %v5307 = vunpack.c.h.b16 %v3954
    %v5308 = vunpack.c.l.b16 %v3955
    %v5309 = vunpack.c.h.b16 %v3955
    %v5310 = vunpack.c.l.b16 %v3956
    %v5311 = vunpack.c.l.b16 %v3957
    %v5312 = vunpack.c.h.b16 %v3957
    %v5313 = vunpack.c.l.b16 %v3958
    %v5314 = vunpack.c.h.b16 %v3958
    %v5315 = vunpack.c.l.b16 %v3959
    %v5316 = vunpack.c.h.b16 %v3959
    %v5317 = vunpack.c.l.b16 %v3960
    %v5318 = vunpack.c.l.b16 %v3961
    %v5319 = vunpack.c.h.b16 %v3961
    %v5320 = vunpack.c.l.b16 %v3962
    %v5321 = vunpack.c.h.b16 %v3962
    %v5322 = vunpack.c.l.b16 %v3963
    %v5323 = vunpack.c.h.b16 %v3963
    %v5324 = vunpack.c.l.b16 %v3964
    %v5325 = vunpack.c.l.b16 %v3965
    %v5326 = vunpack.c.h.b16 %v3965
    %v5327 = vunpack.c.l.b16 %v3966
    %v5328 = vunpack.c.h.b16 %v3966
    %v5329 = vunpack.c.l.b16 %v3967
    %v5330 = vunpack.c.h.b16 %v3967
    %v5331 = vunpack.c.l.b16 %v3968
    %v5332 = vunpack.c.l.b16 %v3969
    %v5333 = vunpack.c.h.b16 %v3969
    %v5334 = vunpack.c.l.b16 %v3970
    %v5335 = vunpack.c.h.b16 %v3970
    %v5336 = vunpack.c.l.b16 %v3971
    %v5337 = vunpack.c.h.b16 %v3971
    %v5338 = vunpack.c.l.b16 %v3972
    %v5339 = vunpack.c.l.b16 %v3973
    %v5340 = vunpack.c.h.b16 %v3973
    %v5341 = vunpack.c.l.b16 %v3974
    %v5342 = vunpack.c.h.b16 %v3974
    %v5343 = vunpack.c.l.b16 %v3975
    %v5344 = vunpack.c.h.b16 %v3975
    %v5345 = vunpack.c.l.b16 %v3976
    %v5346 = vunpack.c.l.b16 %v3977
    %v5347 = vunpack.c.h.b16 %v3977
    %v5348 = vunpack.c.l.b16 %v3978
    %v5349 = vunpack.c.h.b16 %v3978
    %v5350 = vunpack.c.l.b16 %v3979
    %v5351 = vunpack.c.h.b16 %v3979
    %v5352 = vunpack.c.l.b16 %v3980
    %v5353 = vunpack.c.l.b16 %v3981
    %v5354 = vunpack.c.h.b16 %v3981
    %v5355 = vunpack.c.l.b16 %v3982
    %v5356 = vunpack.c.h.b16 %v3982
    %v5357 = vunpack.c.l.b16 %v3983
    %v5358 = vunpack.c.h.b16 %v3983
    %v5359 = vunpack.c.l.b16 %v3984
    %v5360 = vunpack.c.l.b16 %v3985
    %v5361 = vunpack.c.h.b16 %v3985
    %v5362 = vunpack.c.l.b16 %v3986
    %v5363 = vunpack.c.h.b16 %v3986
    %v5364 = vunpack.c.l.b16 %v3987
    %v5365 = vunpack.c.h.b16 %v3987
    %v5366 = vunpack.c.l.b16 %v3988
    %v5367 = vunpack.c.l.b16 %v3989
    %v5368 = vunpack.c.h.b16 %v3989
    %v5369 = vunpack.c.l.b16 %v3990
    %v5370 = vunpack.c.h.b16 %v3990
    %v5371 = vunpack.c.l.b16 %v3991
    %v5372 = vunpack.c.h.b16 %v3991
    %v5373 = vunpack.c.l.b16 %v3992
    %v5374 = vunpack.c.l.b16 %v3993
    %v5375 = vunpack.c.h.b16 %v3993
    %v5376 = vunpack.c.l.b16 %v3994
    %v5377 = vunpack.c.h.b16 %v3994
    %v5378 = vunpack.c.l.b16 %v3995
    %v5379 = vunpack.c.h.b16 %v3995
    %v5380 = vunpack.c.l.b16 %v3996
    %v5381 = vunpack.c.l.b16 %v3997
    %v5382 = vunpack.c.h.b16 %v3997
    %v5383 = vunpack.c.l.b16 %v3998
    %v5384 = vunpack.c.h.b16 %v3998
    %v5385 = vunpack.c.l.b16 %v3999
    %v5386 = vunpack.c.h.b16 %v3999
    %v5387 = vunpack.c.l.b16 %v4000
    %v5388 = vunpack.c.l.b16 %v4001
    %v5389 = vunpack.c.h.b16 %v4001
    %v5390 = vunpack.c.l.b16 %v4002
    %v5391 = vunpack.c.h.b16 %v4002
    %v5392 = vunpack.c.l.b16 %v4003
    %v5393 = vunpack.c.h.b16 %v4003
    %v5394 = vunpack.c.l.b16 %v4004
    %v5395 = vunpack.c.l.b16 %v4005
    %v5396 = vunpack.c.h.b16 %v4005
    %v5397 = vunpack.c.l.b16 %v4006
    %v5398 = vunpack.c.h.b16 %v4006
    %v5399 = vunpack.c.l.b16 %v4007
    %v5400 = vunpack.c.h.b16 %v4007
    %v5401 = vunpack.c.l.b16 %v4008
    %v5402 = vunpack.c.l.b16 %v4009
    %v5403 = vunpack.c.h.b16 %v4009
    %v5404 = vunpack.c.l.b16 %v4010
    %v5405 = vunpack.c.h.b16 %v4010
    %v5406 = vunpack.c.l.b16 %v4011
    %v5407 = vunpack.c.h.b16 %v4011
    %v5408 = vunpack.c.l.b16 %v4012
    %v5409 = vunpack.c.l.b16 %v4013
    %v5410 = vunpack.c.h.b16 %v4013
    %v5411 = vunpack.c.l.b16 %v4014
    %v5412 = vunpack.c.h.b16 %v4014
    %v5413 = vunpack.c.l.b16 %v4015
    %v5414 = vunpack.c.h.b16 %v4015
    %v5415 = vunpack.c.l.b16 %v4016
    %v5416 = vunpack.c.l.b16 %v4017
    %v5417 = vunpack.c.h.b16 %v4017
    %v5418 = vunpack.c.l.b16 %v4018
    %v5419 = vunpack.c.h.b16 %v4018
    %v5420 = vunpack.c.l.b16 %v4019
    %v5421 = vunpack.c.h.b16 %v4019
    %v5422 = vunpack.c.l.b16 %v4020
    %v5423 = vunpack.c.l.b16 %v4021
    %v5424 = vunpack.c.h.b16 %v4021
    %v5425 = vunpack.c.l.b16 %v4022
    %v5426 = vunpack.c.h.b16 %v4022
    %v5427 = vunpack.c.l.b16 %v4023
    %v5428 = vunpack.c.h.b16 %v4023
    %v5429 = vunpack.c.l.b16 %v4024
    %v5430 = vunpack.c.l.b16 %v4025
    %v5431 = vunpack.c.h.b16 %v4025
    %v5432 = vunpack.c.l.b16 %v4026
    %v5433 = vunpack.c.h.b16 %v4026
    %v5434 = vunpack.c.l.b16 %v4027
    %v5435 = vunpack.c.h.b16 %v4027
    %v5436 = vunpack.c.l.b16 %v4028
    %v5437 = vunpack.c.l.b16 %v4029
    %v5438 = vunpack.c.h.b16 %v4029
    %v5439 = vunpack.c.l.b16 %v4030
    %v5440 = vunpack.c.h.b16 %v4030
    %v5441 = vunpack.c.l.b16 %v4031
    %v5442 = vunpack.c.h.b16 %v4031
    %v5443 = vunpack.c.l.b16 %v4032
    %v5444 = vunpack.c.l.b16 %v4033
    %v5445 = vunpack.c.h.b16 %v4033
    %v5446 = vunpack.c.l.b16 %v4034
    %v5447 = vunpack.c.h.b16 %v4034
    %v5448 = vunpack.c.l.b16 %v4035
    %v5449 = vunpack.c.h.b16 %v4035
    %v5450 = vunpack.c.l.b16 %v4036
    %v5451 = vunpack.c.l.b16 %v4037
    %v5452 = vunpack.c.h.b16 %v4037
    %v5453 = vunpack.c.l.b16 %v4038
    %v5454 = vunpack.c.h.b16 %v4038
    %v5455 = vunpack.c.l.b16 %v4039
    %v5456 = vunpack.c.h.b16 %v4039
    %v5457 = vunpack.c.l.b16 %v4040
    %v5458 = vunpack.c.l.b16 %v4041
    %v5459 = vunpack.c.h.b16 %v4041
    %v5460 = vunpack.c.l.b16 %v4042
    %v5461 = vunpack.c.h.b16 %v4042
    %v5462 = vunpack.c.l.b16 %v4043
    %v5463 = vunpack.c.h.b16 %v4043
    %v5464 = vunpack.c.l.b16 %v4044
    %v5465 = vunpack.c.l.b16 %v4045
    %v5466 = vunpack.c.h.b16 %v4045
    %v5467 = vunpack.c.l.b16 %v4046
    %v5468 = vunpack.c.h.b16 %v4046
    %v5469 = vunpack.c.l.b16 %v4047
    %v5470 = vunpack.c.h.b16 %v4047
    %v5471 = vunpack.c.l.b16 %v4048
    %v5472 = vunpack.c.l.b16 %v4049
    %v5473 = vunpack.c.h.b16 %v4049
    %v5474 = vunpack.c.l.b16 %v4050
    %v5475 = vunpack.c.h.b16 %v4050
    %v5476 = vunpack.c.l.b16 %v4051
    %v5477 = vunpack.c.h.b16 %v4051
    %v5478 = vunpack.c.l.b16 %v4052
    %v5479 = vunpack.c.l.b16 %v4053
    %v5480 = vunpack.c.h.b16 %v4053
    %v5481 = vunpack.c.l.b16 %v4054
    %v5482 = vunpack.c.h.b16 %v4054
    %v5483 = vunpack.c.l.b16 %v4055
    %v5484 = vunpack.c.h.b16 %v4055
    %v5485 = vunpack.c.l.b16 %v4056
    %v5486 = vunpack.c.l.b16 %v4057
    %v5487 = vunpack.c.h.b16 %v4057
    %v5488 = vunpack.c.l.b16 %v4058
    %v5489 = vunpack.c.h.b16 %v4058
    %v5490 = vunpack.c.l.b16 %v4059
    %v5491 = vunpack.c.h.b16 %v4059
    %v5492 = vunpack.c.l.b16 %v4060
    %v5493 = vpack.c.b16 %v4604, %v4597
    %v5494 = vpack.c.b16 %v4605, %v4598
    %v5495 = vpack.c.b16 %v4606, %v4599
    %v5496 = vpack.c.b16 %v4607, %v4600
    %v5497 = vpack.c.b16 %v4608, %v4601
    %v5498 = vpack.c.b16 %v4609, %v4602
    %v5499 = vpack.c.b16 %v4610, %v4603
    %v5500 = vpack.c.b16 %v4618, %v4611
    %v5501 = vpack.c.b16 %v4619, %v4612
    %v5502 = vpack.c.b16 %v4620, %v4613
    %v5503 = vpack.c.b16 %v4621, %v4614
    %v5504 = vpack.c.b16 %v4622, %v4615
    %v5505 = vpack.c.b16 %v4623, %v4616
    %v5506 = vpack.c.b16 %v4624, %v4617
    %v5507 = vpack.c.b16 %v4632, %v4625
    %v5508 = vpack.c.b16 %v4633, %v4626
    %v5509 = vpack.c.b16 %v4634, %v4627
    %v5510 = vpack.c.b16 %v4635, %v4628
    %v5511 = vpack.c.b16 %v4636, %v4629
    %v5512 = vpack.c.b16 %v4637, %v4630
    %v5513 = vpack.c.b16 %v4638, %v4631
    %v5514 = vpack.c.b16 %v4646, %v4639
    %v5515 = vpack.c.b16 %v4647, %v4640
    %v5516 = vpack.c.b16 %v4648, %v4641
    %v5517 = vpack.c.b16 %v4649, %v4642
    %v5518 = vpack.c.b16 %v4650, %v4643
    %v5519 = vpack.c.b16 %v4651, %v4644
    %v5520 = vpack.c.b16 %v4652, %v4645
    %v5521 = vpack.c.b16 %v4660, %v4653
    %v5522 = vpack.c.b16 %v4661, %v4654
    %v5523 = vpack.c.b16 %v4662, %v4655
    %v5524 = vpack.c.b16 %v4663, %v4656
    %v5525 = vpack.c.b16 %v4664, %v4657
    %v5526 = vpack.c.b16 %v4665, %v4658
    %v5527 = vpack.c.b16 %v4666, %v4659
    %v5528 = vpack.c.b16 %v4674, %v4667
    %v5529 = vpack.c.b16 %v4675, %v4668
    %v5530 = vpack.c.b16 %v4676, %v4669
    %v5531 = vpack.c.b16 %v4677, %v4670
    %v5532 = vpack.c.b16 %v4678, %v4671
    %v5533 = vpack.c.b16 %v4679, %v4672
    %v5534 = vpack.c.b16 %v4680, %v4673
    %v5535 = vpack.c.b16 %v4688, %v4681
    %v5536 = vpack.c.b16 %v4689, %v4682
    %v5537 = vpack.c.b16 %v4690, %v4683
    %v5538 = vpack.c.b16 %v4691, %v4684
    %v5539 = vpack.c.b16 %v4692, %v4685
    %v5540 = vpack.c.b16 %v4693, %v4686
    %v5541 = vpack.c.b16 %v4694, %v4687
    %v5542 = vpack.c.b16 %v4702, %v4695
    %v5543 = vpack.c.b16 %v4703, %v4696
    %v5544 = vpack.c.b16 %v4704, %v4697
    %v5545 = vpack.c.b16 %v4705, %v4698
    %v5546 = vpack.c.b16 %v4706, %v4699
    %v5547 = vpack.c.b16 %v4707, %v4700
    %v5548 = vpack.c.b16 %v4708, %v4701
    %v5549 = vpack.c.b16 %v4716, %v4709
    %v5550 = vpack.c.b16 %v4717, %v4710
    %v5551 = vpack.c.b16 %v4718, %v4711
    %v5552 = vpack.c.b16 %v4719, %v4712
    %v5553 = vpack.c.b16 %v4720, %v4713
    %v5554 = vpack.c.b16 %v4721, %v4714
    %v5555 = vpack.c.b16 %v4722, %v4715
    %v5556 = vpack.c.b16 %v4730, %v4723
    %v5557 = vpack.c.b16 %v4731, %v4724
    %v5558 = vpack.c.b16 %v4732, %v4725
    %v5559 = vpack.c.b16 %v4733, %v4726
    %v5560 = vpack.c.b16 %v4734, %v4727
    %v5561 = vpack.c.b16 %v4735, %v4728
    %v5562 = vpack.c.b16 %v4736, %v4729
    %v5563 = vpack.c.b16 %v4744, %v4737
    %v5564 = vpack.c.b16 %v4745, %v4738
    %v5565 = vpack.c.b16 %v4746, %v4739
    %v5566 = vpack.c.b16 %v4747, %v4740
    %v5567 = vpack.c.b16 %v4748, %v4741
    %v5568 = vpack.c.b16 %v4749, %v4742
    %v5569 = vpack.c.b16 %v4750, %v4743
    %v5570 = vpack.c.b16 %v4758, %v4751
    %v5571 = vpack.c.b16 %v4759, %v4752
    %v5572 = vpack.c.b16 %v4760, %v4753
    %v5573 = vpack.c.b16 %v4761, %v4754
    %v5574 = vpack.c.b16 %v4762, %v4755
    %v5575 = vpack.c.b16 %v4763, %v4756
    %v5576 = vpack.c.b16 %v4764, %v4757
    %v5577 = vpack.c.b16 %v4772, %v4765
    %v5578 = vpack.c.b16 %v4773, %v4766
    %v5579 = vpack.c.b16 %v4774, %v4767
    %v5580 = vpack.c.b16 %v4775, %v4768
    %v5581 = vpack.c.b16 %v4776, %v4769
    %v5582 = vpack.c.b16 %v4777, %v4770
    %v5583 = vpack.c.b16 %v4778, %v4771
    %v5584 = vpack.c.b16 %v4786, %v4779
    %v5585 = vpack.c.b16 %v4787, %v4780
    %v5586 = vpack.c.b16 %v4788, %v4781
    %v5587 = vpack.c.b16 %v4789, %v4782
    %v5588 = vpack.c.b16 %v4790, %v4783
    %v5589 = vpack.c.b16 %v4791, %v4784
    %v5590 = vpack.c.b16 %v4792, %v4785
    %v5591 = vpack.c.b16 %v4800, %v4793
    %v5592 = vpack.c.b16 %v4801, %v4794
    %v5593 = vpack.c.b16 %v4802, %v4795
    %v5594 = vpack.c.b16 %v4803, %v4796
    %v5595 = vpack.c.b16 %v4804, %v4797
    %v5596 = vpack.c.b16 %v4805, %v4798
    %v5597 = vpack.c.b16 %v4806, %v4799
    %v5598 = vpack.c.b16 %v4814, %v4807
    %v5599 = vpack.c.b16 %v4815, %v4808
    %v5600 = vpack.c.b16 %v4816, %v4809
    %v5601 = vpack.c.b16 %v4817, %v4810
    %v5602 = vpack.c.b16 %v4818, %v4811
    %v5603 = vpack.c.b16 %v4819, %v4812
    %v5604 = vpack.c.b16 %v4820, %v4813
    %v5605 = vpack.c.b16 %v4828, %v4821
    %v5606 = vpack.c.b16 %v4829, %v4822
    %v5607 = vpack.c.b16 %v4830, %v4823
    %v5608 = vpack.c.b16 %v4831, %v4824
    %v5609 = vpack.c.b16 %v4832, %v4825
    %v5610 = vpack.c.b16 %v4833, %v4826
    %v5611 = vpack.c.b16 %v4834, %v4827
    %v5612 = vpack.c.b16 %v4842, %v4835
    %v5613 = vpack.c.b16 %v4843, %v4836
    %v5614 = vpack.c.b16 %v4844, %v4837
    %v5615 = vpack.c.b16 %v4845, %v4838
    %v5616 = vpack.c.b16 %v4846, %v4839
    %v5617 = vpack.c.b16 %v4847, %v4840
    %v5618 = vpack.c.b16 %v4848, %v4841
    %v5619 = vpack.c.b16 %v4856, %v4849
    %v5620 = vpack.c.b16 %v4857, %v4850
    %v5621 = vpack.c.b16 %v4858, %v4851
    %v5622 = vpack.c.b16 %v4859, %v4852
    %v5623 = vpack.c.b16 %v4860, %v4853
    %v5624 = vpack.c.b16 %v4861, %v4854
    %v5625 = vpack.c.b16 %v4862, %v4855
    %v5626 = vpack.c.b16 %v4870, %v4863
    %v5627 = vpack.c.b16 %v4871, %v4864
    %v5628 = vpack.c.b16 %v4872, %v4865
    %v5629 = vpack.c.b16 %v4873, %v4866
    %v5630 = vpack.c.b16 %v4874, %v4867
    %v5631 = vpack.c.b16 %v4875, %v4868
    %v5632 = vpack.c.b16 %v4876, %v4869
    %v5633 = vpack.c.b16 %v4884, %v4877
    %v5634 = vpack.c.b16 %v4885, %v4878
    %v5635 = vpack.c.b16 %v4886, %v4879
    %v5636 = vpack.c.b16 %v4887, %v4880
    %v5637 = vpack.c.b16 %v4888, %v4881
    %v5638 = vpack.c.b16 %v4889, %v4882
    %v5639 = vpack.c.b16 %v4890, %v4883
    %v5640 = vpack.c.b16 %v4898, %v4891
    %v5641 = vpack.c.b16 %v4899, %v4892
    %v5642 = vpack.c.b16 %v4900, %v4893
    %v5643 = vpack.c.b16 %v4901, %v4894
    %v5644 = vpack.c.b16 %v4902, %v4895
    %v5645 = vpack.c.b16 %v4903, %v4896
    %v5646 = vpack.c.b16 %v4904, %v4897
    %v5647 = vpack.c.b16 %v4912, %v4905
    %v5648 = vpack.c.b16 %v4913, %v4906
    %v5649 = vpack.c.b16 %v4914, %v4907
    %v5650 = vpack.c.b16 %v4915, %v4908
    %v5651 = vpack.c.b16 %v4916, %v4909
    %v5652 = vpack.c.b16 %v4917, %v4910
    %v5653 = vpack.c.b16 %v4918, %v4911
    %v5654 = vpack.c.b16 %v4926, %v4919
    %v5655 = vpack.c.b16 %v4927, %v4920
    %v5656 = vpack.c.b16 %v4928, %v4921
    %v5657 = vpack.c.b16 %v4929, %v4922
    %v5658 = vpack.c.b16 %v4930, %v4923
    %v5659 = vpack.c.b16 %v4931, %v4924
    %v5660 = vpack.c.b16 %v4932, %v4925
    %v5661 = vpack.c.b16 %v4940, %v4933
    %v5662 = vpack.c.b16 %v4941, %v4934
    %v5663 = vpack.c.b16 %v4942, %v4935
    %v5664 = vpack.c.b16 %v4943, %v4936
    %v5665 = vpack.c.b16 %v4944, %v4937
    %v5666 = vpack.c.b16 %v4945, %v4938
    %v5667 = vpack.c.b16 %v4946, %v4939
    %v5668 = vpack.c.b16 %v4954, %v4947
    %v5669 = vpack.c.b16 %v4955, %v4948
    %v5670 = vpack.c.b16 %v4956, %v4949
    %v5671 = vpack.c.b16 %v4957, %v4950
    %v5672 = vpack.c.b16 %v4958, %v4951
    %v5673 = vpack.c.b16 %v4959, %v4952
    %v5674 = vpack.c.b16 %v4960, %v4953
    %v5675 = vpack.c.b16 %v4968, %v4961
    %v5676 = vpack.c.b16 %v4969, %v4962
    %v5677 = vpack.c.b16 %v4970, %v4963
    %v5678 = vpack.c.b16 %v4971, %v4964
    %v5679 = vpack.c.b16 %v4972, %v4965
    %v5680 = vpack.c.b16 %v4973, %v4966
    %v5681 = vpack.c.b16 %v4974, %v4967
    %v5682 = vpack.c.b16 %v4982, %v4975
    %v5683 = vpack.c.b16 %v4983, %v4976
    %v5684 = vpack.c.b16 %v4984, %v4977
    %v5685 = vpack.c.b16 %v4985, %v4978
    %v5686 = vpack.c.b16 %v4986, %v4979
    %v5687 = vpack.c.b16 %v4987, %v4980
    %v5688 = vpack.c.b16 %v4988, %v4981
    %v5689 = vpack.c.b16 %v4996, %v4989
    %v5690 = vpack.c.b16 %v4997, %v4990
    %v5691 = vpack.c.b16 %v4998, %v4991
    %v5692 = vpack.c.b16 %v4999, %v4992
    %v5693 = vpack.c.b16 %v5000, %v4993
    %v5694 = vpack.c.b16 %v5001, %v4994
    %v5695 = vpack.c.b16 %v5002, %v4995
    %v5696 = vpack.c.b16 %v5010, %v5003
    %v5697 = vpack.c.b16 %v5011, %v5004
    %v5698 = vpack.c.b16 %v5012, %v5005
    %v5699 = vpack.c.b16 %v5013, %v5006
    %v5700 = vpack.c.b16 %v5014, %v5007
    %v5701 = vpack.c.b16 %v5015, %v5008
    %v5702 = vpack.c.b16 %v5016, %v5009
    %v5703 = vpack.c.b16 %v5024, %v5017
    %v5704 = vpack.c.b16 %v5025, %v5018
    %v5705 = vpack.c.b16 %v5026, %v5019
    %v5706 = vpack.c.b16 %v5027, %v5020
    %v5707 = vpack.c.b16 %v5028, %v5021
    %v5708 = vpack.c.b16 %v5029, %v5022
    %v5709 = vpack.c.b16 %v5030, %v5023
    %v5710 = vpack.c.b16 %v5038, %v5031
    %v5711 = vpack.c.b16 %v5039, %v5032
    %v5712 = vpack.c.b16 %v5040, %v5033
    %v5713 = vpack.c.b16 %v5041, %v5034
    %v5714 = vpack.c.b16 %v5042, %v5035
    %v5715 = vpack.c.b16 %v5043, %v5036
    %v5716 = vpack.c.b16 %v5044, %v5037
    %v5717 = vpack.c.b16 %v5052, %v5045
    %v5718 = vpack.c.b16 %v5053, %v5046
    %v5719 = vpack.c.b16 %v5054, %v5047
    %v5720 = vpack.c.b16 %v5055, %v5048
    %v5721 = vpack.c.b16 %v5056, %v5049
    %v5722 = vpack.c.b16 %v5057, %v5050
    %v5723 = vpack.c.b16 %v5058, %v5051
    %v5724 = vpack.c.b16 %v5066, %v5059
    %v5725 = vpack.c.b16 %v5067, %v5060
    %v5726 = vpack.c.b16 %v5068, %v5061
    %v5727 = vpack.c.b16 %v5069, %v5062
    %v5728 = vpack.c.b16 %v5070, %v5063
    %v5729 = vpack.c.b16 %v5071, %v5064
    %v5730 = vpack.c.b16 %v5072, %v5065
    %v5731 = vpack.c.b16 %v5080, %v5073
    %v5732 = vpack.c.b16 %v5081, %v5074
    %v5733 = vpack.c.b16 %v5082, %v5075
    %v5734 = vpack.c.b16 %v5083, %v5076
    %v5735 = vpack.c.b16 %v5084, %v5077
    %v5736 = vpack.c.b16 %v5085, %v5078
    %v5737 = vpack.c.b16 %v5086, %v5079
    %v5738 = vpack.c.b16 %v5094, %v5087
    %v5739 = vpack.c.b16 %v5095, %v5088
    %v5740 = vpack.c.b16 %v5096, %v5089
    %v5741 = vpack.c.b16 %v5097, %v5090
    %v5742 = vpack.c.b16 %v5098, %v5091
    %v5743 = vpack.c.b16 %v5099, %v5092
    %v5744 = vpack.c.b16 %v5100, %v5093
    %v5745 = vpack.c.b16 %v5108, %v5101
    %v5746 = vpack.c.b16 %v5109, %v5102
    %v5747 = vpack.c.b16 %v5110, %v5103
    %v5748 = vpack.c.b16 %v5111, %v5104
    %v5749 = vpack.c.b16 %v5112, %v5105
    %v5750 = vpack.c.b16 %v5113, %v5106
    %v5751 = vpack.c.b16 %v5114, %v5107
    %v5752 = vpack.c.b16 %v5122, %v5115
    %v5753 = vpack.c.b16 %v5123, %v5116
    %v5754 = vpack.c.b16 %v5124, %v5117
    %v5755 = vpack.c.b16 %v5125, %v5118
    %v5756 = vpack.c.b16 %v5126, %v5119
    %v5757 = vpack.c.b16 %v5127, %v5120
    %v5758 = vpack.c.b16 %v5128, %v5121
    %v5759 = vpack.c.b16 %v5136, %v5129
    %v5760 = vpack.c.b16 %v5137, %v5130
    %v5761 = vpack.c.b16 %v5138, %v5131
    %v5762 = vpack.c.b16 %v5139, %v5132
    %v5763 = vpack.c.b16 %v5140, %v5133
    %v5764 = vpack.c.b16 %v5141, %v5134
    %v5765 = vpack.c.b16 %v5142, %v5135
    %v5766 = vpack.c.b16 %v5150, %v5143
    %v5767 = vpack.c.b16 %v5151, %v5144
    %v5768 = vpack.c.b16 %v5152, %v5145
    %v5769 = vpack.c.b16 %v5153, %v5146
    %v5770 = vpack.c.b16 %v5154, %v5147
    %v5771 = vpack.c.b16 %v5155, %v5148
    %v5772 = vpack.c.b16 %v5156, %v5149
    %v5773 = vpack.c.b16 %v5164, %v5157
    %v5774 = vpack.c.b16 %v5165, %v5158
    %v5775 = vpack.c.b16 %v5166, %v5159
    %v5776 = vpack.c.b16 %v5167, %v5160
    %v5777 = vpack.c.b16 %v5168, %v5161
    %v5778 = vpack.c.b16 %v5169, %v5162
    %v5779 = vpack.c.b16 %v5170, %v5163
    %v5780 = vpack.c.b16 %v5178, %v5171
    %v5781 = vpack.c.b16 %v5179, %v5172
    %v5782 = vpack.c.b16 %v5180, %v5173
    %v5783 = vpack.c.b16 %v5181, %v5174
    %v5784 = vpack.c.b16 %v5182, %v5175
    %v5785 = vpack.c.b16 %v5183, %v5176
    %v5786 = vpack.c.b16 %v5184, %v5177
    %v5787 = vpack.c.b16 %v5192, %v5185
    %v5788 = vpack.c.b16 %v5193, %v5186
    %v5789 = vpack.c.b16 %v5194, %v5187
    %v5790 = vpack.c.b16 %v5195, %v5188
    %v5791 = vpack.c.b16 %v5196, %v5189
    %v5792 = vpack.c.b16 %v5197, %v5190
    %v5793 = vpack.c.b16 %v5198, %v5191
    %v5794 = vpack.c.b16 %v5206, %v5199
    %v5795 = vpack.c.b16 %v5207, %v5200
    %v5796 = vpack.c.b16 %v5208, %v5201
    %v5797 = vpack.c.b16 %v5209, %v5202
    %v5798 = vpack.c.b16 %v5210, %v5203
    %v5799 = vpack.c.b16 %v5211, %v5204
    %v5800 = vpack.c.b16 %v5212, %v5205
    %v5801 = vpack.c.b16 %v5220, %v5213
    %v5802 = vpack.c.b16 %v5221, %v5214
    %v5803 = vpack.c.b16 %v5222, %v5215
    %v5804 = vpack.c.b16 %v5223, %v5216
    %v5805 = vpack.c.b16 %v5224, %v5217
    %v5806 = vpack.c.b16 %v5225, %v5218
    %v5807 = vpack.c.b16 %v5226, %v5219
    %v5808 = vpack.c.b16 %v5234, %v5227
    %v5809 = vpack.c.b16 %v5235, %v5228
    %v5810 = vpack.c.b16 %v5236, %v5229
    %v5811 = vpack.c.b16 %v5237, %v5230
    %v5812 = vpack.c.b16 %v5238, %v5231
    %v5813 = vpack.c.b16 %v5239, %v5232
    %v5814 = vpack.c.b16 %v5240, %v5233
    %v5815 = vpack.c.b16 %v5248, %v5241
    %v5816 = vpack.c.b16 %v5249, %v5242
    %v5817 = vpack.c.b16 %v5250, %v5243
    %v5818 = vpack.c.b16 %v5251, %v5244
    %v5819 = vpack.c.b16 %v5252, %v5245
    %v5820 = vpack.c.b16 %v5253, %v5246
    %v5821 = vpack.c.b16 %v5254, %v5247
    %v5822 = vpack.c.b16 %v5262, %v5255
    %v5823 = vpack.c.b16 %v5263, %v5256
    %v5824 = vpack.c.b16 %v5264, %v5257
    %v5825 = vpack.c.b16 %v5265, %v5258
    %v5826 = vpack.c.b16 %v5266, %v5259
    %v5827 = vpack.c.b16 %v5267, %v5260
    %v5828 = vpack.c.b16 %v5268, %v5261
    %v5829 = vpack.c.b16 %v5276, %v5269
    %v5830 = vpack.c.b16 %v5277, %v5270
    %v5831 = vpack.c.b16 %v5278, %v5271
    %v5832 = vpack.c.b16 %v5279, %v5272
    %v5833 = vpack.c.b16 %v5280, %v5273
    %v5834 = vpack.c.b16 %v5281, %v5274
    %v5835 = vpack.c.b16 %v5282, %v5275
    %v5836 = vpack.c.b16 %v5290, %v5283
    %v5837 = vpack.c.b16 %v5291, %v5284
    %v5838 = vpack.c.b16 %v5292, %v5285
    %v5839 = vpack.c.b16 %v5293, %v5286
    %v5840 = vpack.c.b16 %v5294, %v5287
    %v5841 = vpack.c.b16 %v5295, %v5288
    %v5842 = vpack.c.b16 %v5296, %v5289
    %v5843 = vpack.c.b16 %v5304, %v5297
    %v5844 = vpack.c.b16 %v5305, %v5298
    %v5845 = vpack.c.b16 %v5306, %v5299
    %v5846 = vpack.c.b16 %v5307, %v5300
    %v5847 = vpack.c.b16 %v5308, %v5301
    %v5848 = vpack.c.b16 %v5309, %v5302
    %v5849 = vpack.c.b16 %v5310, %v5303
    %v5850 = vpack.c.b16 %v5318, %v5311
    %v5851 = vpack.c.b16 %v5319, %v5312
    %v5852 = vpack.c.b16 %v5320, %v5313
    %v5853 = vpack.c.b16 %v5321, %v5314
    %v5854 = vpack.c.b16 %v5322, %v5315
    %v5855 = vpack.c.b16 %v5323, %v5316
    %v5856 = vpack.c.b16 %v5324, %v5317
    %v5857 = vpack.c.b16 %v5332, %v5325
    %v5858 = vpack.c.b16 %v5333, %v5326
    %v5859 = vpack.c.b16 %v5334, %v5327
    %v5860 = vpack.c.b16 %v5335, %v5328
    %v5861 = vpack.c.b16 %v5336, %v5329
    %v5862 = vpack.c.b16 %v5337, %v5330
    %v5863 = vpack.c.b16 %v5338, %v5331
    %v5864 = vpack.c.b16 %v5346, %v5339
    %v5865 = vpack.c.b16 %v5347, %v5340
    %v5866 = vpack.c.b16 %v5348, %v5341
    %v5867 = vpack.c.b16 %v5349, %v5342
    %v5868 = vpack.c.b16 %v5350, %v5343
    %v5869 = vpack.c.b16 %v5351, %v5344
    %v5870 = vpack.c.b16 %v5352, %v5345
    %v5871 = vpack.c.b16 %v5360, %v5353
    %v5872 = vpack.c.b16 %v5361, %v5354
    %v5873 = vpack.c.b16 %v5362, %v5355
    %v5874 = vpack.c.b16 %v5363, %v5356
    %v5875 = vpack.c.b16 %v5364, %v5357
    %v5876 = vpack.c.b16 %v5365, %v5358
    %v5877 = vpack.c.b16 %v5366, %v5359
    %v5878 = vpack.c.b16 %v5374, %v5367
    %v5879 = vpack.c.b16 %v5375, %v5368
    %v5880 = vpack.c.b16 %v5376, %v5369
    %v5881 = vpack.c.b16 %v5377, %v5370
    %v5882 = vpack.c.b16 %v5378, %v5371
    %v5883 = vpack.c.b16 %v5379, %v5372
    %v5884 = vpack.c.b16 %v5380, %v5373
    %v5885 = vpack.c.b16 %v5388, %v5381
    %v5886 = vpack.c.b16 %v5389, %v5382
    %v5887 = vpack.c.b16 %v5390, %v5383
    %v5888 = vpack.c.b16 %v5391, %v5384
    %v5889 = vpack.c.b16 %v5392, %v5385
    %v5890 = vpack.c.b16 %v5393, %v5386
    %v5891 = vpack.c.b16 %v5394, %v5387
    %v5892 = vpack.c.b16 %v5402, %v5395
    %v5893 = vpack.c.b16 %v5403, %v5396
    %v5894 = vpack.c.b16 %v5404, %v5397
    %v5895 = vpack.c.b16 %v5405, %v5398
    %v5896 = vpack.c.b16 %v5406, %v5399
    %v5897 = vpack.c.b16 %v5407, %v5400
    %v5898 = vpack.c.b16 %v5408, %v5401
    %v5899 = vpack.c.b16 %v5416, %v5409
    %v5900 = vpack.c.b16 %v5417, %v5410
    %v5901 = vpack.c.b16 %v5418, %v5411
    %v5902 = vpack.c.b16 %v5419, %v5412
    %v5903 = vpack.c.b16 %v5420, %v5413
    %v5904 = vpack.c.b16 %v5421, %v5414
    %v5905 = vpack.c.b16 %v5422, %v5415
    %v5906 = vpack.c.b16 %v5430, %v5423
    %v5907 = vpack.c.b16 %v5431, %v5424
    %v5908 = vpack.c.b16 %v5432, %v5425
    %v5909 = vpack.c.b16 %v5433, %v5426
    %v5910 = vpack.c.b16 %v5434, %v5427
    %v5911 = vpack.c.b16 %v5435, %v5428
    %v5912 = vpack.c.b16 %v5436, %v5429
    %v5913 = vpack.c.b16 %v5444, %v5437
    %v5914 = vpack.c.b16 %v5445, %v5438
    %v5915 = vpack.c.b16 %v5446, %v5439
    %v5916 = vpack.c.b16 %v5447, %v5440
    %v5917 = vpack.c.b16 %v5448, %v5441
    %v5918 = vpack.c.b16 %v5449, %v5442
    %v5919 = vpack.c.b16 %v5450, %v5443
    %v5920 = vpack.c.b16 %v5458, %v5451
    %v5921 = vpack.c.b16 %v5459, %v5452
    %v5922 = vpack.c.b16 %v5460, %v5453
    %v5923 = vpack.c.b16 %v5461, %v5454
    %v5924 = vpack.c.b16 %v5462, %v5455
    %v5925 = vpack.c.b16 %v5463, %v5456
    %v5926 = vpack.c.b16 %v5464, %v5457
    %v5927 = vpack.c.b16 %v5472, %v5465
    %v5928 = vpack.c.b16 %v5473, %v5466
    %v5929 = vpack.c.b16 %v5474, %v5467
    %v5930 = vpack.c.b16 %v5475, %v5468
    %v5931 = vpack.c.b16 %v5476, %v5469
    %v5932 = vpack.c.b16 %v5477, %v5470
    %v5933 = vpack.c.b16 %v5478, %v5471
    %v5934 = vpack.c.b16 %v5486, %v5479
    %v5935 = vpack.c.b16 %v5487, %v5480
    %v5936 = vpack.c.b16 %v5488, %v5481
    %v5937 = vpack.c.b16 %v5489, %v5482
    %v5938 = vpack.c.b16 %v5490, %v5483
    %v5939 = vpack.c.b16 %v5491, %v5484
    %v5940 = vpack.c.b16 %v5492, %v5485
    %6389 = vmatpush.bf16.msra.mxu0 %v5542
    %6390 = vmatpush.bf16.msra.mxu0 %v5535
    %6391 = vmatpush.bf16.msra.mxu0 %v5528
    %6392 = vmatpush.bf16.msra.mxu0 %v5521
    %6393 = vmatpush.bf16.msra.mxu0 %v5514
    %6394 = vmatpush.bf16.msra.mxu0 %v5507
    %6395 = vmatpush.bf16.msra.mxu0 %v5500
    %6396 = vmatpush.bf16.msra.mxu0 %v5493
    %6397 = vmatmul.bf16.gmra.mxu0 %v4062
    %v6398 = vpop.f32.mrf.mxu0
    %v6399 = vadd.f32 %v4071, %v6398
    %v6400 = vpop.f32.mrf.mxu0
    %6401 = vdwg.mxu0
    %6402 = vmatpush.bf16.msra.mxu0 %v5598
    %6403 = vmatpush.bf16.msra.mxu0 %v5591
    %6404 = vmatpush.bf16.msra.mxu0 %v5584
    %6405 = vmatpush.bf16.msra.mxu0 %v5577
    %6406 = vmatpush.bf16.msra.mxu0 %v5570
    %6407 = vmatpush.bf16.msra.mxu0 %v5563
    %6408 = vmatpush.bf16.msra.mxu0 %v5556
    %6409 = vmatpush.bf16.msra.mxu0 %v5549
    %6410 = vmatmul.bf16.gmra.mxu0 %v4063
    %v6411 = vpop.f32.mrf.mxu0
    %v6412 = vadd.f32 %v6399, %v6411
    %v6413 = vpop.f32.mrf.mxu0
    %6414 = vdwg.mxu0
    %6415 = vmatpush.bf16.msra.mxu0 %v5654
    %6416 = vmatpush.bf16.msra.mxu0 %v5647
    %6417 = vmatpush.bf16.msra.mxu0 %v5640
    %6418 = vmatpush.bf16.msra.mxu0 %v5633
    %6419 = vmatpush.bf16.msra.mxu0 %v5626
    %6420 = vmatpush.bf16.msra.mxu0 %v5619
    %6421 = vmatpush.bf16.msra.mxu0 %v5612
    %6422 = vmatpush.bf16.msra.mxu0 %v5605
    %6423 = vmatmul.bf16.gmra.mxu0 %v4064
    %v6424 = vpop.f32.mrf.mxu0
    %v6425 = vadd.f32 %v6412, %v6424
    %v6426 = vpop.f32.mrf.mxu0
    %6427 = vdwg.mxu0
    %6428 = vmatpush.bf16.msra.mxu0 %v5710
    %6429 = vmatpush.bf16.msra.mxu0 %v5703
    %6430 = vmatpush.bf16.msra.mxu0 %v5696
    %6431 = vmatpush.bf16.msra.mxu0 %v5689
    %6432 = vmatpush.bf16.msra.mxu0 %v5682
    %6433 = vmatpush.bf16.msra.mxu0 %v5675
    %6434 = vmatpush.bf16.msra.mxu0 %v5668
    %6435 = vmatpush.bf16.msra.mxu0 %v5661
    %6436 = vmatmul.bf16.gmra.mxu0 %v4065
    %v6437 = vpop.f32.mrf.mxu0
    %v6438 = vadd.f32 %v6425, %v6437
    %v6439 = vpop.f32.mrf.mxu0
    %6440 = vdwg.mxu0
    %6441 = vmatpush.bf16.msra.mxu0 %v5766
    %6442 = vmatpush.bf16.msra.mxu0 %v5759
    %6443 = vmatpush.bf16.msra.mxu0 %v5752
    %6444 = vmatpush.bf16.msra.mxu0 %v5745
    %6445 = vmatpush.bf16.msra.mxu0 %v5738
    %6446 = vmatpush.bf16.msra.mxu0 %v5731
    %6447 = vmatpush.bf16.msra.mxu0 %v5724
    %6448 = vmatpush.bf16.msra.mxu0 %v5717
    %6449 = vmatmul.bf16.gmra.mxu0 %v4066
    %v6450 = vpop.f32.mrf.mxu0
    %v6451 = vadd.f32 %v6438, %v6450
    %v6452 = vpop.f32.mrf.mxu0
    %6453 = vdwg.mxu0
    %6454 = vmatpush.bf16.msra.mxu0 %v5822
    %6455 = vmatpush.bf16.msra.mxu0 %v5815
    %6456 = vmatpush.bf16.msra.mxu0 %v5808
    %6457 = vmatpush.bf16.msra.mxu0 %v5801
    %6458 = vmatpush.bf16.msra.mxu0 %v5794
    %6459 = vmatpush.bf16.msra.mxu0 %v5787
    %6460 = vmatpush.bf16.msra.mxu0 %v5780
    %6461 = vmatpush.bf16.msra.mxu0 %v5773
    %6462 = vmatmul.bf16.gmra.mxu0 %v4067
    %v6463 = vpop.f32.mrf.mxu0
    %v6464 = vadd.f32 %v6451, %v6463
    %v6465 = vpop.f32.mrf.mxu0
    %6466 = vdwg.mxu0
    %6467 = vmatpush.bf16.msra.mxu0 %v5878
    %6468 = vmatpush.bf16.msra.mxu0 %v5871
    %6469 = vmatpush.bf16.msra.mxu0 %v5864
    %6470 = vmatpush.bf16.msra.mxu0 %v5857
    %6471 = vmatpush.bf16.msra.mxu0 %v5850
    %6472 = vmatpush.bf16.msra.mxu0 %v5843
    %6473 = vmatpush.bf16.msra.mxu0 %v5836
    %6474 = vmatpush.bf16.msra.mxu0 %v5829
    %6475 = vmatmul.bf16.gmra.mxu0 %v4068
    %v6476 = vpop.f32.mrf.mxu0
    %v6477 = vadd.f32 %v6464, %v6476
    %v6478 = vpop.f32.mrf.mxu0
    %6479 = vdwg.mxu0
    %6480 = vmatpush.bf16.msra.mxu0 %v5934
    %6481 = vmatpush.bf16.msra.mxu0 %v5927
    %6482 = vmatpush.bf16.msra.mxu0 %v5920
    %6483 = vmatpush.bf16.msra.mxu0 %v5913
    %6484 = vmatpush.bf16.msra.mxu0 %v5906
    %6485 = vmatpush.bf16.msra.mxu0 %v5899
    %6486 = vmatpush.bf16.msra.mxu0 %v5892
    %6487 = vmatpush.bf16.msra.mxu0 %v5885
    %6488 = vmatmul.bf16.gmra.mxu0 %v4069
    %v6489 = vpop.f32.mrf.mxu0
    %v6490 = vadd.f32 %v6477, %v6489
    %v6491 = vpop.f32.mrf.mxu0
    %6492 = vdwg.mxu0
    %6493 = vmatpush.bf16.msra.mxu0 %v5543
    %6494 = vmatpush.bf16.msra.mxu0 %v5536
    %6495 = vmatpush.bf16.msra.mxu0 %v5529
    %6496 = vmatpush.bf16.msra.mxu0 %v5522
    %6497 = vmatpush.bf16.msra.mxu0 %v5515
    %6498 = vmatpush.bf16.msra.mxu0 %v5508
    %6499 = vmatpush.bf16.msra.mxu0 %v5501
    %6500 = vmatpush.bf16.msra.mxu0 %v5494
    %6501 = vmatmul.bf16.gmra.mxu0 %v4062
    %v6502 = vpop.f32.mrf.mxu0
    %v6503 = vadd.f32 %v4072, %v6502
    %v6504 = vpop.f32.mrf.mxu0
    %6505 = vdwg.mxu0
    %6506 = vmatpush.bf16.msra.mxu0 %v5599
    %6507 = vmatpush.bf16.msra.mxu0 %v5592
    %6508 = vmatpush.bf16.msra.mxu0 %v5585
    %6509 = vmatpush.bf16.msra.mxu0 %v5578
    %6510 = vmatpush.bf16.msra.mxu0 %v5571
    %6511 = vmatpush.bf16.msra.mxu0 %v5564
    %6512 = vmatpush.bf16.msra.mxu0 %v5557
    %6513 = vmatpush.bf16.msra.mxu0 %v5550
    %6514 = vmatmul.bf16.gmra.mxu0 %v4063
    %v6515 = vpop.f32.mrf.mxu0
    %v6516 = vadd.f32 %v6503, %v6515
    %v6517 = vpop.f32.mrf.mxu0
    %6518 = vdwg.mxu0
    %6519 = vmatpush.bf16.msra.mxu0 %v5655
    %6520 = vmatpush.bf16.msra.mxu0 %v5648
    %6521 = vmatpush.bf16.msra.mxu0 %v5641
    %6522 = vmatpush.bf16.msra.mxu0 %v5634
    %6523 = vmatpush.bf16.msra.mxu0 %v5627
    %6524 = vmatpush.bf16.msra.mxu0 %v5620
    %6525 = vmatpush.bf16.msra.mxu0 %v5613
    %6526 = vmatpush.bf16.msra.mxu0 %v5606
    %6527 = vmatmul.bf16.gmra.mxu0 %v4064
    %v6528 = vpop.f32.mrf.mxu0
    %v6529 = vadd.f32 %v6516, %v6528
    %v6530 = vpop.f32.mrf.mxu0
    %6531 = vdwg.mxu0
    %6532 = vmatpush.bf16.msra.mxu0 %v5711
    %6533 = vmatpush.bf16.msra.mxu0 %v5704
    %6534 = vmatpush.bf16.msra.mxu0 %v5697
    %6535 = vmatpush.bf16.msra.mxu0 %v5690
    %6536 = vmatpush.bf16.msra.mxu0 %v5683
    %6537 = vmatpush.bf16.msra.mxu0 %v5676
    %6538 = vmatpush.bf16.msra.mxu0 %v5669
    %6539 = vmatpush.bf16.msra.mxu0 %v5662
    %6540 = vmatmul.bf16.gmra.mxu0 %v4065
    %v6541 = vpop.f32.mrf.mxu0
    %v6542 = vadd.f32 %v6529, %v6541
    %v6543 = vpop.f32.mrf.mxu0
    %6544 = vdwg.mxu0
    %6545 = vmatpush.bf16.msra.mxu0 %v5767
    %6546 = vmatpush.bf16.msra.mxu0 %v5760
    %6547 = vmatpush.bf16.msra.mxu0 %v5753
    %6548 = vmatpush.bf16.msra.mxu0 %v5746
    %6549 = vmatpush.bf16.msra.mxu0 %v5739
    %6550 = vmatpush.bf16.msra.mxu0 %v5732
    %6551 = vmatpush.bf16.msra.mxu0 %v5725
    %6552 = vmatpush.bf16.msra.mxu0 %v5718
    %6553 = vmatmul.bf16.gmra.mxu0 %v4066
    %v6554 = vpop.f32.mrf.mxu0
    %v6555 = vadd.f32 %v6542, %v6554
    %v6556 = vpop.f32.mrf.mxu0
    %6557 = vdwg.mxu0
    %6558 = vmatpush.bf16.msra.mxu0 %v5823
    %6559 = vmatpush.bf16.msra.mxu0 %v5816
    %6560 = vmatpush.bf16.msra.mxu0 %v5809
    %6561 = vmatpush.bf16.msra.mxu0 %v5802
    %6562 = vmatpush.bf16.msra.mxu0 %v5795
    %6563 = vmatpush.bf16.msra.mxu0 %v5788
    %6564 = vmatpush.bf16.msra.mxu0 %v5781
    %6565 = vmatpush.bf16.msra.mxu0 %v5774
    %6566 = vmatmul.bf16.gmra.mxu0 %v4067
    %v6567 = vpop.f32.mrf.mxu0
    %v6568 = vadd.f32 %v6555, %v6567
    %v6569 = vpop.f32.mrf.mxu0
    %6570 = vdwg.mxu0
    %6571 = vmatpush.bf16.msra.mxu0 %v5879
    %6572 = vmatpush.bf16.msra.mxu0 %v5872
    %6573 = vmatpush.bf16.msra.mxu0 %v5865
    %6574 = vmatpush.bf16.msra.mxu0 %v5858
    %6575 = vmatpush.bf16.msra.mxu0 %v5851
    %6576 = vmatpush.bf16.msra.mxu0 %v5844
    %6577 = vmatpush.bf16.msra.mxu0 %v5837
    %6578 = vmatpush.bf16.msra.mxu0 %v5830
    %6579 = vmatmul.bf16.gmra.mxu0 %v4068
    %v6580 = vpop.f32.mrf.mxu0
    %v6581 = vadd.f32 %v6568, %v6580
    %v6582 = vpop.f32.mrf.mxu0
    %6583 = vdwg.mxu0
    %6584 = vmatpush.bf16.msra.mxu0 %v5935
    %6585 = vmatpush.bf16.msra.mxu0 %v5928
    %6586 = vmatpush.bf16.msra.mxu0 %v5921
    %6587 = vmatpush.bf16.msra.mxu0 %v5914
    %6588 = vmatpush.bf16.msra.mxu0 %v5907
    %6589 = vmatpush.bf16.msra.mxu0 %v5900
    %6590 = vmatpush.bf16.msra.mxu0 %v5893
    %6591 = vmatpush.bf16.msra.mxu0 %v5886
    %6592 = vmatmul.bf16.gmra.mxu0 %v4069
    %v6593 = vpop.f32.mrf.mxu0
    %v6594 = vadd.f32 %v6581, %v6593
    %v6595 = vpop.f32.mrf.mxu0
    %6596 = vdwg.mxu0
    %6597 = vmatpush.bf16.msra.mxu0 %v5544
    %6598 = vmatpush.bf16.msra.mxu0 %v5537
    %6599 = vmatpush.bf16.msra.mxu0 %v5530
    %6600 = vmatpush.bf16.msra.mxu0 %v5523
    %6601 = vmatpush.bf16.msra.mxu0 %v5516
    %6602 = vmatpush.bf16.msra.mxu0 %v5509
    %6603 = vmatpush.bf16.msra.mxu0 %v5502
    %6604 = vmatpush.bf16.msra.mxu0 %v5495
    %6605 = vmatmul.bf16.gmra.mxu0 %v4062
    %v6606 = vpop.f32.mrf.mxu0
    %v6607 = vadd.f32 %v4073, %v6606
    %v6608 = vpop.f32.mrf.mxu0
    %6609 = vdwg.mxu0
    %6610 = vmatpush.bf16.msra.mxu0 %v5600
    %6611 = vmatpush.bf16.msra.mxu0 %v5593
    %6612 = vmatpush.bf16.msra.mxu0 %v5586
    %6613 = vmatpush.bf16.msra.mxu0 %v5579
    %6614 = vmatpush.bf16.msra.mxu0 %v5572
    %6615 = vmatpush.bf16.msra.mxu0 %v5565
    %6616 = vmatpush.bf16.msra.mxu0 %v5558
    %6617 = vmatpush.bf16.msra.mxu0 %v5551
    %6618 = vmatmul.bf16.gmra.mxu0 %v4063
    %v6619 = vpop.f32.mrf.mxu0
    %v6620 = vadd.f32 %v6607, %v6619
    %v6621 = vpop.f32.mrf.mxu0
    %6622 = vdwg.mxu0
    %6623 = vmatpush.bf16.msra.mxu0 %v5656
    %6624 = vmatpush.bf16.msra.mxu0 %v5649
    %6625 = vmatpush.bf16.msra.mxu0 %v5642
    %6626 = vmatpush.bf16.msra.mxu0 %v5635
    %6627 = vmatpush.bf16.msra.mxu0 %v5628
    %6628 = vmatpush.bf16.msra.mxu0 %v5621
    %6629 = vmatpush.bf16.msra.mxu0 %v5614
    %6630 = vmatpush.bf16.msra.mxu0 %v5607
    %6631 = vmatmul.bf16.gmra.mxu0 %v4064
    %v6632 = vpop.f32.mrf.mxu0
    %v6633 = vadd.f32 %v6620, %v6632
    %v6634 = vpop.f32.mrf.mxu0
    %6635 = vdwg.mxu0
    %6636 = vmatpush.bf16.msra.mxu0 %v5712
    %6637 = vmatpush.bf16.msra.mxu0 %v5705
    %6638 = vmatpush.bf16.msra.mxu0 %v5698
    %6639 = vmatpush.bf16.msra.mxu0 %v5691
    %6640 = vmatpush.bf16.msra.mxu0 %v5684
    %6641 = vmatpush.bf16.msra.mxu0 %v5677
    %6642 = vmatpush.bf16.msra.mxu0 %v5670
    %6643 = vmatpush.bf16.msra.mxu0 %v5663
    %6644 = vmatmul.bf16.gmra.mxu0 %v4065
    %v6645 = vpop.f32.mrf.mxu0
    %v6646 = vadd.f32 %v6633, %v6645
    %v6647 = vpop.f32.mrf.mxu0
    %6648 = vdwg.mxu0
    %6649 = vmatpush.bf16.msra.mxu0 %v5768
    %6650 = vmatpush.bf16.msra.mxu0 %v5761
    %6651 = vmatpush.bf16.msra.mxu0 %v5754
    %6652 = vmatpush.bf16.msra.mxu0 %v5747
    %6653 = vmatpush.bf16.msra.mxu0 %v5740
    %6654 = vmatpush.bf16.msra.mxu0 %v5733
    %6655 = vmatpush.bf16.msra.mxu0 %v5726
    %6656 = vmatpush.bf16.msra.mxu0 %v5719
    %6657 = vmatmul.bf16.gmra.mxu0 %v4066
    %v6658 = vpop.f32.mrf.mxu0
    %v6659 = vadd.f32 %v6646, %v6658
    %v6660 = vpop.f32.mrf.mxu0
    %6661 = vdwg.mxu0
    %6662 = vmatpush.bf16.msra.mxu0 %v5824
    %6663 = vmatpush.bf16.msra.mxu0 %v5817
    %6664 = vmatpush.bf16.msra.mxu0 %v5810
    %6665 = vmatpush.bf16.msra.mxu0 %v5803
    %6666 = vmatpush.bf16.msra.mxu0 %v5796
    %6667 = vmatpush.bf16.msra.mxu0 %v5789
    %6668 = vmatpush.bf16.msra.mxu0 %v5782
    %6669 = vmatpush.bf16.msra.mxu0 %v5775
    %6670 = vmatmul.bf16.gmra.mxu0 %v4067
    %v6671 = vpop.f32.mrf.mxu0
    %v6672 = vadd.f32 %v6659, %v6671
    %v6673 = vpop.f32.mrf.mxu0
    %6674 = vdwg.mxu0
    %6675 = vmatpush.bf16.msra.mxu0 %v5880
    %6676 = vmatpush.bf16.msra.mxu0 %v5873
    %6677 = vmatpush.bf16.msra.mxu0 %v5866
    %6678 = vmatpush.bf16.msra.mxu0 %v5859
    %6679 = vmatpush.bf16.msra.mxu0 %v5852
    %6680 = vmatpush.bf16.msra.mxu0 %v5845
    %6681 = vmatpush.bf16.msra.mxu0 %v5838
    %6682 = vmatpush.bf16.msra.mxu0 %v5831
    %6683 = vmatmul.bf16.gmra.mxu0 %v4068
    %v6684 = vpop.f32.mrf.mxu0
    %v6685 = vadd.f32 %v6672, %v6684
    %v6686 = vpop.f32.mrf.mxu0
    %6687 = vdwg.mxu0
    %6688 = vmatpush.bf16.msra.mxu0 %v5936
    %6689 = vmatpush.bf16.msra.mxu0 %v5929
    %6690 = vmatpush.bf16.msra.mxu0 %v5922
    %6691 = vmatpush.bf16.msra.mxu0 %v5915
    %6692 = vmatpush.bf16.msra.mxu0 %v5908
    %6693 = vmatpush.bf16.msra.mxu0 %v5901
    %6694 = vmatpush.bf16.msra.mxu0 %v5894
    %6695 = vmatpush.bf16.msra.mxu0 %v5887
    %6696 = vmatmul.bf16.gmra.mxu0 %v4069
    %v6697 = vpop.f32.mrf.mxu0
    %v6698 = vadd.f32 %v6685, %v6697
    %v6699 = vpop.f32.mrf.mxu0
    %6700 = vdwg.mxu0
    %6701 = vmatpush.bf16.msra.mxu0 %v5545
    %6702 = vmatpush.bf16.msra.mxu0 %v5538
    %6703 = vmatpush.bf16.msra.mxu0 %v5531
    %6704 = vmatpush.bf16.msra.mxu0 %v5524
    %6705 = vmatpush.bf16.msra.mxu0 %v5517
    %6706 = vmatpush.bf16.msra.mxu0 %v5510
    %6707 = vmatpush.bf16.msra.mxu0 %v5503
    %6708 = vmatpush.bf16.msra.mxu0 %v5496
    %6709 = vmatmul.bf16.gmra.mxu0 %v4062
    %v6710 = vpop.f32.mrf.mxu0
    %v6711 = vadd.f32 %v4074, %v6710
    %v6712 = vpop.f32.mrf.mxu0
    %6713 = vdwg.mxu0
    %6714 = vmatpush.bf16.msra.mxu0 %v5601
    %6715 = vmatpush.bf16.msra.mxu0 %v5594
    %6716 = vmatpush.bf16.msra.mxu0 %v5587
    %6717 = vmatpush.bf16.msra.mxu0 %v5580
    %6718 = vmatpush.bf16.msra.mxu0 %v5573
    %6719 = vmatpush.bf16.msra.mxu0 %v5566
    %6720 = vmatpush.bf16.msra.mxu0 %v5559
    %6721 = vmatpush.bf16.msra.mxu0 %v5552
    %6722 = vmatmul.bf16.gmra.mxu0 %v4063
    %v6723 = vpop.f32.mrf.mxu0
    %v6724 = vadd.f32 %v6711, %v6723
    %v6725 = vpop.f32.mrf.mxu0
    %6726 = vdwg.mxu0
    %6727 = vmatpush.bf16.msra.mxu0 %v5657
    %6728 = vmatpush.bf16.msra.mxu0 %v5650
    %6729 = vmatpush.bf16.msra.mxu0 %v5643
    %6730 = vmatpush.bf16.msra.mxu0 %v5636
    %6731 = vmatpush.bf16.msra.mxu0 %v5629
    %6732 = vmatpush.bf16.msra.mxu0 %v5622
    %6733 = vmatpush.bf16.msra.mxu0 %v5615
    %6734 = vmatpush.bf16.msra.mxu0 %v5608
    %6735 = vmatmul.bf16.gmra.mxu0 %v4064
    %v6736 = vpop.f32.mrf.mxu0
    %v6737 = vadd.f32 %v6724, %v6736
    %v6738 = vpop.f32.mrf.mxu0
    %6739 = vdwg.mxu0
    %6740 = vmatpush.bf16.msra.mxu0 %v5713
    %6741 = vmatpush.bf16.msra.mxu0 %v5706
    %6742 = vmatpush.bf16.msra.mxu0 %v5699
    %6743 = vmatpush.bf16.msra.mxu0 %v5692
    %6744 = vmatpush.bf16.msra.mxu0 %v5685
    %6745 = vmatpush.bf16.msra.mxu0 %v5678
    %6746 = vmatpush.bf16.msra.mxu0 %v5671
    %6747 = vmatpush.bf16.msra.mxu0 %v5664
    %6748 = vmatmul.bf16.gmra.mxu0 %v4065
    %v6749 = vpop.f32.mrf.mxu0
    %v6750 = vadd.f32 %v6737, %v6749
    %v6751 = vpop.f32.mrf.mxu0
    %6752 = vdwg.mxu0
    %6753 = vmatpush.bf16.msra.mxu0 %v5769
    %6754 = vmatpush.bf16.msra.mxu0 %v5762
    %6755 = vmatpush.bf16.msra.mxu0 %v5755
    %6756 = vmatpush.bf16.msra.mxu0 %v5748
    %6757 = vmatpush.bf16.msra.mxu0 %v5741
    %6758 = vmatpush.bf16.msra.mxu0 %v5734
    %6759 = vmatpush.bf16.msra.mxu0 %v5727
    %6760 = vmatpush.bf16.msra.mxu0 %v5720
    %6761 = vmatmul.bf16.gmra.mxu0 %v4066
    %v6762 = vpop.f32.mrf.mxu0
    %v6763 = vadd.f32 %v6750, %v6762
    %v6764 = vpop.f32.mrf.mxu0
    %6765 = vdwg.mxu0
    %6766 = vmatpush.bf16.msra.mxu0 %v5825
    %6767 = vmatpush.bf16.msra.mxu0 %v5818
    %6768 = vmatpush.bf16.msra.mxu0 %v5811
    %6769 = vmatpush.bf16.msra.mxu0 %v5804
    %6770 = vmatpush.bf16.msra.mxu0 %v5797
    %6771 = vmatpush.bf16.msra.mxu0 %v5790
    %6772 = vmatpush.bf16.msra.mxu0 %v5783
    %6773 = vmatpush.bf16.msra.mxu0 %v5776
    %6774 = vmatmul.bf16.gmra.mxu0 %v4067
    %v6775 = vpop.f32.mrf.mxu0
    %v6776 = vadd.f32 %v6763, %v6775
    %v6777 = vpop.f32.mrf.mxu0
    %6778 = vdwg.mxu0
    %6779 = vmatpush.bf16.msra.mxu0 %v5881
    %6780 = vmatpush.bf16.msra.mxu0 %v5874
    %6781 = vmatpush.bf16.msra.mxu0 %v5867
    %6782 = vmatpush.bf16.msra.mxu0 %v5860
    %6783 = vmatpush.bf16.msra.mxu0 %v5853
    %6784 = vmatpush.bf16.msra.mxu0 %v5846
    %6785 = vmatpush.bf16.msra.mxu0 %v5839
    %6786 = vmatpush.bf16.msra.mxu0 %v5832
    %6787 = vmatmul.bf16.gmra.mxu0 %v4068
    %v6788 = vpop.f32.mrf.mxu0
    %v6789 = vadd.f32 %v6776, %v6788
    %v6790 = vpop.f32.mrf.mxu0
    %6791 = vdwg.mxu0
    %6792 = vmatpush.bf16.msra.mxu0 %v5937
    %6793 = vmatpush.bf16.msra.mxu0 %v5930
    %6794 = vmatpush.bf16.msra.mxu0 %v5923
    %6795 = vmatpush.bf16.msra.mxu0 %v5916
    %6796 = vmatpush.bf16.msra.mxu0 %v5909
    %6797 = vmatpush.bf16.msra.mxu0 %v5902
    %6798 = vmatpush.bf16.msra.mxu0 %v5895
    %6799 = vmatpush.bf16.msra.mxu0 %v5888
    %6800 = vmatmul.bf16.gmra.mxu0 %v4069
    %v6801 = vpop.f32.mrf.mxu0
    %v6802 = vadd.f32 %v6789, %v6801
    %v6803 = vpop.f32.mrf.mxu0
    %6804 = vdwg.mxu0
    %6805 = vmatpush.bf16.msra.mxu0 %v5546
    %6806 = vmatpush.bf16.msra.mxu0 %v5539
    %6807 = vmatpush.bf16.msra.mxu0 %v5532
    %6808 = vmatpush.bf16.msra.mxu0 %v5525
    %6809 = vmatpush.bf16.msra.mxu0 %v5518
    %6810 = vmatpush.bf16.msra.mxu0 %v5511
    %6811 = vmatpush.bf16.msra.mxu0 %v5504
    %6812 = vmatpush.bf16.msra.mxu0 %v5497
    %6813 = vmatmul.bf16.gmra.mxu0 %v4062
    %v6814 = vpop.f32.mrf.mxu0
    %v6815 = vadd.f32 %v4075, %v6814
    %v6816 = vpop.f32.mrf.mxu0
    %6817 = vdwg.mxu0
    %6818 = vmatpush.bf16.msra.mxu0 %v5602
    %6819 = vmatpush.bf16.msra.mxu0 %v5595
    %6820 = vmatpush.bf16.msra.mxu0 %v5588
    %6821 = vmatpush.bf16.msra.mxu0 %v5581
    %6822 = vmatpush.bf16.msra.mxu0 %v5574
    %6823 = vmatpush.bf16.msra.mxu0 %v5567
    %6824 = vmatpush.bf16.msra.mxu0 %v5560
    %6825 = vmatpush.bf16.msra.mxu0 %v5553
    %6826 = vmatmul.bf16.gmra.mxu0 %v4063
    %v6827 = vpop.f32.mrf.mxu0
    %v6828 = vadd.f32 %v6815, %v6827
    %v6829 = vpop.f32.mrf.mxu0
    %6830 = vdwg.mxu0
    %6831 = vmatpush.bf16.msra.mxu0 %v5658
    %6832 = vmatpush.bf16.msra.mxu0 %v5651
    %6833 = vmatpush.bf16.msra.mxu0 %v5644
    %6834 = vmatpush.bf16.msra.mxu0 %v5637
    %6835 = vmatpush.bf16.msra.mxu0 %v5630
    %6836 = vmatpush.bf16.msra.mxu0 %v5623
    %6837 = vmatpush.bf16.msra.mxu0 %v5616
    %6838 = vmatpush.bf16.msra.mxu0 %v5609
    %6839 = vmatmul.bf16.gmra.mxu0 %v4064
    %v6840 = vpop.f32.mrf.mxu0
    %v6841 = vadd.f32 %v6828, %v6840
    %v6842 = vpop.f32.mrf.mxu0
    %6843 = vdwg.mxu0
    %6844 = vmatpush.bf16.msra.mxu0 %v5714
    %6845 = vmatpush.bf16.msra.mxu0 %v5707
    %6846 = vmatpush.bf16.msra.mxu0 %v5700
    %6847 = vmatpush.bf16.msra.mxu0 %v5693
    %6848 = vmatpush.bf16.msra.mxu0 %v5686
    %6849 = vmatpush.bf16.msra.mxu0 %v5679
    %6850 = vmatpush.bf16.msra.mxu0 %v5672
    %6851 = vmatpush.bf16.msra.mxu0 %v5665
    %6852 = vmatmul.bf16.gmra.mxu0 %v4065
    %v6853 = vpop.f32.mrf.mxu0
    %v6854 = vadd.f32 %v6841, %v6853
    %v6855 = vpop.f32.mrf.mxu0
    %6856 = vdwg.mxu0
    %6857 = vmatpush.bf16.msra.mxu0 %v5770
    %6858 = vmatpush.bf16.msra.mxu0 %v5763
    %6859 = vmatpush.bf16.msra.mxu0 %v5756
    %6860 = vmatpush.bf16.msra.mxu0 %v5749
    %6861 = vmatpush.bf16.msra.mxu0 %v5742
    %6862 = vmatpush.bf16.msra.mxu0 %v5735
    %6863 = vmatpush.bf16.msra.mxu0 %v5728
    %6864 = vmatpush.bf16.msra.mxu0 %v5721
    %6865 = vmatmul.bf16.gmra.mxu0 %v4066
    %v6866 = vpop.f32.mrf.mxu0
    %v6867 = vadd.f32 %v6854, %v6866
    %v6868 = vpop.f32.mrf.mxu0
    %6869 = vdwg.mxu0
    %6870 = vmatpush.bf16.msra.mxu0 %v5826
    %6871 = vmatpush.bf16.msra.mxu0 %v5819
    %6872 = vmatpush.bf16.msra.mxu0 %v5812
    %6873 = vmatpush.bf16.msra.mxu0 %v5805
    %6874 = vmatpush.bf16.msra.mxu0 %v5798
    %6875 = vmatpush.bf16.msra.mxu0 %v5791
    %6876 = vmatpush.bf16.msra.mxu0 %v5784
    %6877 = vmatpush.bf16.msra.mxu0 %v5777
    %6878 = vmatmul.bf16.gmra.mxu0 %v4067
    %v6879 = vpop.f32.mrf.mxu0
    %v6880 = vadd.f32 %v6867, %v6879
    %v6881 = vpop.f32.mrf.mxu0
    %6882 = vdwg.mxu0
    %6883 = vmatpush.bf16.msra.mxu0 %v5882
    %6884 = vmatpush.bf16.msra.mxu0 %v5875
    %6885 = vmatpush.bf16.msra.mxu0 %v5868
    %6886 = vmatpush.bf16.msra.mxu0 %v5861
    %6887 = vmatpush.bf16.msra.mxu0 %v5854
    %6888 = vmatpush.bf16.msra.mxu0 %v5847
    %6889 = vmatpush.bf16.msra.mxu0 %v5840
    %6890 = vmatpush.bf16.msra.mxu0 %v5833
    %6891 = vmatmul.bf16.gmra.mxu0 %v4068
    %v6892 = vpop.f32.mrf.mxu0
    %v6893 = vadd.f32 %v6880, %v6892
    %v6894 = vpop.f32.mrf.mxu0
    %6895 = vdwg.mxu0
    %6896 = vmatpush.bf16.msra.mxu0 %v5938
    %6897 = vmatpush.bf16.msra.mxu0 %v5931
    %6898 = vmatpush.bf16.msra.mxu0 %v5924
    %6899 = vmatpush.bf16.msra.mxu0 %v5917
    %6900 = vmatpush.bf16.msra.mxu0 %v5910
    %6901 = vmatpush.bf16.msra.mxu0 %v5903
    %6902 = vmatpush.bf16.msra.mxu0 %v5896
    %6903 = vmatpush.bf16.msra.mxu0 %v5889
    %6904 = vmatmul.bf16.gmra.mxu0 %v4069
    %v6905 = vpop.f32.mrf.mxu0
    %v6906 = vadd.f32 %v6893, %v6905
    %v6907 = vpop.f32.mrf.mxu0
    %6908 = vdwg.mxu0
    %6909 = vmatpush.bf16.msra.mxu0 %v5547
    %6910 = vmatpush.bf16.msra.mxu0 %v5540
    %6911 = vmatpush.bf16.msra.mxu0 %v5533
    %6912 = vmatpush.bf16.msra.mxu0 %v5526
    %6913 = vmatpush.bf16.msra.mxu0 %v5519
    %6914 = vmatpush.bf16.msra.mxu0 %v5512
    %6915 = vmatpush.bf16.msra.mxu0 %v5505
    %6916 = vmatpush.bf16.msra.mxu0 %v5498
    %6917 = vmatmul.bf16.gmra.mxu0 %v4062
    %v6918 = vpop.f32.mrf.mxu0
    %v6919 = vadd.f32 %v4076, %v6918
    %v6920 = vpop.f32.mrf.mxu0
    %6921 = vdwg.mxu0
    %6922 = vmatpush.bf16.msra.mxu0 %v5603
    %6923 = vmatpush.bf16.msra.mxu0 %v5596
    %6924 = vmatpush.bf16.msra.mxu0 %v5589
    %6925 = vmatpush.bf16.msra.mxu0 %v5582
    %6926 = vmatpush.bf16.msra.mxu0 %v5575
    %6927 = vmatpush.bf16.msra.mxu0 %v5568
    %6928 = vmatpush.bf16.msra.mxu0 %v5561
    %6929 = vmatpush.bf16.msra.mxu0 %v5554
    %6930 = vmatmul.bf16.gmra.mxu0 %v4063
    %v6931 = vpop.f32.mrf.mxu0
    %v6932 = vadd.f32 %v6919, %v6931
    %v6933 = vpop.f32.mrf.mxu0
    %6934 = vdwg.mxu0
    %6935 = vmatpush.bf16.msra.mxu0 %v5659
    %6936 = vmatpush.bf16.msra.mxu0 %v5652
    %6937 = vmatpush.bf16.msra.mxu0 %v5645
    %6938 = vmatpush.bf16.msra.mxu0 %v5638
    %6939 = vmatpush.bf16.msra.mxu0 %v5631
    %6940 = vmatpush.bf16.msra.mxu0 %v5624
    %6941 = vmatpush.bf16.msra.mxu0 %v5617
    %6942 = vmatpush.bf16.msra.mxu0 %v5610
    %6943 = vmatmul.bf16.gmra.mxu0 %v4064
    %v6944 = vpop.f32.mrf.mxu0
    %v6945 = vadd.f32 %v6932, %v6944
    %v6946 = vpop.f32.mrf.mxu0
    %6947 = vdwg.mxu0
    %6948 = vmatpush.bf16.msra.mxu0 %v5715
    %6949 = vmatpush.bf16.msra.mxu0 %v5708
    %6950 = vmatpush.bf16.msra.mxu0 %v5701
    %6951 = vmatpush.bf16.msra.mxu0 %v5694
    %6952 = vmatpush.bf16.msra.mxu0 %v5687
    %6953 = vmatpush.bf16.msra.mxu0 %v5680
    %6954 = vmatpush.bf16.msra.mxu0 %v5673
    %6955 = vmatpush.bf16.msra.mxu0 %v5666
    %6956 = vmatmul.bf16.gmra.mxu0 %v4065
    %v6957 = vpop.f32.mrf.mxu0
    %v6958 = vadd.f32 %v6945, %v6957
    %v6959 = vpop.f32.mrf.mxu0
    %6960 = vdwg.mxu0
    %6961 = vmatpush.bf16.msra.mxu0 %v5771
    %6962 = vmatpush.bf16.msra.mxu0 %v5764
    %6963 = vmatpush.bf16.msra.mxu0 %v5757
    %6964 = vmatpush.bf16.msra.mxu0 %v5750
    %6965 = vmatpush.bf16.msra.mxu0 %v5743
    %6966 = vmatpush.bf16.msra.mxu0 %v5736
    %6967 = vmatpush.bf16.msra.mxu0 %v5729
    %6968 = vmatpush.bf16.msra.mxu0 %v5722
    %6969 = vmatmul.bf16.gmra.mxu0 %v4066
    %v6970 = vpop.f32.mrf.mxu0
    %v6971 = vadd.f32 %v6958, %v6970
    %v6972 = vpop.f32.mrf.mxu0
    %6973 = vdwg.mxu0
    %6974 = vmatpush.bf16.msra.mxu0 %v5827
    %6975 = vmatpush.bf16.msra.mxu0 %v5820
    %6976 = vmatpush.bf16.msra.mxu0 %v5813
    %6977 = vmatpush.bf16.msra.mxu0 %v5806
    %6978 = vmatpush.bf16.msra.mxu0 %v5799
    %6979 = vmatpush.bf16.msra.mxu0 %v5792
    %6980 = vmatpush.bf16.msra.mxu0 %v5785
    %6981 = vmatpush.bf16.msra.mxu0 %v5778
    %6982 = vmatmul.bf16.gmra.mxu0 %v4067
    %v6983 = vpop.f32.mrf.mxu0
    %v6984 = vadd.f32 %v6971, %v6983
    %v6985 = vpop.f32.mrf.mxu0
    %6986 = vdwg.mxu0
    %6987 = vmatpush.bf16.msra.mxu0 %v5883
    %6988 = vmatpush.bf16.msra.mxu0 %v5876
    %6989 = vmatpush.bf16.msra.mxu0 %v5869
    %6990 = vmatpush.bf16.msra.mxu0 %v5862
    %6991 = vmatpush.bf16.msra.mxu0 %v5855
    %6992 = vmatpush.bf16.msra.mxu0 %v5848
    %6993 = vmatpush.bf16.msra.mxu0 %v5841
    %6994 = vmatpush.bf16.msra.mxu0 %v5834
    %6995 = vmatmul.bf16.gmra.mxu0 %v4068
    %v6996 = vpop.f32.mrf.mxu0
    %v6997 = vadd.f32 %v6984, %v6996
    %v6998 = vpop.f32.mrf.mxu0
    %6999 = vdwg.mxu0
    %7000 = vmatpush.bf16.msra.mxu0 %v5939
    %7001 = vmatpush.bf16.msra.mxu0 %v5932
    %7002 = vmatpush.bf16.msra.mxu0 %v5925
    %7003 = vmatpush.bf16.msra.mxu0 %v5918
    %7004 = vmatpush.bf16.msra.mxu0 %v5911
    %7005 = vmatpush.bf16.msra.mxu0 %v5904
    %7006 = vmatpush.bf16.msra.mxu0 %v5897
    %7007 = vmatpush.bf16.msra.mxu0 %v5890
    %7008 = vmatmul.bf16.gmra.mxu0 %v4069
    %v7009 = vpop.f32.mrf.mxu0
    %v7010 = vadd.f32 %v6997, %v7009
    %v7011 = vpop.f32.mrf.mxu0
    %7012 = vdwg.mxu0
    %7013 = vmatpush.bf16.msra.mxu0 %v5548
    %7014 = vmatpush.bf16.msra.mxu0 %v5541
    %7015 = vmatpush.bf16.msra.mxu0 %v5534
    %7016 = vmatpush.bf16.msra.mxu0 %v5527
    %7017 = vmatpush.bf16.msra.mxu0 %v5520
    %7018 = vmatpush.bf16.msra.mxu0 %v5513
    %7019 = vmatpush.bf16.msra.mxu0 %v5506
    %7020 = vmatpush.bf16.msra.mxu0 %v5499
    %7021 = vmatmul.bf16.gmra.mxu0 %v4062
    %v7022 = vpop.f32.mrf.mxu0
    %v7023 = vadd.f32 %v4077, %v7022
    %v7024 = vpop.f32.mrf.mxu0
    %7025 = vdwg.mxu0
    %7026 = vmatpush.bf16.msra.mxu0 %v5604
    %7027 = vmatpush.bf16.msra.mxu0 %v5597
    %7028 = vmatpush.bf16.msra.mxu0 %v5590
    %7029 = vmatpush.bf16.msra.mxu0 %v5583
    %7030 = vmatpush.bf16.msra.mxu0 %v5576
    %7031 = vmatpush.bf16.msra.mxu0 %v5569
    %7032 = vmatpush.bf16.msra.mxu0 %v5562
    %7033 = vmatpush.bf16.msra.mxu0 %v5555
    %7034 = vmatmul.bf16.gmra.mxu0 %v4063
    %v7035 = vpop.f32.mrf.mxu0
    %v7036 = vadd.f32 %v7023, %v7035
    %v7037 = vpop.f32.mrf.mxu0
    %7038 = vdwg.mxu0
    %7039 = vmatpush.bf16.msra.mxu0 %v5660
    %7040 = vmatpush.bf16.msra.mxu0 %v5653
    %7041 = vmatpush.bf16.msra.mxu0 %v5646
    %7042 = vmatpush.bf16.msra.mxu0 %v5639
    %7043 = vmatpush.bf16.msra.mxu0 %v5632
    %7044 = vmatpush.bf16.msra.mxu0 %v5625
    %7045 = vmatpush.bf16.msra.mxu0 %v5618
    %7046 = vmatpush.bf16.msra.mxu0 %v5611
    %7047 = vmatmul.bf16.gmra.mxu0 %v4064
    %v7048 = vpop.f32.mrf.mxu0
    %v7049 = vadd.f32 %v7036, %v7048
    %v7050 = vpop.f32.mrf.mxu0
    %7051 = vdwg.mxu0
    %7052 = vmatpush.bf16.msra.mxu0 %v5716
    %7053 = vmatpush.bf16.msra.mxu0 %v5709
    %7054 = vmatpush.bf16.msra.mxu0 %v5702
    %7055 = vmatpush.bf16.msra.mxu0 %v5695
    %7056 = vmatpush.bf16.msra.mxu0 %v5688
    %7057 = vmatpush.bf16.msra.mxu0 %v5681
    %7058 = vmatpush.bf16.msra.mxu0 %v5674
    %7059 = vmatpush.bf16.msra.mxu0 %v5667
    %7060 = vmatmul.bf16.gmra.mxu0 %v4065
    %v7061 = vpop.f32.mrf.mxu0
    %v7062 = vadd.f32 %v7049, %v7061
    %v7063 = vpop.f32.mrf.mxu0
    %7064 = vdwg.mxu0
    %7065 = vmatpush.bf16.msra.mxu0 %v5772
    %7066 = vmatpush.bf16.msra.mxu0 %v5765
    %7067 = vmatpush.bf16.msra.mxu0 %v5758
    %7068 = vmatpush.bf16.msra.mxu0 %v5751
    %7069 = vmatpush.bf16.msra.mxu0 %v5744
    %7070 = vmatpush.bf16.msra.mxu0 %v5737
    %7071 = vmatpush.bf16.msra.mxu0 %v5730
    %7072 = vmatpush.bf16.msra.mxu0 %v5723
    %7073 = vmatmul.bf16.gmra.mxu0 %v4066
    %v7074 = vpop.f32.mrf.mxu0
    %v7075 = vadd.f32 %v7062, %v7074
    %v7076 = vpop.f32.mrf.mxu0
    %7077 = vdwg.mxu0
    %7078 = vmatpush.bf16.msra.mxu0 %v5828
    %7079 = vmatpush.bf16.msra.mxu0 %v5821
    %7080 = vmatpush.bf16.msra.mxu0 %v5814
    %7081 = vmatpush.bf16.msra.mxu0 %v5807
    %7082 = vmatpush.bf16.msra.mxu0 %v5800
    %7083 = vmatpush.bf16.msra.mxu0 %v5793
    %7084 = vmatpush.bf16.msra.mxu0 %v5786
    %7085 = vmatpush.bf16.msra.mxu0 %v5779
    %7086 = vmatmul.bf16.gmra.mxu0 %v4067
    %v7087 = vpop.f32.mrf.mxu0
    %v7088 = vadd.f32 %v7075, %v7087
    %v7089 = vpop.f32.mrf.mxu0
    %7090 = vdwg.mxu0
    %7091 = vmatpush.bf16.msra.mxu0 %v5884
    %7092 = vmatpush.bf16.msra.mxu0 %v5877
    %7093 = vmatpush.bf16.msra.mxu0 %v5870
    %7094 = vmatpush.bf16.msra.mxu0 %v5863
    %7095 = vmatpush.bf16.msra.mxu0 %v5856
    %7096 = vmatpush.bf16.msra.mxu0 %v5849
    %7097 = vmatpush.bf16.msra.mxu0 %v5842
    %7098 = vmatpush.bf16.msra.mxu0 %v5835
    %7099 = vmatmul.bf16.gmra.mxu0 %v4068
    %v7100 = vpop.f32.mrf.mxu0
    %v7101 = vadd.f32 %v7088, %v7100
    %v7102 = vpop.f32.mrf.mxu0
    %7103 = vdwg.mxu0
    %7104 = vmatpush.bf16.msra.mxu0 %v5940
    %7105 = vmatpush.bf16.msra.mxu0 %v5933
    %7106 = vmatpush.bf16.msra.mxu0 %v5926
    %7107 = vmatpush.bf16.msra.mxu0 %v5919
    %7108 = vmatpush.bf16.msra.mxu0 %v5912
    %7109 = vmatpush.bf16.msra.mxu0 %v5905
    %7110 = vmatpush.bf16.msra.mxu0 %v5898
    %7111 = vmatpush.bf16.msra.mxu0 %v5891
    %7112 = vmatmul.bf16.gmra.mxu0 %v4069
    %v7113 = vpop.f32.mrf.mxu0
    %v7114 = vadd.f32 %v7101, %v7113
    %v7115 = vpop.f32.mrf.mxu0
    %7116 = vdwg.mxu0
    %v7117 = vtanh.pop %v6490
    %v7118 = vtanh.pop %v6594
    %v7119 = vtanh.pop %v6698
    %v7120 = vtanh.pop %v6802
    %v7121 = vtanh.pop %v6906
    %v7122 = vtanh.pop %v7010
    %v7123 = vtanh.pop %v7114
    %v7124 = vpack.c.bf16 %v7118, %v7117
    %v7125 = vpack.c.bf16 %v7120, %v7119
    %v7126 = vpack.c.bf16 %v7122, %v7121
    %v7127 = vpack.c.bf16 %v7123, %v7123
    %7128 = vst [vmem:[%s17] sm:$0xff] %v7124
    %7129 = vst [vmem:[%s17 + $0x8] sm:$0xff] %v7125
    %7130 = vst [vmem:[%s17 + $0x10] sm:$0xff] %v7126
    %7131 = vst [vmem:[%s17 + $0x18] sm:$0xf] %v7127
    // Predicated region
    $region122: #{generator_forward.1} parent=1 // pred_check
      _
    $region123: #{generator_forward.1} parent=1 // pred_check_branch
      %7133 = sbr.rel (0) target = $region125
    $region124: #{generator_forward.1} parent=1 // pred_region
      _
    $region125: #{generator_forward.1} parent=1 // pred_fallthru
      _
    // Predicated region
    $region126: #{generator_forward.1} parent=1 // pred_check
      _
    $region127: #{generator_forward.1} parent=1 // pred_check_branch
      %7135 = sbr.rel (0) target = $region129
    $region128: #{generator_forward.1} parent=1 // pred_region
      _
    $region129: #{generator_forward.1} parent=1 // pred_fallthru
      _
    %7136 = vsyncpa [#allocation7], 1
    %7137 = vsyncpa [#allocation9], 1
    %7138 = vsyncpa [#allocation12], 1
    %7139 = vsyncpa [#allocation15], 1
    %7140 = vsyncpa [#allocation18], 1
    %7141 = vsyncpa [#allocation21], 1
    %7142 = vsyncpa [#allocation24], 1
  %7143 = vsyncmov [#allocation5]
  %s7144 = vpop.sfrf %7143
  %p7145 = scmp.eq.s32.totalorder %s7144, 0
  %p7146 = pneg %p7145
  %7148 = shalt.err (%p7146)
  %s7149 = scalar_lea.sflag [#allocation5], 1
  %7150 = vsyncmov %s7149
  %s7151 = vpop.sfrf %7150
  %p7152 = scmp.eq.s32.totalorder %s7151, 0
  %p7153 = pneg %p7152
  %7155 = shalt.err (%p7153)
  %s7156 = scalar_lea.sflag [#allocation5], 2
  %7157 = vsyncmov %s7156
  %s7158 = vpop.sfrf %7157
  %p7159 = scmp.eq.s32.totalorder %s7158, 0
  %p7160 = pneg %p7159
  %7162 = shalt.err (%p7160)

</llo_original>
